<compile_context>
chip_gen: v6e
topology: v6e:2x2x1
jax: 0.10.0
libtpu: 0.0.40
codegen_flags: <defaults>
</compile_context>

<pallas_src>
import functools

import jax
import jax.numpy as jnp
from jax import lax
from jax.experimental import pallas as pl
from jax.experimental.pallas import tpu as pltpu


# ----------------------------- Pallas kernel -------------------------------
def seq2seq_kernel(
    x_ref,                                            # (T*B, I)
    # encoder: per-gate weights (lane-aligned), biases pre-folded where legal
    wih_er_ref, wih_ez_ref, wih_en_ref,               # (I, H) each
    whh_er_ref, whh_ez_ref, whh_en_ref,               # (H, H) each
    b_er_ref, b_ez_ref, bi_en_ref, bh_en_ref,         # (1, H) each
    # decoder
    wih_dr_ref, wih_dz_ref, wih_dn_ref,               # (I, H)
    whh_dr_ref, whh_dz_ref, whh_dn_ref,               # (H, H)
    b_dr_ref, b_dz_ref, bi_dn_ref, bh_dn_ref,         # (1, H)
    # linear head
    wout_ref, bout_ref,                               # (H, O), (1, O)
    # outputs
    out_ref,                                          # (T*B, O)
    hn_ref,                                           # (1, B, H)
):
    TB, _ = x_ref.shape
    _, B, H = hn_ref.shape
    T = TB // B

    x_flat = x_ref[...]                               # (T*B, I)

    # ---- hoisted input->gate projections (off the serial critical path) ----
    def input_gates(wr_ref, wz_ref, wn_ref, br_ref, bz_ref, bin_ref):
        gi_r = jnp.dot(x_flat, wr_ref[...],
                       preferred_element_type=jnp.float32) + br_ref[...]
        gi_z = jnp.dot(x_flat, wz_ref[...],
                       preferred_element_type=jnp.float32) + bz_ref[...]
        gi_n = jnp.dot(x_flat, wn_ref[...],
                       preferred_element_type=jnp.float32) + bin_ref[...]
        return gi_r, gi_z, gi_n                       # each (T*B, H)

    gi_er, gi_ez, gi_en = input_gates(wih_er_ref, wih_ez_ref, wih_en_ref,
                                      b_er_ref, b_ez_ref, bi_en_ref)
    gi_dr, gi_dz, gi_dn = input_gates(wih_dr_ref, wih_dz_ref, wih_dn_ref,
                                      b_dr_ref, b_dz_ref, bi_dn_ref)

    # ---- hoist recurrent weights / biases out of the loops ----
    whh_er = whh_er_ref[...]; whh_ez = whh_ez_ref[...]; whh_en = whh_en_ref[...]
    whh_dr = whh_dr_ref[...]; whh_dz = whh_dz_ref[...]; whh_dn = whh_dn_ref[...]
    bh_en = bh_en_ref[...]
    bh_dn = bh_dn_ref[...]

    def gru_scan(gi_r, gi_z, gi_n, h0, whh_r, whh_z, whh_n, bh_n):
        """Statically unrolled GRU recurrence (PyTorch gate order r, z, n).

        Only the h @ W_hh products and the gate blends live on the serial path.
        """
        h = h0
        hs = []
        for t in range(T):                            # T is static -> full unroll
            lo = t * B
            gh_r = jnp.dot(h, whh_r, preferred_element_type=jnp.float32)
            gh_z = jnp.dot(h, whh_z, preferred_element_type=jnp.float32)
            gh_n = jnp.dot(h, whh_n, preferred_element_type=jnp.float32) + bh_n
            r = jax.nn.sigmoid(gi_r[lo:lo + B, :] + gh_r)
            z = jax.nn.sigmoid(gi_z[lo:lo + B, :] + gh_z)
            n = jnp.tanh(gi_n[lo:lo + B, :] + r * gh_n)
            h = (1.0 - z) * n + z * h
            hs.append(h)
        return h, hs

    # ---- encoder: h_0 = 0 ----
    h0 = jnp.zeros((B, H), jnp.float32)
    h_n, _ = gru_scan(gi_er, gi_ez, gi_en, h0, whh_er, whh_ez, whh_en, bh_en)
    hn_ref[0] = h_n

    # ---- decoder: seeded with encoder h_n ----
    _, dec_hs = gru_scan(gi_dr, gi_dz, gi_dn, h_n, whh_dr, whh_dz, whh_dn, bh_dn)

    # ---- deferred linear head: one matmul + one store ----
    dec_h = jnp.concatenate(dec_hs, axis=0)           # (T*B, H)
    out_ref[...] = (
        jnp.dot(dec_h, wout_ref[...], preferred_element_type=jnp.float32)
        + bout_ref[...]
    )


# ------------------------------ host wrapper --------------------------------
def _split_gates(w, H):
    """Split a packed (X, 3H) GRU weight/bias into per-gate (X, H) blocks (r, z, n)."""
    return w[..., 0:H], w[..., H:2 * H], w[..., 2 * H:3 * H]


@functools.partial(jax.jit, static_argnames=("batch_size",))
def seq2seq_forward(x, target, batch_size, params):
    # target is only consulted for its leading dim in the original module; it
    # does not influence the computation.
    del target, batch_size
    T, B, I = x.shape
    H = params["whh_e"].shape[0]
    O = params["wout"].shape[1]

    # --- host-side weight prep: per-gate splits + legal bias folding ---
    wih_er, wih_ez, wih_en = _split_gates(params["wih_e"], H)
    whh_er, whh_ez, whh_en = _split_gates(params["whh_e"], H)
    bih_er, bih_ez, bih_en = _split_gates(params["bih_e"], H)
    bhh_er, bhh_ez, bhh_en = _split_gates(params["bhh_e"], H)
    b_er = bih_er + bhh_er
    b_ez = bih_ez + bhh_ez
    # NOTE: bih_en / bhh_en are NOT merged: b_hh_n stays inside the r*(...) term.

    wih_dr, wih_dz, wih_dn = _split_gates(params["wih_d"], H)
    whh_dr, whh_dz, whh_dn = _split_gates(params["whh_d"], H)
    bih_dr, bih_dz, bih_dn = _split_gates(params["bih_d"], H)
    bhh_dr, bhh_dz, bhh_dn = _split_gates(params["bhh_d"], H)
    b_dr = bih_dr + bhh_dr
    b_dz = bih_dz + bhh_dz

    x_2d = x.reshape(T * B, I)                        # free metadata reshape

    inputs = (
        x_2d,
        wih_er, wih_ez, wih_en, whh_er, whh_ez, whh_en,
        b_er, b_ez, bih_en, bhh_en,
        wih_dr, wih_dz, wih_dn, whh_dr, whh_dz, whh_dn,
        b_dr, b_dz, bih_dn, bhh_dn,
        params["wout"], params["bout"],
    )

    vmem = pl.BlockSpec(memory_space=pltpu.MemorySpace.VMEM)

    out_2d, h_n = pl.pallas_call(
        seq2seq_kernel,
        out_shape=(
            jax.ShapeDtypeStruct((T * B, O), jnp.float32),  # decoder output (flat)
            jax.ShapeDtypeStruct((1, B, H), jnp.float32),   # encoder final hidden
        ),
        in_specs=[vmem] * len(inputs),
        out_specs=(vmem, vmem),
    )(*inputs)

    return out_2d.reshape(T, B, O), h_n


# ---------------------------- pure-JAX reference -----------------------------
def gru_ref(x, h0, wih, whh, bih, bhh):
    H = whh.shape[0]

    def step(h, x_t):
        gi = x_t @ wih + bih
        gh = h @ whh + bhh
        i_r, i_z, i_n = gi[:, :H], gi[:, H:2 * H], gi[:, 2 * H:]
        h_r, h_z, h_n = gh[:, :H], gh[:, H:2 * H], gh[:, 2 * H:]
        r = jax.nn.sigmoid(i_r + h_r)
        z = jax.nn.sigmoid(i_z + h_z)
        n = jnp.tanh(i_n + r * h_n)
        h_new = (1.0 - z) * n + z * h
        return h_new, h_new

    h_last, outs = lax.scan(step, h0, x)
    return outs, h_last


def seq2seq_ref(x, params):
    B = x.shape[1]
    H = params["whh_e"].shape[0]
    h0 = jnp.zeros((B, H), jnp.float32)
    _, h_n = gru_ref(x, h0, params["wih_e"], params["whh_e"],
                     params["bih_e"], params["bhh_e"])
    dec_out, _ = gru_ref(x, h_n, params["wih_d"], params["whh_d"],
                         params["bih_d"], params["bhh_d"])
    out = dec_out @ params["wout"] + params["bout"]
    return out, h_n[None]


# ----------------------------------- main ------------------------------------
if __name__ == "__main__":
    T, B, I, H, O = 8, 2, 4, 32, 4   # seq, batch, input, hidden, output sizes

    key = jax.random.PRNGKey(0)
    keys = jax.random.split(key, 12)
    s = 0.1
    params = {
        "wih_e": s * jax.random.normal(keys[0], (I, 3 * H), jnp.float32),
        "whh_e": s * jax.random.normal(keys[1], (H, 3 * H), jnp.float32),
        "bih_e": s * jax.random.normal(keys[2], (1, 3 * H), jnp.float32),
        "bhh_e": s * jax.random.normal(keys[3], (1, 3 * H), jnp.float32),
        "wih_d": s * jax.random.normal(keys[4], (I, 3 * H), jnp.float32),
        "whh_d": s * jax.random.normal(keys[5], (H, 3 * H), jnp.float32),
        "bih_d": s * jax.random.normal(keys[6], (1, 3 * H), jnp.float32),
        "bhh_d": s * jax.random.normal(keys[7], (1, 3 * H), jnp.float32),
        "wout":  s * jax.random.normal(keys[8], (H, O), jnp.float32),
        "bout":  s * jax.random.normal(keys[9], (1, O), jnp.float32),
    }

    x = jax.random.normal(keys[10], (T, B, I), jnp.float32)
    target = jax.random.normal(keys[11], (T, B, O), jnp.float32)  # only .shape[0] used

    out, h_n = seq2seq_forward(x, target, B, params)
    jax.block_until_ready((out, h_n))

    out_ref, h_n_ref = seq2seq_ref(x, params)
    assert out.shape == (T, B, O) and h_n.shape == (1, B, H)
    assert jnp.allclose(out, out_ref, atol=1e-5, rtol=1e-5)
    assert jnp.allclose(h_n, h_n_ref, atol=1e-5, rtol=1e-5)

    print("KERNEL_OK")
</pallas_src>

<mosaic_0001>
module attributes {stable_mosaic.version = 11 : i64} {
  func.func @seq2seq_kernel(%arg0: memref<16x4xf32, #tpu.memory_space<vmem>>, %arg1: memref<4x32xf32, #tpu.memory_space<vmem>>, %arg2: memref<4x32xf32, #tpu.memory_space<vmem>>, %arg3: memref<4x32xf32, #tpu.memory_space<vmem>>, %arg4: memref<32x32xf32, #tpu.memory_space<vmem>>, %arg5: memref<32x32xf32, #tpu.memory_space<vmem>>, %arg6: memref<32x32xf32, #tpu.memory_space<vmem>>, %arg7: memref<1x32xf32, #tpu.memory_space<vmem>>, %arg8: memref<1x32xf32, #tpu.memory_space<vmem>>, %arg9: memref<1x32xf32, #tpu.memory_space<vmem>>, %arg10: memref<1x32xf32, #tpu.memory_space<vmem>>, %arg11: memref<4x32xf32, #tpu.memory_space<vmem>>, %arg12: memref<4x32xf32, #tpu.memory_space<vmem>>, %arg13: memref<4x32xf32, #tpu.memory_space<vmem>>, %arg14: memref<32x32xf32, #tpu.memory_space<vmem>>, %arg15: memref<32x32xf32, #tpu.memory_space<vmem>>, %arg16: memref<32x32xf32, #tpu.memory_space<vmem>>, %arg17: memref<1x32xf32, #tpu.memory_space<vmem>>, %arg18: memref<1x32xf32, #tpu.memory_space<vmem>>, %arg19: memref<1x32xf32, #tpu.memory_space<vmem>>, %arg20: memref<1x32xf32, #tpu.memory_space<vmem>>, %arg21: memref<32x4xf32, #tpu.memory_space<vmem>>, %arg22: memref<1x4xf32, #tpu.memory_space<vmem>>, %arg23: memref<16x4xf32, #tpu.memory_space<vmem>>, %arg24: memref<1x2x32xf32, #tpu.memory_space<vmem>>) attributes {dimension_semantics = [], scalar_prefetch = 0 : i64, scratch_operands = 0 : i64, tpu.core_type = #tpu.core_type<tc>} {
    %c0 = arith.constant 0 : index
    %c0_0 = arith.constant 0 : index
    %0 = vector.load %arg0[%c0, %c0_0] : memref<16x4xf32, #tpu.memory_space<vmem>>, vector<16x4xf32>
    %c0_1 = arith.constant 0 : index
    %c0_2 = arith.constant 0 : index
    %1 = vector.load %arg1[%c0_1, %c0_2] : memref<4x32xf32, #tpu.memory_space<vmem>>, vector<4x32xf32>
    %cst = arith.constant dense<0.000000e+00> : vector<16x32xf32>
    %2 = tpu.matmul %0, %1, %cst {dimension_numbers = #tpu.dot_dimension_numbers<[1], [0], [0], [1], [0, 0, 1, 1], [], []>} : vector<16x4xf32>, vector<4x32xf32>, vector<16x32xf32> -> vector<16x32xf32>
    %c0_3 = arith.constant 0 : index
    %c0_4 = arith.constant 0 : index
    %3 = vector.load %arg7[%c0_3, %c0_4] : memref<1x32xf32, #tpu.memory_space<vmem>>, vector<1x32xf32>
    %4 = vector.broadcast %3 : vector<1x32xf32> to vector<16x32xf32>
    %5 = arith.addf %2, %4 : vector<16x32xf32>
    %c0_5 = arith.constant 0 : index
    %c0_6 = arith.constant 0 : index
    %6 = vector.load %arg2[%c0_5, %c0_6] : memref<4x32xf32, #tpu.memory_space<vmem>>, vector<4x32xf32>
    %cst_7 = arith.constant dense<0.000000e+00> : vector<16x32xf32>
    %7 = tpu.matmul %0, %6, %cst_7 {dimension_numbers = #tpu.dot_dimension_numbers<[1], [0], [0], [1], [0, 0, 1, 1], [], []>} : vector<16x4xf32>, vector<4x32xf32>, vector<16x32xf32> -> vector<16x32xf32>
    %c0_8 = arith.constant 0 : index
    %c0_9 = arith.constant 0 : index
    %8 = vector.load %arg8[%c0_8, %c0_9] : memref<1x32xf32, #tpu.memory_space<vmem>>, vector<1x32xf32>
    %9 = vector.broadcast %8 : vector<1x32xf32> to vector<16x32xf32>
    %10 = arith.addf %7, %9 : vector<16x32xf32>
    %c0_10 = arith.constant 0 : index
    %c0_11 = arith.constant 0 : index
    %11 = vector.load %arg3[%c0_10, %c0_11] : memref<4x32xf32, #tpu.memory_space<vmem>>, vector<4x32xf32>
    %cst_12 = arith.constant dense<0.000000e+00> : vector<16x32xf32>
    %12 = tpu.matmul %0, %11, %cst_12 {dimension_numbers = #tpu.dot_dimension_numbers<[1], [0], [0], [1], [0, 0, 1, 1], [], []>} : vector<16x4xf32>, vector<4x32xf32>, vector<16x32xf32> -> vector<16x32xf32>
    %c0_13 = arith.constant 0 : index
    %c0_14 = arith.constant 0 : index
    %13 = vector.load %arg9[%c0_13, %c0_14] : memref<1x32xf32, #tpu.memory_space<vmem>>, vector<1x32xf32>
    %14 = vector.broadcast %13 : vector<1x32xf32> to vector<16x32xf32>
    %15 = arith.addf %12, %14 : vector<16x32xf32>
    %c0_15 = arith.constant 0 : index
    %c0_16 = arith.constant 0 : index
    %16 = vector.load %arg11[%c0_15, %c0_16] : memref<4x32xf32, #tpu.memory_space<vmem>>, vector<4x32xf32>
    %cst_17 = arith.constant dense<0.000000e+00> : vector<16x32xf32>
    %17 = tpu.matmul %0, %16, %cst_17 {dimension_numbers = #tpu.dot_dimension_numbers<[1], [0], [0], [1], [0, 0, 1, 1], [], []>} : vector<16x4xf32>, vector<4x32xf32>, vector<16x32xf32> -> vector<16x32xf32>
    %c0_18 = arith.constant 0 : index
    %c0_19 = arith.constant 0 : index
    %18 = vector.load %arg17[%c0_18, %c0_19] : memref<1x32xf32, #tpu.memory_space<vmem>>, vector<1x32xf32>
    %19 = vector.broadcast %18 : vector<1x32xf32> to vector<16x32xf32>
    %20 = arith.addf %17, %19 : vector<16x32xf32>
    %c0_20 = arith.constant 0 : index
    %c0_21 = arith.constant 0 : index
    %21 = vector.load %arg12[%c0_20, %c0_21] : memref<4x32xf32, #tpu.memory_space<vmem>>, vector<4x32xf32>
    %cst_22 = arith.constant dense<0.000000e+00> : vector<16x32xf32>
    %22 = tpu.matmul %0, %21, %cst_22 {dimension_numbers = #tpu.dot_dimension_numbers<[1], [0], [0], [1], [0, 0, 1, 1], [], []>} : vector<16x4xf32>, vector<4x32xf32>, vector<16x32xf32> -> vector<16x32xf32>
    %c0_23 = arith.constant 0 : index
    %c0_24 = arith.constant 0 : index
    %23 = vector.load %arg18[%c0_23, %c0_24] : memref<1x32xf32, #tpu.memory_space<vmem>>, vector<1x32xf32>
    %24 = vector.broadcast %23 : vector<1x32xf32> to vector<16x32xf32>
    %25 = arith.addf %22, %24 : vector<16x32xf32>
    %c0_25 = arith.constant 0 : index
    %c0_26 = arith.constant 0 : index
    %26 = vector.load %arg13[%c0_25, %c0_26] : memref<4x32xf32, #tpu.memory_space<vmem>>, vector<4x32xf32>
    %cst_27 = arith.constant dense<0.000000e+00> : vector<16x32xf32>
    %27 = tpu.matmul %0, %26, %cst_27 {dimension_numbers = #tpu.dot_dimension_numbers<[1], [0], [0], [1], [0, 0, 1, 1], [], []>} : vector<16x4xf32>, vector<4x32xf32>, vector<16x32xf32> -> vector<16x32xf32>
    %c0_28 = arith.constant 0 : index
    %c0_29 = arith.constant 0 : index
    %28 = vector.load %arg19[%c0_28, %c0_29] : memref<1x32xf32, #tpu.memory_space<vmem>>, vector<1x32xf32>
    %29 = vector.broadcast %28 : vector<1x32xf32> to vector<16x32xf32>
    %30 = arith.addf %27, %29 : vector<16x32xf32>
    %c0_30 = arith.constant 0 : index
    %c0_31 = arith.constant 0 : index
    %31 = vector.load %arg4[%c0_30, %c0_31] : memref<32x32xf32, #tpu.memory_space<vmem>>, vector<32x32xf32>
    %c0_32 = arith.constant 0 : index
    %c0_33 = arith.constant 0 : index
    %32 = vector.load %arg5[%c0_32, %c0_33] : memref<32x32xf32, #tpu.memory_space<vmem>>, vector<32x32xf32>
    %c0_34 = arith.constant 0 : index
    %c0_35 = arith.constant 0 : index
    %33 = vector.load %arg6[%c0_34, %c0_35] : memref<32x32xf32, #tpu.memory_space<vmem>>, vector<32x32xf32>
    %c0_36 = arith.constant 0 : index
    %c0_37 = arith.constant 0 : index
    %34 = vector.load %arg14[%c0_36, %c0_37] : memref<32x32xf32, #tpu.memory_space<vmem>>, vector<32x32xf32>
    %c0_38 = arith.constant 0 : index
    %c0_39 = arith.constant 0 : index
    %35 = vector.load %arg15[%c0_38, %c0_39] : memref<32x32xf32, #tpu.memory_space<vmem>>, vector<32x32xf32>
    %c0_40 = arith.constant 0 : index
    %c0_41 = arith.constant 0 : index
    %36 = vector.load %arg16[%c0_40, %c0_41] : memref<32x32xf32, #tpu.memory_space<vmem>>, vector<32x32xf32>
    %c0_42 = arith.constant 0 : index
    %c0_43 = arith.constant 0 : index
    %37 = vector.load %arg10[%c0_42, %c0_43] : memref<1x32xf32, #tpu.memory_space<vmem>>, vector<1x32xf32>
    %c0_44 = arith.constant 0 : index
    %c0_45 = arith.constant 0 : index
    %38 = vector.load %arg20[%c0_44, %c0_45] : memref<1x32xf32, #tpu.memory_space<vmem>>, vector<1x32xf32>
    %cst_46 = arith.constant 0.000000e+00 : f32
    %39 = vector.broadcast %cst_46 : f32 to vector<2x32xf32>
    %cst_47 = arith.constant dense<0.000000e+00> : vector<2x32xf32>
    %40 = tpu.matmul %39, %31, %cst_47 {dimension_numbers = #tpu.dot_dimension_numbers<[1], [0], [0], [1], [0, 0, 1, 1], [], []>} : vector<2x32xf32>, vector<32x32xf32>, vector<2x32xf32> -> vector<2x32xf32>
    %cst_48 = arith.constant dense<0.000000e+00> : vector<2x32xf32>
    %41 = tpu.matmul %39, %32, %cst_48 {dimension_numbers = #tpu.dot_dimension_numbers<[1], [0], [0], [1], [0, 0, 1, 1], [], []>} : vector<2x32xf32>, vector<32x32xf32>, vector<2x32xf32> -> vector<2x32xf32>
    %cst_49 = arith.constant dense<0.000000e+00> : vector<2x32xf32>
    %42 = tpu.matmul %39, %33, %cst_49 {dimension_numbers = #tpu.dot_dimension_numbers<[1], [0], [0], [1], [0, 0, 1, 1], [], []>} : vector<2x32xf32>, vector<32x32xf32>, vector<2x32xf32> -> vector<2x32xf32>
    %43 = vector.broadcast %37 : vector<1x32xf32> to vector<2x32xf32>
    %44 = arith.addf %42, %43 : vector<2x32xf32>
    %45 = vector.extract_strided_slice %5 {offsets = [0, 0], sizes = [2, 32], strides = [1, 1]} : vector<16x32xf32> to vector<2x32xf32>
    %46 = arith.addf %45, %40 : vector<2x32xf32>
    %47 = arith.negf %46 : vector<2x32xf32>
    %48 = math.exp %47 : vector<2x32xf32>
    %cst_50 = arith.constant 1.000000e+00 : f32
    %49 = vector.broadcast %cst_50 : f32 to vector<2x32xf32>
    %50 = arith.addf %49, %48 : vector<2x32xf32>
    %51 = arith.divf %49, %50 : vector<2x32xf32>
    %52 = vector.extract_strided_slice %10 {offsets = [0, 0], sizes = [2, 32], strides = [1, 1]} : vector<16x32xf32> to vector<2x32xf32>
    %53 = arith.addf %52, %41 : vector<2x32xf32>
    %54 = arith.negf %53 : vector<2x32xf32>
    %55 = math.exp %54 : vector<2x32xf32>
    %cst_51 = arith.constant 1.000000e+00 : f32
    %56 = vector.broadcast %cst_51 : f32 to vector<2x32xf32>
    %57 = arith.addf %56, %55 : vector<2x32xf32>
    %58 = arith.divf %56, %57 : vector<2x32xf32>
    %59 = vector.extract_strided_slice %15 {offsets = [0, 0], sizes = [2, 32], strides = [1, 1]} : vector<16x32xf32> to vector<2x32xf32>
    %60 = arith.mulf %51, %44 : vector<2x32xf32>
    %61 = arith.addf %59, %60 : vector<2x32xf32>
    %62 = math.tanh %61 : vector<2x32xf32>
    %cst_52 = arith.constant 1.000000e+00 : f32
    %63 = vector.broadcast %cst_52 : f32 to vector<2x32xf32>
    %64 = arith.subf %63, %58 : vector<2x32xf32>
    %65 = arith.mulf %64, %62 : vector<2x32xf32>
    %66 = arith.mulf %58, %39 : vector<2x32xf32>
    %67 = arith.addf %65, %66 : vector<2x32xf32>
    %cst_53 = arith.constant dense<0.000000e+00> : vector<2x32xf32>
    %68 = tpu.matmul %67, %31, %cst_53 {dimension_numbers = #tpu.dot_dimension_numbers<[1], [0], [0], [1], [0, 0, 1, 1], [], []>} : vector<2x32xf32>, vector<32x32xf32>, vector<2x32xf32> -> vector<2x32xf32>
    %cst_54 = arith.constant dense<0.000000e+00> : vector<2x32xf32>
    %69 = tpu.matmul %67, %32, %cst_54 {dimension_numbers = #tpu.dot_dimension_numbers<[1], [0], [0], [1], [0, 0, 1, 1], [], []>} : vector<2x32xf32>, vector<32x32xf32>, vector<2x32xf32> -> vector<2x32xf32>
    %cst_55 = arith.constant dense<0.000000e+00> : vector<2x32xf32>
    %70 = tpu.matmul %67, %33, %cst_55 {dimension_numbers = #tpu.dot_dimension_numbers<[1], [0], [0], [1], [0, 0, 1, 1], [], []>} : vector<2x32xf32>, vector<32x32xf32>, vector<2x32xf32> -> vector<2x32xf32>
    %71 = vector.broadcast %37 : vector<1x32xf32> to vector<2x32xf32>
    %72 = arith.addf %70, %71 : vector<2x32xf32>
    %73 = vector.extract_strided_slice %5 {offsets = [2, 0], sizes = [2, 32], strides = [1, 1]} : vector<16x32xf32> to vector<2x32xf32>
    %74 = arith.addf %73, %68 : vector<2x32xf32>
    %75 = arith.negf %74 : vector<2x32xf32>
    %76 = math.exp %75 : vector<2x32xf32>
    %cst_56 = arith.constant 1.000000e+00 : f32
    %77 = vector.broadcast %cst_56 : f32 to vector<2x32xf32>
    %78 = arith.addf %77, %76 : vector<2x32xf32>
    %79 = arith.divf %77, %78 : vector<2x32xf32>
    %80 = vector.extract_strided_slice %10 {offsets = [2, 0], sizes = [2, 32], strides = [1, 1]} : vector<16x32xf32> to vector<2x32xf32>
    %81 = arith.addf %80, %69 : vector<2x32xf32>
    %82 = arith.negf %81 : vector<2x32xf32>
    %83 = math.exp %82 : vector<2x32xf32>
    %cst_57 = arith.constant 1.000000e+00 : f32
    %84 = vector.broadcast %cst_57 : f32 to vector<2x32xf32>
    %85 = arith.addf %84, %83 : vector<2x32xf32>
    %86 = arith.divf %84, %85 : vector<2x32xf32>
    %87 = vector.extract_strided_slice %15 {offsets = [2, 0], sizes = [2, 32], strides = [1, 1]} : vector<16x32xf32> to vector<2x32xf32>
    %88 = arith.mulf %79, %72 : vector<2x32xf32>
    %89 = arith.addf %87, %88 : vector<2x32xf32>
    %90 = math.tanh %89 : vector<2x32xf32>
    %cst_58 = arith.constant 1.000000e+00 : f32
    %91 = vector.broadcast %cst_58 : f32 to vector<2x32xf32>
    %92 = arith.subf %91, %86 : vector<2x32xf32>
    %93 = arith.mulf %92, %90 : vector<2x32xf32>
    %94 = arith.mulf %86, %67 : vector<2x32xf32>
    %95 = arith.addf %93, %94 : vector<2x32xf32>
    %cst_59 = arith.constant dense<0.000000e+00> : vector<2x32xf32>
    %96 = tpu.matmul %95, %31, %cst_59 {dimension_numbers = #tpu.dot_dimension_numbers<[1], [0], [0], [1], [0, 0, 1, 1], [], []>} : vector<2x32xf32>, vector<32x32xf32>, vector<2x32xf32> -> vector<2x32xf32>
    %cst_60 = arith.constant dense<0.000000e+00> : vector<2x32xf32>
    %97 = tpu.matmul %95, %32, %cst_60 {dimension_numbers = #tpu.dot_dimension_numbers<[1], [0], [0], [1], [0, 0, 1, 1], [], []>} : vector<2x32xf32>, vector<32x32xf32>, vector<2x32xf32> -> vector<2x32xf32>
    %cst_61 = arith.constant dense<0.000000e+00> : vector<2x32xf32>
    %98 = tpu.matmul %95, %33, %cst_61 {dimension_numbers = #tpu.dot_dimension_numbers<[1], [0], [0], [1], [0, 0, 1, 1], [], []>} : vector<2x32xf32>, vector<32x32xf32>, vector<2x32xf32> -> vector<2x32xf32>
    %99 = vector.broadcast %37 : vector<1x32xf32> to vector<2x32xf32>
    %100 = arith.addf %98, %99 : vector<2x32xf32>
    %101 = vector.extract_strided_slice %5 {offsets = [4, 0], sizes = [2, 32], strides = [1, 1]} : vector<16x32xf32> to vector<2x32xf32>
    %102 = arith.addf %101, %96 : vector<2x32xf32>
    %103 = arith.negf %102 : vector<2x32xf32>
    %104 = math.exp %103 : vector<2x32xf32>
    %cst_62 = arith.constant 1.000000e+00 : f32
    %105 = vector.broadcast %cst_62 : f32 to vector<2x32xf32>
    %106 = arith.addf %105, %104 : vector<2x32xf32>
    %107 = arith.divf %105, %106 : vector<2x32xf32>
    %108 = vector.extract_strided_slice %10 {offsets = [4, 0], sizes = [2, 32], strides = [1, 1]} : vector<16x32xf32> to vector<2x32xf32>
    %109 = arith.addf %108, %97 : vector<2x32xf32>
    %110 = arith.negf %109 : vector<2x32xf32>
    %111 = math.exp %110 : vector<2x32xf32>
    %cst_63 = arith.constant 1.000000e+00 : f32
    %112 = vector.broadcast %cst_63 : f32 to vector<2x32xf32>
    %113 = arith.addf %112, %111 : vector<2x32xf32>
    %114 = arith.divf %112, %113 : vector<2x32xf32>
    %115 = vector.extract_strided_slice %15 {offsets = [4, 0], sizes = [2, 32], strides = [1, 1]} : vector<16x32xf32> to vector<2x32xf32>
    %116 = arith.mulf %107, %100 : vector<2x32xf32>
    %117 = arith.addf %115, %116 : vector<2x32xf32>
    %118 = math.tanh %117 : vector<2x32xf32>
    %cst_64 = arith.constant 1.000000e+00 : f32
    %119 = vector.broadcast %cst_64 : f32 to vector<2x32xf32>
    %120 = arith.subf %119, %114 : vector<2x32xf32>
    %121 = arith.mulf %120, %118 : vector<2x32xf32>
    %122 = arith.mulf %114, %95 : vector<2x32xf32>
    %123 = arith.addf %121, %122 : vector<2x32xf32>
    %cst_65 = arith.constant dense<0.000000e+00> : vector<2x32xf32>
    %124 = tpu.matmul %123, %31, %cst_65 {dimension_numbers = #tpu.dot_dimension_numbers<[1], [0], [0], [1], [0, 0, 1, 1], [], []>} : vector<2x32xf32>, vector<32x32xf32>, vector<2x32xf32> -> vector<2x32xf32>
    %cst_66 = arith.constant dense<0.000000e+00> : vector<2x32xf32>
    %125 = tpu.matmul %123, %32, %cst_66 {dimension_numbers = #tpu.dot_dimension_numbers<[1], [0], [0], [1], [0, 0, 1, 1], [], []>} : vector<2x32xf32>, vector<32x32xf32>, vector<2x32xf32> -> vector<2x32xf32>
    %cst_67 = arith.constant dense<0.000000e+00> : vector<2x32xf32>
    %126 = tpu.matmul %123, %33, %cst_67 {dimension_numbers = #tpu.dot_dimension_numbers<[1], [0], [0], [1], [0, 0, 1, 1], [], []>} : vector<2x32xf32>, vector<32x32xf32>, vector<2x32xf32> -> vector<2x32xf32>
    %127 = vector.broadcast %37 : vector<1x32xf32> to vector<2x32xf32>
    %128 = arith.addf %126, %127 : vector<2x32xf32>
    %129 = vector.extract_strided_slice %5 {offsets = [6, 0], sizes = [2, 32], strides = [1, 1]} : vector<16x32xf32> to vector<2x32xf32>
    %130 = arith.addf %129, %124 : vector<2x32xf32>
    %131 = arith.negf %130 : vector<2x32xf32>
    %132 = math.exp %131 : vector<2x32xf32>
    %cst_68 = arith.constant 1.000000e+00 : f32
    %133 = vector.broadcast %cst_68 : f32 to vector<2x32xf32>
    %134 = arith.addf %133, %132 : vector<2x32xf32>
    %135 = arith.divf %133, %134 : vector<2x32xf32>
    %136 = vector.extract_strided_slice %10 {offsets = [6, 0], sizes = [2, 32], strides = [1, 1]} : vector<16x32xf32> to vector<2x32xf32>
    %137 = arith.addf %136, %125 : vector<2x32xf32>
    %138 = arith.negf %137 : vector<2x32xf32>
    %139 = math.exp %138 : vector<2x32xf32>
    %cst_69 = arith.constant 1.000000e+00 : f32
    %140 = vector.broadcast %cst_69 : f32 to vector<2x32xf32>
    %141 = arith.addf %140, %139 : vector<2x32xf32>
    %142 = arith.divf %140, %141 : vector<2x32xf32>
    %143 = vector.extract_strided_slice %15 {offsets = [6, 0], sizes = [2, 32], strides = [1, 1]} : vector<16x32xf32> to vector<2x32xf32>
    %144 = arith.mulf %135, %128 : vector<2x32xf32>
    %145 = arith.addf %143, %144 : vector<2x32xf32>
    %146 = math.tanh %145 : vector<2x32xf32>
    %cst_70 = arith.constant 1.000000e+00 : f32
    %147 = vector.broadcast %cst_70 : f32 to vector<2x32xf32>
    %148 = arith.subf %147, %142 : vector<2x32xf32>
    %149 = arith.mulf %148, %146 : vector<2x32xf32>
    %150 = arith.mulf %142, %123 : vector<2x32xf32>
    %151 = arith.addf %149, %150 : vector<2x32xf32>
    %cst_71 = arith.constant dense<0.000000e+00> : vector<2x32xf32>
    %152 = tpu.matmul %151, %31, %cst_71 {dimension_numbers = #tpu.dot_dimension_numbers<[1], [0], [0], [1], [0, 0, 1, 1], [], []>} : vector<2x32xf32>, vector<32x32xf32>, vector<2x32xf32> -> vector<2x32xf32>
    %cst_72 = arith.constant dense<0.000000e+00> : vector<2x32xf32>
    %153 = tpu.matmul %151, %32, %cst_72 {dimension_numbers = #tpu.dot_dimension_numbers<[1], [0], [0], [1], [0, 0, 1, 1], [], []>} : vector<2x32xf32>, vector<32x32xf32>, vector<2x32xf32> -> vector<2x32xf32>
    %cst_73 = arith.constant dense<0.000000e+00> : vector<2x32xf32>
    %154 = tpu.matmul %151, %33, %cst_73 {dimension_numbers = #tpu.dot_dimension_numbers<[1], [0], [0], [1], [0, 0, 1, 1], [], []>} : vector<2x32xf32>, vector<32x32xf32>, vector<2x32xf32> -> vector<2x32xf32>
    %155 = vector.broadcast %37 : vector<1x32xf32> to vector<2x32xf32>
    %156 = arith.addf %154, %155 : vector<2x32xf32>
    %157 = vector.extract_strided_slice %5 {offsets = [8, 0], sizes = [2, 32], strides = [1, 1]} : vector<16x32xf32> to vector<2x32xf32>
    %158 = arith.addf %157, %152 : vector<2x32xf32>
    %159 = arith.negf %158 : vector<2x32xf32>
    %160 = math.exp %159 : vector<2x32xf32>
    %cst_74 = arith.constant 1.000000e+00 : f32
    %161 = vector.broadcast %cst_74 : f32 to vector<2x32xf32>
    %162 = arith.addf %161, %160 : vector<2x32xf32>
    %163 = arith.divf %161, %162 : vector<2x32xf32>
    %164 = vector.extract_strided_slice %10 {offsets = [8, 0], sizes = [2, 32], strides = [1, 1]} : vector<16x32xf32> to vector<2x32xf32>
    %165 = arith.addf %164, %153 : vector<2x32xf32>
    %166 = arith.negf %165 : vector<2x32xf32>
    %167 = math.exp %166 : vector<2x32xf32>
    %cst_75 = arith.constant 1.000000e+00 : f32
    %168 = vector.broadcast %cst_75 : f32 to vector<2x32xf32>
    %169 = arith.addf %168, %167 : vector<2x32xf32>
    %170 = arith.divf %168, %169 : vector<2x32xf32>
    %171 = vector.extract_strided_slice %15 {offsets = [8, 0], sizes = [2, 32], strides = [1, 1]} : vector<16x32xf32> to vector<2x32xf32>
    %172 = arith.mulf %163, %156 : vector<2x32xf32>
    %173 = arith.addf %171, %172 : vector<2x32xf32>
    %174 = math.tanh %173 : vector<2x32xf32>
    %cst_76 = arith.constant 1.000000e+00 : f32
    %175 = vector.broadcast %cst_76 : f32 to vector<2x32xf32>
    %176 = arith.subf %175, %170 : vector<2x32xf32>
    %177 = arith.mulf %176, %174 : vector<2x32xf32>
    %178 = arith.mulf %170, %151 : vector<2x32xf32>
    %179 = arith.addf %177, %178 : vector<2x32xf32>
    %cst_77 = arith.constant dense<0.000000e+00> : vector<2x32xf32>
    %180 = tpu.matmul %179, %31, %cst_77 {dimension_numbers = #tpu.dot_dimension_numbers<[1], [0], [0], [1], [0, 0, 1, 1], [], []>} : vector<2x32xf32>, vector<32x32xf32>, vector<2x32xf32> -> vector<2x32xf32>
    %cst_78 = arith.constant dense<0.000000e+00> : vector<2x32xf32>
    %181 = tpu.matmul %179, %32, %cst_78 {dimension_numbers = #tpu.dot_dimension_numbers<[1], [0], [0], [1], [0, 0, 1, 1], [], []>} : vector<2x32xf32>, vector<32x32xf32>, vector<2x32xf32> -> vector<2x32xf32>
    %cst_79 = arith.constant dense<0.000000e+00> : vector<2x32xf32>
    %182 = tpu.matmul %179, %33, %cst_79 {dimension_numbers = #tpu.dot_dimension_numbers<[1], [0], [0], [1], [0, 0, 1, 1], [], []>} : vector<2x32xf32>, vector<32x32xf32>, vector<2x32xf32> -> vector<2x32xf32>
    %183 = vector.broadcast %37 : vector<1x32xf32> to vector<2x32xf32>
    %184 = arith.addf %182, %183 : vector<2x32xf32>
    %185 = vector.extract_strided_slice %5 {offsets = [10, 0], sizes = [2, 32], strides = [1, 1]} : vector<16x32xf32> to vector<2x32xf32>
    %186 = arith.addf %185, %180 : vector<2x32xf32>
    %187 = arith.negf %186 : vector<2x32xf32>
    %188 = math.exp %187 : vector<2x32xf32>
    %cst_80 = arith.constant 1.000000e+00 : f32
    %189 = vector.broadcast %cst_80 : f32 to vector<2x32xf32>
    %190 = arith.addf %189, %188 : vector<2x32xf32>
    %191 = arith.divf %189, %190 : vector<2x32xf32>
    %192 = vector.extract_strided_slice %10 {offsets = [10, 0], sizes = [2, 32], strides = [1, 1]} : vector<16x32xf32> to vector<2x32xf32>
    %193 = arith.addf %192, %181 : vector<2x32xf32>
    %194 = arith.negf %193 : vector<2x32xf32>
    %195 = math.exp %194 : vector<2x32xf32>
    %cst_81 = arith.constant 1.000000e+00 : f32
    %196 = vector.broadcast %cst_81 : f32 to vector<2x32xf32>
    %197 = arith.addf %196, %195 : vector<2x32xf32>
    %198 = arith.divf %196, %197 : vector<2x32xf32>
    %199 = vector.extract_strided_slice %15 {offsets = [10, 0], sizes = [2, 32], strides = [1, 1]} : vector<16x32xf32> to vector<2x32xf32>
    %200 = arith.mulf %191, %184 : vector<2x32xf32>
    %201 = arith.addf %199, %200 : vector<2x32xf32>
    %202 = math.tanh %201 : vector<2x32xf32>
    %cst_82 = arith.constant 1.000000e+00 : f32
    %203 = vector.broadcast %cst_82 : f32 to vector<2x32xf32>
    %204 = arith.subf %203, %198 : vector<2x32xf32>
    %205 = arith.mulf %204, %202 : vector<2x32xf32>
    %206 = arith.mulf %198, %179 : vector<2x32xf32>
    %207 = arith.addf %205, %206 : vector<2x32xf32>
    %cst_83 = arith.constant dense<0.000000e+00> : vector<2x32xf32>
    %208 = tpu.matmul %207, %31, %cst_83 {dimension_numbers = #tpu.dot_dimension_numbers<[1], [0], [0], [1], [0, 0, 1, 1], [], []>} : vector<2x32xf32>, vector<32x32xf32>, vector<2x32xf32> -> vector<2x32xf32>
    %cst_84 = arith.constant dense<0.000000e+00> : vector<2x32xf32>
    %209 = tpu.matmul %207, %32, %cst_84 {dimension_numbers = #tpu.dot_dimension_numbers<[1], [0], [0], [1], [0, 0, 1, 1], [], []>} : vector<2x32xf32>, vector<32x32xf32>, vector<2x32xf32> -> vector<2x32xf32>
    %cst_85 = arith.constant dense<0.000000e+00> : vector<2x32xf32>
    %210 = tpu.matmul %207, %33, %cst_85 {dimension_numbers = #tpu.dot_dimension_numbers<[1], [0], [0], [1], [0, 0, 1, 1], [], []>} : vector<2x32xf32>, vector<32x32xf32>, vector<2x32xf32> -> vector<2x32xf32>
    %211 = vector.broadcast %37 : vector<1x32xf32> to vector<2x32xf32>
    %212 = arith.addf %210, %211 : vector<2x32xf32>
    %213 = vector.extract_strided_slice %5 {offsets = [12, 0], sizes = [2, 32], strides = [1, 1]} : vector<16x32xf32> to vector<2x32xf32>
    %214 = arith.addf %213, %208 : vector<2x32xf32>
    %215 = arith.negf %214 : vector<2x32xf32>
    %216 = math.exp %215 : vector<2x32xf32>
    %cst_86 = arith.constant 1.000000e+00 : f32
    %217 = vector.broadcast %cst_86 : f32 to vector<2x32xf32>
    %218 = arith.addf %217, %216 : vector<2x32xf32>
    %219 = arith.divf %217, %218 : vector<2x32xf32>
    %220 = vector.extract_strided_slice %10 {offsets = [12, 0], sizes = [2, 32], strides = [1, 1]} : vector<16x32xf32> to vector<2x32xf32>
    %221 = arith.addf %220, %209 : vector<2x32xf32>
    %222 = arith.negf %221 : vector<2x32xf32>
    %223 = math.exp %222 : vector<2x32xf32>
    %cst_87 = arith.constant 1.000000e+00 : f32
    %224 = vector.broadcast %cst_87 : f32 to vector<2x32xf32>
    %225 = arith.addf %224, %223 : vector<2x32xf32>
    %226 = arith.divf %224, %225 : vector<2x32xf32>
    %227 = vector.extract_strided_slice %15 {offsets = [12, 0], sizes = [2, 32], strides = [1, 1]} : vector<16x32xf32> to vector<2x32xf32>
    %228 = arith.mulf %219, %212 : vector<2x32xf32>
    %229 = arith.addf %227, %228 : vector<2x32xf32>
    %230 = math.tanh %229 : vector<2x32xf32>
    %cst_88 = arith.constant 1.000000e+00 : f32
    %231 = vector.broadcast %cst_88 : f32 to vector<2x32xf32>
    %232 = arith.subf %231, %226 : vector<2x32xf32>
    %233 = arith.mulf %232, %230 : vector<2x32xf32>
    %234 = arith.mulf %226, %207 : vector<2x32xf32>
    %235 = arith.addf %233, %234 : vector<2x32xf32>
    %cst_89 = arith.constant dense<0.000000e+00> : vector<2x32xf32>
    %236 = tpu.matmul %235, %31, %cst_89 {dimension_numbers = #tpu.dot_dimension_numbers<[1], [0], [0], [1], [0, 0, 1, 1], [], []>} : vector<2x32xf32>, vector<32x32xf32>, vector<2x32xf32> -> vector<2x32xf32>
    %cst_90 = arith.constant dense<0.000000e+00> : vector<2x32xf32>
    %237 = tpu.matmul %235, %32, %cst_90 {dimension_numbers = #tpu.dot_dimension_numbers<[1], [0], [0], [1], [0, 0, 1, 1], [], []>} : vector<2x32xf32>, vector<32x32xf32>, vector<2x32xf32> -> vector<2x32xf32>
    %cst_91 = arith.constant dense<0.000000e+00> : vector<2x32xf32>
    %238 = tpu.matmul %235, %33, %cst_91 {dimension_numbers = #tpu.dot_dimension_numbers<[1], [0], [0], [1], [0, 0, 1, 1], [], []>} : vector<2x32xf32>, vector<32x32xf32>, vector<2x32xf32> -> vector<2x32xf32>
    %239 = vector.broadcast %37 : vector<1x32xf32> to vector<2x32xf32>
    %240 = arith.addf %238, %239 : vector<2x32xf32>
    %241 = vector.extract_strided_slice %5 {offsets = [14, 0], sizes = [2, 32], strides = [1, 1]} : vector<16x32xf32> to vector<2x32xf32>
    %242 = arith.addf %241, %236 : vector<2x32xf32>
    %243 = arith.negf %242 : vector<2x32xf32>
    %244 = math.exp %243 : vector<2x32xf32>
    %cst_92 = arith.constant 1.000000e+00 : f32
    %245 = vector.broadcast %cst_92 : f32 to vector<2x32xf32>
    %246 = arith.addf %245, %244 : vector<2x32xf32>
    %247 = arith.divf %245, %246 : vector<2x32xf32>
    %248 = vector.extract_strided_slice %10 {offsets = [14, 0], sizes = [2, 32], strides = [1, 1]} : vector<16x32xf32> to vector<2x32xf32>
    %249 = arith.addf %248, %237 : vector<2x32xf32>
    %250 = arith.negf %249 : vector<2x32xf32>
    %251 = math.exp %250 : vector<2x32xf32>
    %cst_93 = arith.constant 1.000000e+00 : f32
    %252 = vector.broadcast %cst_93 : f32 to vector<2x32xf32>
    %253 = arith.addf %252, %251 : vector<2x32xf32>
    %254 = arith.divf %252, %253 : vector<2x32xf32>
    %255 = vector.extract_strided_slice %15 {offsets = [14, 0], sizes = [2, 32], strides = [1, 1]} : vector<16x32xf32> to vector<2x32xf32>
    %256 = arith.mulf %247, %240 : vector<2x32xf32>
    %257 = arith.addf %255, %256 : vector<2x32xf32>
    %258 = math.tanh %257 : vector<2x32xf32>
    %cst_94 = arith.constant 1.000000e+00 : f32
    %259 = vector.broadcast %cst_94 : f32 to vector<2x32xf32>
    %260 = arith.subf %259, %254 : vector<2x32xf32>
    %261 = arith.mulf %260, %258 : vector<2x32xf32>
    %262 = arith.mulf %254, %235 : vector<2x32xf32>
    %263 = arith.addf %261, %262 : vector<2x32xf32>
    %c0_95 = arith.constant 0 : index
    %c0_96 = arith.constant 0 : index
    %c0_97 = arith.constant 0 : index
    %264 = vector.load %arg24[%c0_95, %c0_96, %c0_97] : memref<1x2x32xf32, #tpu.memory_space<vmem>>, vector<1x2x32xf32>
    %265 = vector.shape_cast %264 : vector<1x2x32xf32> to vector<2x32xf32>
    %266 = vector.shape_cast %263 : vector<2x32xf32> to vector<1x2x32xf32>
    tpu.vector_store %arg24[%c0_95, %c0_96, %c0_97], %266 {strides = array<i32>} : memref<1x2x32xf32, #tpu.memory_space<vmem>>, vector<1x2x32xf32>,
    %cst_98 = arith.constant dense<0.000000e+00> : vector<2x32xf32>
    %267 = tpu.matmul %263, %34, %cst_98 {dimension_numbers = #tpu.dot_dimension_numbers<[1], [0], [0], [1], [0, 0, 1, 1], [], []>} : vector<2x32xf32>, vector<32x32xf32>, vector<2x32xf32> -> vector<2x32xf32>
    %cst_99 = arith.constant dense<0.000000e+00> : vector<2x32xf32>
    %268 = tpu.matmul %263, %35, %cst_99 {dimension_numbers = #tpu.dot_dimension_numbers<[1], [0], [0], [1], [0, 0, 1, 1], [], []>} : vector<2x32xf32>, vector<32x32xf32>, vector<2x32xf32> -> vector<2x32xf32>
    %cst_100 = arith.constant dense<0.000000e+00> : vector<2x32xf32>
    %269 = tpu.matmul %263, %36, %cst_100 {dimension_numbers = #tpu.dot_dimension_numbers<[1], [0], [0], [1], [0, 0, 1, 1], [], []>} : vector<2x32xf32>, vector<32x32xf32>, vector<2x32xf32> -> vector<2x32xf32>
    %270 = vector.broadcast %38 : vector<1x32xf32> to vector<2x32xf32>
    %271 = arith.addf %269, %270 : vector<2x32xf32>
    %272 = vector.extract_strided_slice %20 {offsets = [0, 0], sizes = [2, 32], strides = [1, 1]} : vector<16x32xf32> to vector<2x32xf32>
    %273 = arith.addf %272, %267 : vector<2x32xf32>
    %274 = arith.negf %273 : vector<2x32xf32>
    %275 = math.exp %274 : vector<2x32xf32>
    %cst_101 = arith.constant 1.000000e+00 : f32
    %276 = vector.broadcast %cst_101 : f32 to vector<2x32xf32>
    %277 = arith.addf %276, %275 : vector<2x32xf32>
    %278 = arith.divf %276, %277 : vector<2x32xf32>
    %279 = vector.extract_strided_slice %25 {offsets = [0, 0], sizes = [2, 32], strides = [1, 1]} : vector<16x32xf32> to vector<2x32xf32>
    %280 = arith.addf %279, %268 : vector<2x32xf32>
    %281 = arith.negf %280 : vector<2x32xf32>
    %282 = math.exp %281 : vector<2x32xf32>
    %cst_102 = arith.constant 1.000000e+00 : f32
    %283 = vector.broadcast %cst_102 : f32 to vector<2x32xf32>
    %284 = arith.addf %283, %282 : vector<2x32xf32>
    %285 = arith.divf %283, %284 : vector<2x32xf32>
    %286 = vector.extract_strided_slice %30 {offsets = [0, 0], sizes = [2, 32], strides = [1, 1]} : vector<16x32xf32> to vector<2x32xf32>
    %287 = arith.mulf %278, %271 : vector<2x32xf32>
    %288 = arith.addf %286, %287 : vector<2x32xf32>
    %289 = math.tanh %288 : vector<2x32xf32>
    %cst_103 = arith.constant 1.000000e+00 : f32
    %290 = vector.broadcast %cst_103 : f32 to vector<2x32xf32>
    %291 = arith.subf %290, %285 : vector<2x32xf32>
    %292 = arith.mulf %291, %289 : vector<2x32xf32>
    %293 = arith.mulf %285, %263 : vector<2x32xf32>
    %294 = arith.addf %292, %293 : vector<2x32xf32>
    %cst_104 = arith.constant dense<0.000000e+00> : vector<2x32xf32>
    %295 = tpu.matmul %294, %34, %cst_104 {dimension_numbers = #tpu.dot_dimension_numbers<[1], [0], [0], [1], [0, 0, 1, 1], [], []>} : vector<2x32xf32>, vector<32x32xf32>, vector<2x32xf32> -> vector<2x32xf32>
    %cst_105 = arith.constant dense<0.000000e+00> : vector<2x32xf32>
    %296 = tpu.matmul %294, %35, %cst_105 {dimension_numbers = #tpu.dot_dimension_numbers<[1], [0], [0], [1], [0, 0, 1, 1], [], []>} : vector<2x32xf32>, vector<32x32xf32>, vector<2x32xf32> -> vector<2x32xf32>
    %cst_106 = arith.constant dense<0.000000e+00> : vector<2x32xf32>
    %297 = tpu.matmul %294, %36, %cst_106 {dimension_numbers = #tpu.dot_dimension_numbers<[1], [0], [0], [1], [0, 0, 1, 1], [], []>} : vector<2x32xf32>, vector<32x32xf32>, vector<2x32xf32> -> vector<2x32xf32>
    %298 = vector.broadcast %38 : vector<1x32xf32> to vector<2x32xf32>
    %299 = arith.addf %297, %298 : vector<2x32xf32>
    %300 = vector.extract_strided_slice %20 {offsets = [2, 0], sizes = [2, 32], strides = [1, 1]} : vector<16x32xf32> to vector<2x32xf32>
    %301 = arith.addf %300, %295 : vector<2x32xf32>
    %302 = arith.negf %301 : vector<2x32xf32>
    %303 = math.exp %302 : vector<2x32xf32>
    %cst_107 = arith.constant 1.000000e+00 : f32
    %304 = vector.broadcast %cst_107 : f32 to vector<2x32xf32>
    %305 = arith.addf %304, %303 : vector<2x32xf32>
    %306 = arith.divf %304, %305 : vector<2x32xf32>
    %307 = vector.extract_strided_slice %25 {offsets = [2, 0], sizes = [2, 32], strides = [1, 1]} : vector<16x32xf32> to vector<2x32xf32>
    %308 = arith.addf %307, %296 : vector<2x32xf32>
    %309 = arith.negf %308 : vector<2x32xf32>
    %310 = math.exp %309 : vector<2x32xf32>
    %cst_108 = arith.constant 1.000000e+00 : f32
    %311 = vector.broadcast %cst_108 : f32 to vector<2x32xf32>
    %312 = arith.addf %311, %310 : vector<2x32xf32>
    %313 = arith.divf %311, %312 : vector<2x32xf32>
    %314 = vector.extract_strided_slice %30 {offsets = [2, 0], sizes = [2, 32], strides = [1, 1]} : vector<16x32xf32> to vector<2x32xf32>
    %315 = arith.mulf %306, %299 : vector<2x32xf32>
    %316 = arith.addf %314, %315 : vector<2x32xf32>
    %317 = math.tanh %316 : vector<2x32xf32>
    %cst_109 = arith.constant 1.000000e+00 : f32
    %318 = vector.broadcast %cst_109 : f32 to vector<2x32xf32>
    %319 = arith.subf %318, %313 : vector<2x32xf32>
    %320 = arith.mulf %319, %317 : vector<2x32xf32>
    %321 = arith.mulf %313, %294 : vector<2x32xf32>
    %322 = arith.addf %320, %321 : vector<2x32xf32>
    %cst_110 = arith.constant dense<0.000000e+00> : vector<2x32xf32>
    %323 = tpu.matmul %322, %34, %cst_110 {dimension_numbers = #tpu.dot_dimension_numbers<[1], [0], [0], [1], [0, 0, 1, 1], [], []>} : vector<2x32xf32>, vector<32x32xf32>, vector<2x32xf32> -> vector<2x32xf32>
    %cst_111 = arith.constant dense<0.000000e+00> : vector<2x32xf32>
    %324 = tpu.matmul %322, %35, %cst_111 {dimension_numbers = #tpu.dot_dimension_numbers<[1], [0], [0], [1], [0, 0, 1, 1], [], []>} : vector<2x32xf32>, vector<32x32xf32>, vector<2x32xf32> -> vector<2x32xf32>
    %cst_112 = arith.constant dense<0.000000e+00> : vector<2x32xf32>
    %325 = tpu.matmul %322, %36, %cst_112 {dimension_numbers = #tpu.dot_dimension_numbers<[1], [0], [0], [1], [0, 0, 1, 1], [], []>} : vector<2x32xf32>, vector<32x32xf32>, vector<2x32xf32> -> vector<2x32xf32>
    %326 = vector.broadcast %38 : vector<1x32xf32> to vector<2x32xf32>
    %327 = arith.addf %325, %326 : vector<2x32xf32>
    %328 = vector.extract_strided_slice %20 {offsets = [4, 0], sizes = [2, 32], strides = [1, 1]} : vector<16x32xf32> to vector<2x32xf32>
    %329 = arith.addf %328, %323 : vector<2x32xf32>
    %330 = arith.negf %329 : vector<2x32xf32>
    %331 = math.exp %330 : vector<2x32xf32>
    %cst_113 = arith.constant 1.000000e+00 : f32
    %332 = vector.broadcast %cst_113 : f32 to vector<2x32xf32>
    %333 = arith.addf %332, %331 : vector<2x32xf32>
    %334 = arith.divf %332, %333 : vector<2x32xf32>
    %335 = vector.extract_strided_slice %25 {offsets = [4, 0], sizes = [2, 32], strides = [1, 1]} : vector<16x32xf32> to vector<2x32xf32>
    %336 = arith.addf %335, %324 : vector<2x32xf32>
    %337 = arith.negf %336 : vector<2x32xf32>
    %338 = math.exp %337 : vector<2x32xf32>
    %cst_114 = arith.constant 1.000000e+00 : f32
    %339 = vector.broadcast %cst_114 : f32 to vector<2x32xf32>
    %340 = arith.addf %339, %338 : vector<2x32xf32>
    %341 = arith.divf %339, %340 : vector<2x32xf32>
    %342 = vector.extract_strided_slice %30 {offsets = [4, 0], sizes = [2, 32], strides = [1, 1]} : vector<16x32xf32> to vector<2x32xf32>
    %343 = arith.mulf %334, %327 : vector<2x32xf32>
    %344 = arith.addf %342, %343 : vector<2x32xf32>
    %345 = math.tanh %344 : vector<2x32xf32>
    %cst_115 = arith.constant 1.000000e+00 : f32
    %346 = vector.broadcast %cst_115 : f32 to vector<2x32xf32>
    %347 = arith.subf %346, %341 : vector<2x32xf32>
    %348 = arith.mulf %347, %345 : vector<2x32xf32>
    %349 = arith.mulf %341, %322 : vector<2x32xf32>
    %350 = arith.addf %348, %349 : vector<2x32xf32>
    %cst_116 = arith.constant dense<0.000000e+00> : vector<2x32xf32>
    %351 = tpu.matmul %350, %34, %cst_116 {dimension_numbers = #tpu.dot_dimension_numbers<[1], [0], [0], [1], [0, 0, 1, 1], [], []>} : vector<2x32xf32>, vector<32x32xf32>, vector<2x32xf32> -> vector<2x32xf32>
    %cst_117 = arith.constant dense<0.000000e+00> : vector<2x32xf32>
    %352 = tpu.matmul %350, %35, %cst_117 {dimension_numbers = #tpu.dot_dimension_numbers<[1], [0], [0], [1], [0, 0, 1, 1], [], []>} : vector<2x32xf32>, vector<32x32xf32>, vector<2x32xf32> -> vector<2x32xf32>
    %cst_118 = arith.constant dense<0.000000e+00> : vector<2x32xf32>
    %353 = tpu.matmul %350, %36, %cst_118 {dimension_numbers = #tpu.dot_dimension_numbers<[1], [0], [0], [1], [0, 0, 1, 1], [], []>} : vector<2x32xf32>, vector<32x32xf32>, vector<2x32xf32> -> vector<2x32xf32>
    %354 = vector.broadcast %38 : vector<1x32xf32> to vector<2x32xf32>
    %355 = arith.addf %353, %354 : vector<2x32xf32>
    %356 = vector.extract_strided_slice %20 {offsets = [6, 0], sizes = [2, 32], strides = [1, 1]} : vector<16x32xf32> to vector<2x32xf32>
    %357 = arith.addf %356, %351 : vector<2x32xf32>
    %358 = arith.negf %357 : vector<2x32xf32>
    %359 = math.exp %358 : vector<2x32xf32>
    %cst_119 = arith.constant 1.000000e+00 : f32
    %360 = vector.broadcast %cst_119 : f32 to vector<2x32xf32>
    %361 = arith.addf %360, %359 : vector<2x32xf32>
    %362 = arith.divf %360, %361 : vector<2x32xf32>
    %363 = vector.extract_strided_slice %25 {offsets = [6, 0], sizes = [2, 32], strides = [1, 1]} : vector<16x32xf32> to vector<2x32xf32>
    %364 = arith.addf %363, %352 : vector<2x32xf32>
    %365 = arith.negf %364 : vector<2x32xf32>
    %366 = math.exp %365 : vector<2x32xf32>
    %cst_120 = arith.constant 1.000000e+00 : f32
    %367 = vector.broadcast %cst_120 : f32 to vector<2x32xf32>
    %368 = arith.addf %367, %366 : vector<2x32xf32>
    %369 = arith.divf %367, %368 : vector<2x32xf32>
    %370 = vector.extract_strided_slice %30 {offsets = [6, 0], sizes = [2, 32], strides = [1, 1]} : vector<16x32xf32> to vector<2x32xf32>
    %371 = arith.mulf %362, %355 : vector<2x32xf32>
    %372 = arith.addf %370, %371 : vector<2x32xf32>
    %373 = math.tanh %372 : vector<2x32xf32>
    %cst_121 = arith.constant 1.000000e+00 : f32
    %374 = vector.broadcast %cst_121 : f32 to vector<2x32xf32>
    %375 = arith.subf %374, %369 : vector<2x32xf32>
    %376 = arith.mulf %375, %373 : vector<2x32xf32>
    %377 = arith.mulf %369, %350 : vector<2x32xf32>
    %378 = arith.addf %376, %377 : vector<2x32xf32>
    %cst_122 = arith.constant dense<0.000000e+00> : vector<2x32xf32>
    %379 = tpu.matmul %378, %34, %cst_122 {dimension_numbers = #tpu.dot_dimension_numbers<[1], [0], [0], [1], [0, 0, 1, 1], [], []>} : vector<2x32xf32>, vector<32x32xf32>, vector<2x32xf32> -> vector<2x32xf32>
    %cst_123 = arith.constant dense<0.000000e+00> : vector<2x32xf32>
    %380 = tpu.matmul %378, %35, %cst_123 {dimension_numbers = #tpu.dot_dimension_numbers<[1], [0], [0], [1], [0, 0, 1, 1], [], []>} : vector<2x32xf32>, vector<32x32xf32>, vector<2x32xf32> -> vector<2x32xf32>
    %cst_124 = arith.constant dense<0.000000e+00> : vector<2x32xf32>
    %381 = tpu.matmul %378, %36, %cst_124 {dimension_numbers = #tpu.dot_dimension_numbers<[1], [0], [0], [1], [0, 0, 1, 1], [], []>} : vector<2x32xf32>, vector<32x32xf32>, vector<2x32xf32> -> vector<2x32xf32>
    %382 = vector.broadcast %38 : vector<1x32xf32> to vector<2x32xf32>
    %383 = arith.addf %381, %382 : vector<2x32xf32>
    %384 = vector.extract_strided_slice %20 {offsets = [8, 0], sizes = [2, 32], strides = [1, 1]} : vector<16x32xf32> to vector<2x32xf32>
    %385 = arith.addf %384, %379 : vector<2x32xf32>
    %386 = arith.negf %385 : vector<2x32xf32>
    %387 = math.exp %386 : vector<2x32xf32>
    %cst_125 = arith.constant 1.000000e+00 : f32
    %388 = vector.broadcast %cst_125 : f32 to vector<2x32xf32>
    %389 = arith.addf %388, %387 : vector<2x32xf32>
    %390 = arith.divf %388, %389 : vector<2x32xf32>
    %391 = vector.extract_strided_slice %25 {offsets = [8, 0], sizes = [2, 32], strides = [1, 1]} : vector<16x32xf32> to vector<2x32xf32>
    %392 = arith.addf %391, %380 : vector<2x32xf32>
    %393 = arith.negf %392 : vector<2x32xf32>
    %394 = math.exp %393 : vector<2x32xf32>
    %cst_126 = arith.constant 1.000000e+00 : f32
    %395 = vector.broadcast %cst_126 : f32 to vector<2x32xf32>
    %396 = arith.addf %395, %394 : vector<2x32xf32>
    %397 = arith.divf %395, %396 : vector<2x32xf32>
    %398 = vector.extract_strided_slice %30 {offsets = [8, 0], sizes = [2, 32], strides = [1, 1]} : vector<16x32xf32> to vector<2x32xf32>
    %399 = arith.mulf %390, %383 : vector<2x32xf32>
    %400 = arith.addf %398, %399 : vector<2x32xf32>
    %401 = math.tanh %400 : vector<2x32xf32>
    %cst_127 = arith.constant 1.000000e+00 : f32
    %402 = vector.broadcast %cst_127 : f32 to vector<2x32xf32>
    %403 = arith.subf %402, %397 : vector<2x32xf32>
    %404 = arith.mulf %403, %401 : vector<2x32xf32>
    %405 = arith.mulf %397, %378 : vector<2x32xf32>
    %406 = arith.addf %404, %405 : vector<2x32xf32>
    %cst_128 = arith.constant dense<0.000000e+00> : vector<2x32xf32>
    %407 = tpu.matmul %406, %34, %cst_128 {dimension_numbers = #tpu.dot_dimension_numbers<[1], [0], [0], [1], [0, 0, 1, 1], [], []>} : vector<2x32xf32>, vector<32x32xf32>, vector<2x32xf32> -> vector<2x32xf32>
    %cst_129 = arith.constant dense<0.000000e+00> : vector<2x32xf32>
    %408 = tpu.matmul %406, %35, %cst_129 {dimension_numbers = #tpu.dot_dimension_numbers<[1], [0], [0], [1], [0, 0, 1, 1], [], []>} : vector<2x32xf32>, vector<32x32xf32>, vector<2x32xf32> -> vector<2x32xf32>
    %cst_130 = arith.constant dense<0.000000e+00> : vector<2x32xf32>
    %409 = tpu.matmul %406, %36, %cst_130 {dimension_numbers = #tpu.dot_dimension_numbers<[1], [0], [0], [1], [0, 0, 1, 1], [], []>} : vector<2x32xf32>, vector<32x32xf32>, vector<2x32xf32> -> vector<2x32xf32>
    %410 = vector.broadcast %38 : vector<1x32xf32> to vector<2x32xf32>
    %411 = arith.addf %409, %410 : vector<2x32xf32>
    %412 = vector.extract_strided_slice %20 {offsets = [10, 0], sizes = [2, 32], strides = [1, 1]} : vector<16x32xf32> to vector<2x32xf32>
    %413 = arith.addf %412, %407 : vector<2x32xf32>
    %414 = arith.negf %413 : vector<2x32xf32>
    %415 = math.exp %414 : vector<2x32xf32>
    %cst_131 = arith.constant 1.000000e+00 : f32
    %416 = vector.broadcast %cst_131 : f32 to vector<2x32xf32>
    %417 = arith.addf %416, %415 : vector<2x32xf32>
    %418 = arith.divf %416, %417 : vector<2x32xf32>
    %419 = vector.extract_strided_slice %25 {offsets = [10, 0], sizes = [2, 32], strides = [1, 1]} : vector<16x32xf32> to vector<2x32xf32>
    %420 = arith.addf %419, %408 : vector<2x32xf32>
    %421 = arith.negf %420 : vector<2x32xf32>
    %422 = math.exp %421 : vector<2x32xf32>
    %cst_132 = arith.constant 1.000000e+00 : f32
    %423 = vector.broadcast %cst_132 : f32 to vector<2x32xf32>
    %424 = arith.addf %423, %422 : vector<2x32xf32>
    %425 = arith.divf %423, %424 : vector<2x32xf32>
    %426 = vector.extract_strided_slice %30 {offsets = [10, 0], sizes = [2, 32], strides = [1, 1]} : vector<16x32xf32> to vector<2x32xf32>
    %427 = arith.mulf %418, %411 : vector<2x32xf32>
    %428 = arith.addf %426, %427 : vector<2x32xf32>
    %429 = math.tanh %428 : vector<2x32xf32>
    %cst_133 = arith.constant 1.000000e+00 : f32
    %430 = vector.broadcast %cst_133 : f32 to vector<2x32xf32>
    %431 = arith.subf %430, %425 : vector<2x32xf32>
    %432 = arith.mulf %431, %429 : vector<2x32xf32>
    %433 = arith.mulf %425, %406 : vector<2x32xf32>
    %434 = arith.addf %432, %433 : vector<2x32xf32>
    %cst_134 = arith.constant dense<0.000000e+00> : vector<2x32xf32>
    %435 = tpu.matmul %434, %34, %cst_134 {dimension_numbers = #tpu.dot_dimension_numbers<[1], [0], [0], [1], [0, 0, 1, 1], [], []>} : vector<2x32xf32>, vector<32x32xf32>, vector<2x32xf32> -> vector<2x32xf32>
    %cst_135 = arith.constant dense<0.000000e+00> : vector<2x32xf32>
    %436 = tpu.matmul %434, %35, %cst_135 {dimension_numbers = #tpu.dot_dimension_numbers<[1], [0], [0], [1], [0, 0, 1, 1], [], []>} : vector<2x32xf32>, vector<32x32xf32>, vector<2x32xf32> -> vector<2x32xf32>
    %cst_136 = arith.constant dense<0.000000e+00> : vector<2x32xf32>
    %437 = tpu.matmul %434, %36, %cst_136 {dimension_numbers = #tpu.dot_dimension_numbers<[1], [0], [0], [1], [0, 0, 1, 1], [], []>} : vector<2x32xf32>, vector<32x32xf32>, vector<2x32xf32> -> vector<2x32xf32>
    %438 = vector.broadcast %38 : vector<1x32xf32> to vector<2x32xf32>
    %439 = arith.addf %437, %438 : vector<2x32xf32>
    %440 = vector.extract_strided_slice %20 {offsets = [12, 0], sizes = [2, 32], strides = [1, 1]} : vector<16x32xf32> to vector<2x32xf32>
    %441 = arith.addf %440, %435 : vector<2x32xf32>
    %442 = arith.negf %441 : vector<2x32xf32>
    %443 = math.exp %442 : vector<2x32xf32>
    %cst_137 = arith.constant 1.000000e+00 : f32
    %444 = vector.broadcast %cst_137 : f32 to vector<2x32xf32>
    %445 = arith.addf %444, %443 : vector<2x32xf32>
    %446 = arith.divf %444, %445 : vector<2x32xf32>
    %447 = vector.extract_strided_slice %25 {offsets = [12, 0], sizes = [2, 32], strides = [1, 1]} : vector<16x32xf32> to vector<2x32xf32>
    %448 = arith.addf %447, %436 : vector<2x32xf32>
    %449 = arith.negf %448 : vector<2x32xf32>
    %450 = math.exp %449 : vector<2x32xf32>
    %cst_138 = arith.constant 1.000000e+00 : f32
    %451 = vector.broadcast %cst_138 : f32 to vector<2x32xf32>
    %452 = arith.addf %451, %450 : vector<2x32xf32>
    %453 = arith.divf %451, %452 : vector<2x32xf32>
    %454 = vector.extract_strided_slice %30 {offsets = [12, 0], sizes = [2, 32], strides = [1, 1]} : vector<16x32xf32> to vector<2x32xf32>
    %455 = arith.mulf %446, %439 : vector<2x32xf32>
    %456 = arith.addf %454, %455 : vector<2x32xf32>
    %457 = math.tanh %456 : vector<2x32xf32>
    %cst_139 = arith.constant 1.000000e+00 : f32
    %458 = vector.broadcast %cst_139 : f32 to vector<2x32xf32>
    %459 = arith.subf %458, %453 : vector<2x32xf32>
    %460 = arith.mulf %459, %457 : vector<2x32xf32>
    %461 = arith.mulf %453, %434 : vector<2x32xf32>
    %462 = arith.addf %460, %461 : vector<2x32xf32>
    %cst_140 = arith.constant dense<0.000000e+00> : vector<2x32xf32>
    %463 = tpu.matmul %462, %34, %cst_140 {dimension_numbers = #tpu.dot_dimension_numbers<[1], [0], [0], [1], [0, 0, 1, 1], [], []>} : vector<2x32xf32>, vector<32x32xf32>, vector<2x32xf32> -> vector<2x32xf32>
    %cst_141 = arith.constant dense<0.000000e+00> : vector<2x32xf32>
    %464 = tpu.matmul %462, %35, %cst_141 {dimension_numbers = #tpu.dot_dimension_numbers<[1], [0], [0], [1], [0, 0, 1, 1], [], []>} : vector<2x32xf32>, vector<32x32xf32>, vector<2x32xf32> -> vector<2x32xf32>
    %cst_142 = arith.constant dense<0.000000e+00> : vector<2x32xf32>
    %465 = tpu.matmul %462, %36, %cst_142 {dimension_numbers = #tpu.dot_dimension_numbers<[1], [0], [0], [1], [0, 0, 1, 1], [], []>} : vector<2x32xf32>, vector<32x32xf32>, vector<2x32xf32> -> vector<2x32xf32>
    %466 = vector.broadcast %38 : vector<1x32xf32> to vector<2x32xf32>
    %467 = arith.addf %465, %466 : vector<2x32xf32>
    %468 = vector.extract_strided_slice %20 {offsets = [14, 0], sizes = [2, 32], strides = [1, 1]} : vector<16x32xf32> to vector<2x32xf32>
    %469 = arith.addf %468, %463 : vector<2x32xf32>
    %470 = arith.negf %469 : vector<2x32xf32>
    %471 = math.exp %470 : vector<2x32xf32>
    %cst_143 = arith.constant 1.000000e+00 : f32
    %472 = vector.broadcast %cst_143 : f32 to vector<2x32xf32>
    %473 = arith.addf %472, %471 : vector<2x32xf32>
    %474 = arith.divf %472, %473 : vector<2x32xf32>
    %475 = vector.extract_strided_slice %25 {offsets = [14, 0], sizes = [2, 32], strides = [1, 1]} : vector<16x32xf32> to vector<2x32xf32>
    %476 = arith.addf %475, %464 : vector<2x32xf32>
    %477 = arith.negf %476 : vector<2x32xf32>
    %478 = math.exp %477 : vector<2x32xf32>
    %cst_144 = arith.constant 1.000000e+00 : f32
    %479 = vector.broadcast %cst_144 : f32 to vector<2x32xf32>
    %480 = arith.addf %479, %478 : vector<2x32xf32>
    %481 = arith.divf %479, %480 : vector<2x32xf32>
    %482 = vector.extract_strided_slice %30 {offsets = [14, 0], sizes = [2, 32], strides = [1, 1]} : vector<16x32xf32> to vector<2x32xf32>
    %483 = arith.mulf %474, %467 : vector<2x32xf32>
    %484 = arith.addf %482, %483 : vector<2x32xf32>
    %485 = math.tanh %484 : vector<2x32xf32>
    %cst_145 = arith.constant 1.000000e+00 : f32
    %486 = vector.broadcast %cst_145 : f32 to vector<2x32xf32>
    %487 = arith.subf %486, %481 : vector<2x32xf32>
    %488 = arith.mulf %487, %485 : vector<2x32xf32>
    %489 = arith.mulf %481, %462 : vector<2x32xf32>
    %490 = arith.addf %488, %489 : vector<2x32xf32>
    %491 = tpu.concatenate %294, %322, %350, %378, %406, %434, %462, %490 in 0 : vector<2x32xf32>, vector<2x32xf32>, vector<2x32xf32>, vector<2x32xf32>, vector<2x32xf32>, vector<2x32xf32>, vector<2x32xf32>, vector<2x32xf32> -> vector<16x32xf32>
    %c0_146 = arith.constant 0 : index
    %c0_147 = arith.constant 0 : index
    %492 = vector.load %arg21[%c0_146, %c0_147] : memref<32x4xf32, #tpu.memory_space<vmem>>, vector<32x4xf32>
    %cst_148 = arith.constant dense<0.000000e+00> : vector<16x4xf32>
    %493 = tpu.matmul %491, %492, %cst_148 {dimension_numbers = #tpu.dot_dimension_numbers<[1], [0], [0], [1], [0, 0, 1, 1], [], []>} : vector<16x32xf32>, vector<32x4xf32>, vector<16x4xf32> -> vector<16x4xf32>
    %c0_149 = arith.constant 0 : index
    %c0_150 = arith.constant 0 : index
    %494 = vector.load %arg22[%c0_149, %c0_150] : memref<1x4xf32, #tpu.memory_space<vmem>>, vector<1x4xf32>
    %495 = vector.broadcast %494 : vector<1x4xf32> to vector<16x4xf32>
    %496 = arith.addf %493, %495 : vector<16x4xf32>
    %c0_151 = arith.constant 0 : index
    %c0_152 = arith.constant 0 : index
    %497 = vector.load %arg23[%c0_151, %c0_152] : memref<16x4xf32, #tpu.memory_space<vmem>>, vector<16x4xf32>
    tpu.vector_store %arg23[%c0_151, %c0_152], %496 {strides = array<i32>} : memref<16x4xf32, #tpu.memory_space<vmem>>, vector<16x4xf32>,
    return
  }
}

</mosaic_0001>

<llo_original>
// kernel: seq2seq_forward.1
$region0: #{seq2seq_forward.1}
  #allocation0 [shape = 'u32[]', space=smem, size = 0x4, offset = 0x4, fixed_abs, tag = 'smem constant byte address 0x4 - core index']
  #allocation1 [shape = 'u32[144,128]{1,0:T(1,128)}', space=vmem, size = 0x12000, scoped, tag = 'internal scratch']
  %s0 = inlined_call_operand.vmem [shape: f32[16,4], index: 0, kind: input, shape index: {}]
  %s1 = inlined_call_operand.vmem [shape: f32[4,32], index: 1, kind: input, shape index: {}]
  %s2 = inlined_call_operand.vmem [shape: f32[4,32], index: 2, kind: input, shape index: {}]
  %s3 = inlined_call_operand.vmem [shape: f32[4,32], index: 3, kind: input, shape index: {}]
  %s4 = inlined_call_operand.vmem [shape: f32[32,32], index: 4, kind: input, shape index: {}]
  %s5 = inlined_call_operand.vmem [shape: f32[32,32], index: 5, kind: input, shape index: {}]
  %s6 = inlined_call_operand.vmem [shape: f32[32,32], index: 6, kind: input, shape index: {}]
  %s7 = inlined_call_operand.vmem [shape: f32[1,32], index: 7, kind: input, shape index: {}]
  %s8 = inlined_call_operand.vmem [shape: f32[1,32], index: 8, kind: input, shape index: {}]
  %s9 = inlined_call_operand.vmem [shape: f32[1,32], index: 9, kind: input, shape index: {}]
  %s10 = inlined_call_operand.vmem [shape: f32[1,32], index: 10, kind: input, shape index: {}]
  %s11 = inlined_call_operand.vmem [shape: f32[4,32], index: 11, kind: input, shape index: {}]
  %s12 = inlined_call_operand.vmem [shape: f32[4,32], index: 12, kind: input, shape index: {}]
  %s13 = inlined_call_operand.vmem [shape: f32[4,32], index: 13, kind: input, shape index: {}]
  %s14 = inlined_call_operand.vmem [shape: f32[32,32], index: 14, kind: input, shape index: {}]
  %s15 = inlined_call_operand.vmem [shape: f32[32,32], index: 15, kind: input, shape index: {}]
  %s16 = inlined_call_operand.vmem [shape: f32[32,32], index: 16, kind: input, shape index: {}]
  %s17 = inlined_call_operand.vmem [shape: f32[1,32], index: 17, kind: input, shape index: {}]
  %s18 = inlined_call_operand.vmem [shape: f32[1,32], index: 18, kind: input, shape index: {}]
  %s19 = inlined_call_operand.vmem [shape: f32[1,32], index: 19, kind: input, shape index: {}]
  %s20 = inlined_call_operand.vmem [shape: f32[1,32], index: 20, kind: input, shape index: {}]
  %s21 = inlined_call_operand.vmem [shape: f32[32,4], index: 21, kind: input, shape index: {}]
  %s22 = inlined_call_operand.vmem [shape: f32[1,4], index: 22, kind: input, shape index: {}]
  %s23 = inlined_call_operand.vmem [shape: f32[16,4], index: 23, kind: output, shape index: {0}]
  %s24 = inlined_call_operand.hbm [shape: f32[1,2,32], index: 24, kind: output, shape index: {1}]
  %25 = xla_tuple %s23, %s24
  %s26 = sld [smem:[#allocation0]]
  $region110: #{seq2seq_forward.1} parent=0
    _
  %s28 = ssub.s32 1, %s26
  %s29 = scalar_select 0, %s28, %s26
  $region1: #{seq2seq_forward.1} parent=0
    #allocation2 [shape = 'u8[1024]{0}', space=vmem, size = 0x400, scoped, tag = 'output window, operand 1, single buffered']
    #allocation3 [shape = 's32[1]{0}', space=sflag, size = 0x4, scoped, tag = 'scoped memory for seq2seq_forward.1']
    %30 = vsyncpa [#allocation3], 0
    // Predicated region
    $region2: #{seq2seq_forward.1} parent=1 // pred_check
      _
    $region3: #{seq2seq_forward.1} parent=1 // pred_check_branch
      %32 = sbr.rel (0) target = $region5
    $region4: #{seq2seq_forward.1} parent=1 // pred_region
      _
    $region5: #{seq2seq_forward.1} parent=1 // pred_fallthru
      _
    // Predicated region
    $region6: #{seq2seq_forward.1} parent=1 // pred_check
      _
    $region7: #{seq2seq_forward.1} parent=1 // pred_check_branch
      %34 = sbr.rel (0) target = $region9
    $region8: #{seq2seq_forward.1} parent=1 // pred_region
      _
    $region9: #{seq2seq_forward.1} parent=1 // pred_fallthru
      _
    // Predicated region
    $region10: #{seq2seq_forward.1} parent=1 // pred_check
      _
    $region11: #{seq2seq_forward.1} parent=1 // pred_check_branch
      %36 = sbr.rel (0) target = $region13
    $region12: #{seq2seq_forward.1} parent=1 // pred_region
      _
    $region13: #{seq2seq_forward.1} parent=1 // pred_fallthru
      _
    // Predicated region
    $region14: #{seq2seq_forward.1} parent=1 // pred_check
      _
    $region15: #{seq2seq_forward.1} parent=1 // pred_check_branch
      %38 = sbr.rel (0) target = $region17
    $region16: #{seq2seq_forward.1} parent=1 // pred_region
      _
    $region17: #{seq2seq_forward.1} parent=1 // pred_fallthru
      _
    // Predicated region
    $region18: #{seq2seq_forward.1} parent=1 // pred_check
      _
    $region19: #{seq2seq_forward.1} parent=1 // pred_check_branch
      %40 = sbr.rel (0) target = $region21
    $region20: #{seq2seq_forward.1} parent=1 // pred_region
      _
    $region21: #{seq2seq_forward.1} parent=1 // pred_fallthru
      _
    // Predicated region
    $region22: #{seq2seq_forward.1} parent=1 // pred_check
      _
    $region23: #{seq2seq_forward.1} parent=1 // pred_check_branch
      %42 = sbr.rel (0) target = $region25
    $region24: #{seq2seq_forward.1} parent=1 // pred_region
      _
    $region25: #{seq2seq_forward.1} parent=1 // pred_fallthru
      _
    // Predicated region
    $region26: #{seq2seq_forward.1} parent=1 // pred_check
      _
    $region27: #{seq2seq_forward.1} parent=1 // pred_check_branch
      %44 = sbr.rel (0) target = $region29
    $region28: #{seq2seq_forward.1} parent=1 // pred_region
      _
    $region29: #{seq2seq_forward.1} parent=1 // pred_fallthru
      _
    // Predicated region
    $region30: #{seq2seq_forward.1} parent=1 // pred_check
      _
    $region31: #{seq2seq_forward.1} parent=1 // pred_check_branch
      %46 = sbr.rel (0) target = $region33
    $region32: #{seq2seq_forward.1} parent=1 // pred_region
      _
    $region33: #{seq2seq_forward.1} parent=1 // pred_fallthru
      _
    // Predicated region
    $region34: #{seq2seq_forward.1} parent=1 // pred_check
      _
    $region35: #{seq2seq_forward.1} parent=1 // pred_check_branch
      %48 = sbr.rel (0) target = $region37
    $region36: #{seq2seq_forward.1} parent=1 // pred_region
      _
    $region37: #{seq2seq_forward.1} parent=1 // pred_fallthru
      _
    // Predicated region
    $region38: #{seq2seq_forward.1} parent=1 // pred_check
      _
    $region39: #{seq2seq_forward.1} parent=1 // pred_check_branch
      %50 = sbr.rel (0) target = $region41
    $region40: #{seq2seq_forward.1} parent=1 // pred_region
      _
    $region41: #{seq2seq_forward.1} parent=1 // pred_fallthru
      _
    // Predicated region
    $region42: #{seq2seq_forward.1} parent=1 // pred_check
      _
    $region43: #{seq2seq_forward.1} parent=1 // pred_check_branch
      %52 = sbr.rel (0) target = $region45
    $region44: #{seq2seq_forward.1} parent=1 // pred_region
      _
    $region45: #{seq2seq_forward.1} parent=1 // pred_fallthru
      _
    // Predicated region
    $region46: #{seq2seq_forward.1} parent=1 // pred_check
      _
    $region47: #{seq2seq_forward.1} parent=1 // pred_check_branch
      %54 = sbr.rel (0) target = $region49
    $region48: #{seq2seq_forward.1} parent=1 // pred_region
      _
    $region49: #{seq2seq_forward.1} parent=1 // pred_fallthru
      _
    // Predicated region
    $region50: #{seq2seq_forward.1} parent=1 // pred_check
      _
    $region51: #{seq2seq_forward.1} parent=1 // pred_check_branch
      %56 = sbr.rel (0) target = $region53
    $region52: #{seq2seq_forward.1} parent=1 // pred_region
      _
    $region53: #{seq2seq_forward.1} parent=1 // pred_fallthru
      _
    // Predicated region
    $region54: #{seq2seq_forward.1} parent=1 // pred_check
      _
    $region55: #{seq2seq_forward.1} parent=1 // pred_check_branch
      %58 = sbr.rel (0) target = $region57
    $region56: #{seq2seq_forward.1} parent=1 // pred_region
      _
    $region57: #{seq2seq_forward.1} parent=1 // pred_fallthru
      _
    // Predicated region
    $region58: #{seq2seq_forward.1} parent=1 // pred_check
      _
    $region59: #{seq2seq_forward.1} parent=1 // pred_check_branch
      %60 = sbr.rel (0) target = $region61
    $region60: #{seq2seq_forward.1} parent=1 // pred_region
      _
    $region61: #{seq2seq_forward.1} parent=1 // pred_fallthru
      _
    // Predicated region
    $region62: #{seq2seq_forward.1} parent=1 // pred_check
      _
    $region63: #{seq2seq_forward.1} parent=1 // pred_check_branch
      %62 = sbr.rel (0) target = $region65
    $region64: #{seq2seq_forward.1} parent=1 // pred_region
      _
    $region65: #{seq2seq_forward.1} parent=1 // pred_fallthru
      _
    // Predicated region
    $region66: #{seq2seq_forward.1} parent=1 // pred_check
      _
    $region67: #{seq2seq_forward.1} parent=1 // pred_check_branch
      %64 = sbr.rel (0) target = $region69
    $region68: #{seq2seq_forward.1} parent=1 // pred_region
      _
    $region69: #{seq2seq_forward.1} parent=1 // pred_fallthru
      _
    // Predicated region
    $region70: #{seq2seq_forward.1} parent=1 // pred_check
      _
    $region71: #{seq2seq_forward.1} parent=1 // pred_check_branch
      %66 = sbr.rel (0) target = $region73
    $region72: #{seq2seq_forward.1} parent=1 // pred_region
      _
    $region73: #{seq2seq_forward.1} parent=1 // pred_fallthru
      _
    // Predicated region
    $region74: #{seq2seq_forward.1} parent=1 // pred_check
      _
    $region75: #{seq2seq_forward.1} parent=1 // pred_check_branch
      %68 = sbr.rel (0) target = $region77
    $region76: #{seq2seq_forward.1} parent=1 // pred_region
      _
    $region77: #{seq2seq_forward.1} parent=1 // pred_fallthru
      _
    // Predicated region
    $region78: #{seq2seq_forward.1} parent=1 // pred_check
      _
    $region79: #{seq2seq_forward.1} parent=1 // pred_check_branch
      %70 = sbr.rel (0) target = $region81
    $region80: #{seq2seq_forward.1} parent=1 // pred_region
      _
    $region81: #{seq2seq_forward.1} parent=1 // pred_fallthru
      _
    // Predicated region
    $region82: #{seq2seq_forward.1} parent=1 // pred_check
      _
    $region83: #{seq2seq_forward.1} parent=1 // pred_check_branch
      %72 = sbr.rel (0) target = $region85
    $region84: #{seq2seq_forward.1} parent=1 // pred_region
      _
    $region85: #{seq2seq_forward.1} parent=1 // pred_fallthru
      _
    // Predicated region
    $region86: #{seq2seq_forward.1} parent=1 // pred_check
      _
    $region87: #{seq2seq_forward.1} parent=1 // pred_check_branch
      %74 = sbr.rel (0) target = $region89
    $region88: #{seq2seq_forward.1} parent=1 // pred_region
      _
    $region89: #{seq2seq_forward.1} parent=1 // pred_fallthru
      _
    // Predicated region
    $region90: #{seq2seq_forward.1} parent=1 // pred_check
      _
    $region91: #{seq2seq_forward.1} parent=1 // pred_check_branch
      %76 = sbr.rel (0) target = $region93
    $region92: #{seq2seq_forward.1} parent=1 // pred_region
      _
    $region93: #{seq2seq_forward.1} parent=1 // pred_fallthru
      _
    %v77 = vld [vmem:[%s0] sm:$0xff]
    %v78 = vld [vmem:[%s0 + $0x8] sm:$0xff]
    %v79 = vld [vmem:[%s1] sm:$0xf]
    %v80 = vld [vmem:[%s7] sm:$0x1]
    %v82 = vlaneseq
    %v83 = vshrl.u32 %v82, 7
    %v84 = vsub.s32 0, %v83
    %v85 = vrot.slane %v80, %v84
    %vm87 = vcmask 31744
    %v89 = vsel %vm87, %v77, 0
    %v92 = vsel %vm87, %v78, 0
    %vm94 = vcmask 1043456
    %v96 = vsel %vm94, %v79, 0
    %98 = vmatprep.subr.mxu0 0.0
    %99 = vmatpush1.msra.mxu0 0.0
    %100 = vmatprep.subr.mxu0 0.0
    %101 = vmatpush1.msra.mxu0 0.0
    %102 = vmatprep.subr.mxu0 0.0
    %103 = vmatpush1.msra.mxu0 0.0
    %104 = vmatprep.subr.mxu0 0.0
    %105 = vmatpush1.msra.mxu0 0.0
    %106 = vmatprep.subr.mxu0 0.0
    %107 = vmatpush1.msra.mxu0 0.0
    %108 = vmatprep.subr.mxu0 0.0
    %109 = vmatpush1.msra.mxu0 0.0
    %110 = vmatprep.subr.mxu0 0.0
    %111 = vmatpush1.msra.mxu0 0.0
    %112 = vmatprep.subr.mxu0 0.0
    %113 = vmatpush1.msra.mxu0 0.0
    %114 = vmatprep.subr.mxu0 0.0
    %115 = vmatpush1.msra.mxu0 0.0
    %116 = vmatprep.subr.mxu0 0.0
    %117 = vmatpush1.msra.mxu0 0.0
    %118 = vmatprep.subr.mxu0 0.0
    %119 = vmatpush1.msra.mxu0 0.0
    %120 = vmatprep.subr.mxu0 0.0
    %121 = vmatpush1.msra.mxu0 0.0
    %122 = vmatprep.subr.mxu0 0.0
    %123 = vmatpush1.msra.mxu0 0.0
    %124 = vmatprep.subr.mxu0 0.0
    %125 = vmatpush1.msra.mxu0 0.0
    %126 = vmatprep.subr.mxu0 0.0
    %127 = vmatpush1.msra.mxu0 0.0
    %128 = vmatprep.subr.mxu0 0.0
    %129 = vmatpush1.msra.mxu0 %v96
    %130 = vmatprep.subr.mxu0 0.0
    %131 = vmatpush2.msra.mxu0 0.0
    %132 = vmatprep.subr.mxu0 0.0
    %133 = vmatpush2.msra.mxu0 0.0
    %134 = vmatprep.subr.mxu0 0.0
    %135 = vmatpush2.msra.mxu0 0.0
    %136 = vmatprep.subr.mxu0 0.0
    %137 = vmatpush2.msra.mxu0 0.0
    %138 = vmatprep.subr.mxu0 0.0
    %139 = vmatpush2.msra.mxu0 0.0
    %140 = vmatprep.subr.mxu0 0.0
    %141 = vmatpush2.msra.mxu0 0.0
    %142 = vmatprep.subr.mxu0 0.0
    %143 = vmatpush2.msra.mxu0 0.0
    %144 = vmatprep.subr.mxu0 0.0
    %145 = vmatpush2.msra.mxu0 0.0
    %146 = vmatprep.subr.mxu0 0.0
    %147 = vmatpush2.msra.mxu0 0.0
    %148 = vmatprep.subr.mxu0 0.0
    %149 = vmatpush2.msra.mxu0 0.0
    %150 = vmatprep.subr.mxu0 0.0
    %151 = vmatpush2.msra.mxu0 0.0
    %152 = vmatprep.subr.mxu0 0.0
    %153 = vmatpush2.msra.mxu0 0.0
    %154 = vmatprep.subr.mxu0 0.0
    %155 = vmatpush2.msra.mxu0 0.0
    %156 = vmatprep.subr.mxu0 0.0
    %157 = vmatpush2.msra.mxu0 0.0
    %158 = vmatprep.subr.mxu0 0.0
    %159 = vmatpush2.msra.mxu0 0.0
    %160 = vmatprep.subr.mxu0 0.0
    %161 = vmatpush2.msra.mxu0 0.0
    %162 = vmatprep.mubr.f32.mxu0 0.0
    %163 = vmatmul.mubr.f32.gmra.mxu0 %v89
    %v164 = vpop.f32.mrf.mxu0
    %v165 = vadd.f32 %v85, %v164
    %v166 = vpop.f32.mrf.mxu0
    %167 = vmatprep.mubr.f32.mxu0 0.0
    %168 = vmatmul.mubr.f32.gmra.mxu0 %v92
    %v169 = vpop.f32.mrf.mxu0
    %v170 = vadd.f32 %v85, %v169
    %v171 = vpop.f32.mrf.mxu0
    %172 = vdwg.mxu0
    %v173 = vld [vmem:[%s2] sm:$0xf]
    %v174 = vld [vmem:[%s8] sm:$0x1]
    %v176 = vlaneseq
    %v177 = vshrl.u32 %v176, 7
    %v178 = vsub.s32 0, %v177
    %v179 = vrot.slane %v174, %v178
    %v182 = vsel %vm94, %v173, 0
    %184 = vmatprep.subr.mxu0 0.0
    %185 = vmatpush1.msra.mxu0 0.0
    %186 = vmatprep.subr.mxu0 0.0
    %187 = vmatpush1.msra.mxu0 0.0
    %188 = vmatprep.subr.mxu0 0.0
    %189 = vmatpush1.msra.mxu0 0.0
    %190 = vmatprep.subr.mxu0 0.0
    %191 = vmatpush1.msra.mxu0 0.0
    %192 = vmatprep.subr.mxu0 0.0
    %193 = vmatpush1.msra.mxu0 0.0
    %194 = vmatprep.subr.mxu0 0.0
    %195 = vmatpush1.msra.mxu0 0.0
    %196 = vmatprep.subr.mxu0 0.0
    %197 = vmatpush1.msra.mxu0 0.0
    %198 = vmatprep.subr.mxu0 0.0
    %199 = vmatpush1.msra.mxu0 0.0
    %200 = vmatprep.subr.mxu0 0.0
    %201 = vmatpush1.msra.mxu0 0.0
    %202 = vmatprep.subr.mxu0 0.0
    %203 = vmatpush1.msra.mxu0 0.0
    %204 = vmatprep.subr.mxu0 0.0
    %205 = vmatpush1.msra.mxu0 0.0
    %206 = vmatprep.subr.mxu0 0.0
    %207 = vmatpush1.msra.mxu0 0.0
    %208 = vmatprep.subr.mxu0 0.0
    %209 = vmatpush1.msra.mxu0 0.0
    %210 = vmatprep.subr.mxu0 0.0
    %211 = vmatpush1.msra.mxu0 0.0
    %212 = vmatprep.subr.mxu0 0.0
    %213 = vmatpush1.msra.mxu0 0.0
    %214 = vmatprep.subr.mxu0 0.0
    %215 = vmatpush1.msra.mxu0 %v182
    %216 = vmatprep.subr.mxu0 0.0
    %217 = vmatpush2.msra.mxu0 0.0
    %218 = vmatprep.subr.mxu0 0.0
    %219 = vmatpush2.msra.mxu0 0.0
    %220 = vmatprep.subr.mxu0 0.0
    %221 = vmatpush2.msra.mxu0 0.0
    %222 = vmatprep.subr.mxu0 0.0
    %223 = vmatpush2.msra.mxu0 0.0
    %224 = vmatprep.subr.mxu0 0.0
    %225 = vmatpush2.msra.mxu0 0.0
    %226 = vmatprep.subr.mxu0 0.0
    %227 = vmatpush2.msra.mxu0 0.0
    %228 = vmatprep.subr.mxu0 0.0
    %229 = vmatpush2.msra.mxu0 0.0
    %230 = vmatprep.subr.mxu0 0.0
    %231 = vmatpush2.msra.mxu0 0.0
    %232 = vmatprep.subr.mxu0 0.0
    %233 = vmatpush2.msra.mxu0 0.0
    %234 = vmatprep.subr.mxu0 0.0
    %235 = vmatpush2.msra.mxu0 0.0
    %236 = vmatprep.subr.mxu0 0.0
    %237 = vmatpush2.msra.mxu0 0.0
    %238 = vmatprep.subr.mxu0 0.0
    %239 = vmatpush2.msra.mxu0 0.0
    %240 = vmatprep.subr.mxu0 0.0
    %241 = vmatpush2.msra.mxu0 0.0
    %242 = vmatprep.subr.mxu0 0.0
    %243 = vmatpush2.msra.mxu0 0.0
    %244 = vmatprep.subr.mxu0 0.0
    %245 = vmatpush2.msra.mxu0 0.0
    %246 = vmatprep.subr.mxu0 0.0
    %247 = vmatpush2.msra.mxu0 0.0
    %248 = vmatprep.mubr.f32.mxu0 0.0
    %249 = vmatmul.mubr.f32.gmra.mxu0 %v89
    %v250 = vpop.f32.mrf.mxu0
    %v251 = vadd.f32 %v179, %v250
    %v252 = vpop.f32.mrf.mxu0
    %253 = vmatprep.mubr.f32.mxu0 0.0
    %254 = vmatmul.mubr.f32.gmra.mxu0 %v92
    %v255 = vpop.f32.mrf.mxu0
    %v256 = vadd.f32 %v179, %v255
    %v257 = vpop.f32.mrf.mxu0
    %258 = vdwg.mxu0
    %v259 = vld [vmem:[%s3] sm:$0xf]
    %v260 = vld [vmem:[%s9] sm:$0x1]
    %v262 = vlaneseq
    %v263 = vshrl.u32 %v262, 7
    %v264 = vsub.s32 0, %v263
    %v265 = vrot.slane %v260, %v264
    %v268 = vsel %vm94, %v259, 0
    %270 = vmatprep.subr.mxu0 0.0
    %271 = vmatpush1.msra.mxu0 0.0
    %272 = vmatprep.subr.mxu0 0.0
    %273 = vmatpush1.msra.mxu0 0.0
    %274 = vmatprep.subr.mxu0 0.0
    %275 = vmatpush1.msra.mxu0 0.0
    %276 = vmatprep.subr.mxu0 0.0
    %277 = vmatpush1.msra.mxu0 0.0
    %278 = vmatprep.subr.mxu0 0.0
    %279 = vmatpush1.msra.mxu0 0.0
    %280 = vmatprep.subr.mxu0 0.0
    %281 = vmatpush1.msra.mxu0 0.0
    %282 = vmatprep.subr.mxu0 0.0
    %283 = vmatpush1.msra.mxu0 0.0
    %284 = vmatprep.subr.mxu0 0.0
    %285 = vmatpush1.msra.mxu0 0.0
    %286 = vmatprep.subr.mxu0 0.0
    %287 = vmatpush1.msra.mxu0 0.0
    %288 = vmatprep.subr.mxu0 0.0
    %289 = vmatpush1.msra.mxu0 0.0
    %290 = vmatprep.subr.mxu0 0.0
    %291 = vmatpush1.msra.mxu0 0.0
    %292 = vmatprep.subr.mxu0 0.0
    %293 = vmatpush1.msra.mxu0 0.0
    %294 = vmatprep.subr.mxu0 0.0
    %295 = vmatpush1.msra.mxu0 0.0
    %296 = vmatprep.subr.mxu0 0.0
    %297 = vmatpush1.msra.mxu0 0.0
    %298 = vmatprep.subr.mxu0 0.0
    %299 = vmatpush1.msra.mxu0 0.0
    %300 = vmatprep.subr.mxu0 0.0
    %301 = vmatpush1.msra.mxu0 %v268
    %302 = vmatprep.subr.mxu0 0.0
    %303 = vmatpush2.msra.mxu0 0.0
    %304 = vmatprep.subr.mxu0 0.0
    %305 = vmatpush2.msra.mxu0 0.0
    %306 = vmatprep.subr.mxu0 0.0
    %307 = vmatpush2.msra.mxu0 0.0
    %308 = vmatprep.subr.mxu0 0.0
    %309 = vmatpush2.msra.mxu0 0.0
    %310 = vmatprep.subr.mxu0 0.0
    %311 = vmatpush2.msra.mxu0 0.0
    %312 = vmatprep.subr.mxu0 0.0
    %313 = vmatpush2.msra.mxu0 0.0
    %314 = vmatprep.subr.mxu0 0.0
    %315 = vmatpush2.msra.mxu0 0.0
    %316 = vmatprep.subr.mxu0 0.0
    %317 = vmatpush2.msra.mxu0 0.0
    %318 = vmatprep.subr.mxu0 0.0
    %319 = vmatpush2.msra.mxu0 0.0
    %320 = vmatprep.subr.mxu0 0.0
    %321 = vmatpush2.msra.mxu0 0.0
    %322 = vmatprep.subr.mxu0 0.0
    %323 = vmatpush2.msra.mxu0 0.0
    %324 = vmatprep.subr.mxu0 0.0
    %325 = vmatpush2.msra.mxu0 0.0
    %326 = vmatprep.subr.mxu0 0.0
    %327 = vmatpush2.msra.mxu0 0.0
    %328 = vmatprep.subr.mxu0 0.0
    %329 = vmatpush2.msra.mxu0 0.0
    %330 = vmatprep.subr.mxu0 0.0
    %331 = vmatpush2.msra.mxu0 0.0
    %332 = vmatprep.subr.mxu0 0.0
    %333 = vmatpush2.msra.mxu0 0.0
    %334 = vmatprep.mubr.f32.mxu0 0.0
    %335 = vmatmul.mubr.f32.gmra.mxu0 %v89
    %v336 = vpop.f32.mrf.mxu0
    %v337 = vadd.f32 %v265, %v336
    %v338 = vpop.f32.mrf.mxu0
    %339 = vmatprep.mubr.f32.mxu0 0.0
    %340 = vmatmul.mubr.f32.gmra.mxu0 %v92
    %v341 = vpop.f32.mrf.mxu0
    %v342 = vadd.f32 %v265, %v341
    %v343 = vpop.f32.mrf.mxu0
    %344 = vdwg.mxu0
    %v345 = vld [vmem:[%s11] sm:$0xf]
    %v346 = vld [vmem:[%s17] sm:$0x1]
    %v348 = vlaneseq
    %v349 = vshrl.u32 %v348, 7
    %v350 = vsub.s32 0, %v349
    %v351 = vrot.slane %v346, %v350
    %v354 = vsel %vm94, %v345, 0
    %356 = vmatprep.subr.mxu0 0.0
    %357 = vmatpush1.msra.mxu0 0.0
    %358 = vmatprep.subr.mxu0 0.0
    %359 = vmatpush1.msra.mxu0 0.0
    %360 = vmatprep.subr.mxu0 0.0
    %361 = vmatpush1.msra.mxu0 0.0
    %362 = vmatprep.subr.mxu0 0.0
    %363 = vmatpush1.msra.mxu0 0.0
    %364 = vmatprep.subr.mxu0 0.0
    %365 = vmatpush1.msra.mxu0 0.0
    %366 = vmatprep.subr.mxu0 0.0
    %367 = vmatpush1.msra.mxu0 0.0
    %368 = vmatprep.subr.mxu0 0.0
    %369 = vmatpush1.msra.mxu0 0.0
    %370 = vmatprep.subr.mxu0 0.0
    %371 = vmatpush1.msra.mxu0 0.0
    %372 = vmatprep.subr.mxu0 0.0
    %373 = vmatpush1.msra.mxu0 0.0
    %374 = vmatprep.subr.mxu0 0.0
    %375 = vmatpush1.msra.mxu0 0.0
    %376 = vmatprep.subr.mxu0 0.0
    %377 = vmatpush1.msra.mxu0 0.0
    %378 = vmatprep.subr.mxu0 0.0
    %379 = vmatpush1.msra.mxu0 0.0
    %380 = vmatprep.subr.mxu0 0.0
    %381 = vmatpush1.msra.mxu0 0.0
    %382 = vmatprep.subr.mxu0 0.0
    %383 = vmatpush1.msra.mxu0 0.0
    %384 = vmatprep.subr.mxu0 0.0
    %385 = vmatpush1.msra.mxu0 0.0
    %386 = vmatprep.subr.mxu0 0.0
    %387 = vmatpush1.msra.mxu0 %v354
    %388 = vmatprep.subr.mxu0 0.0
    %389 = vmatpush2.msra.mxu0 0.0
    %390 = vmatprep.subr.mxu0 0.0
    %391 = vmatpush2.msra.mxu0 0.0
    %392 = vmatprep.subr.mxu0 0.0
    %393 = vmatpush2.msra.mxu0 0.0
    %394 = vmatprep.subr.mxu0 0.0
    %395 = vmatpush2.msra.mxu0 0.0
    %396 = vmatprep.subr.mxu0 0.0
    %397 = vmatpush2.msra.mxu0 0.0
    %398 = vmatprep.subr.mxu0 0.0
    %399 = vmatpush2.msra.mxu0 0.0
    %400 = vmatprep.subr.mxu0 0.0
    %401 = vmatpush2.msra.mxu0 0.0
    %402 = vmatprep.subr.mxu0 0.0
    %403 = vmatpush2.msra.mxu0 0.0
    %404 = vmatprep.subr.mxu0 0.0
    %405 = vmatpush2.msra.mxu0 0.0
    %406 = vmatprep.subr.mxu0 0.0
    %407 = vmatpush2.msra.mxu0 0.0
    %408 = vmatprep.subr.mxu0 0.0
    %409 = vmatpush2.msra.mxu0 0.0
    %410 = vmatprep.subr.mxu0 0.0
    %411 = vmatpush2.msra.mxu0 0.0
    %412 = vmatprep.subr.mxu0 0.0
    %413 = vmatpush2.msra.mxu0 0.0
    %414 = vmatprep.subr.mxu0 0.0
    %415 = vmatpush2.msra.mxu0 0.0
    %416 = vmatprep.subr.mxu0 0.0
    %417 = vmatpush2.msra.mxu0 0.0
    %418 = vmatprep.subr.mxu0 0.0
    %419 = vmatpush2.msra.mxu0 0.0
    %420 = vmatprep.mubr.f32.mxu0 0.0
    %421 = vmatmul.mubr.f32.gmra.mxu0 %v89
    %v422 = vpop.f32.mrf.mxu0
    %v423 = vadd.f32 %v351, %v422
    %v424 = vpop.f32.mrf.mxu0
    %425 = vmatprep.mubr.f32.mxu0 0.0
    %426 = vmatmul.mubr.f32.gmra.mxu0 %v92
    %v427 = vpop.f32.mrf.mxu0
    %v428 = vadd.f32 %v351, %v427
    %v429 = vpop.f32.mrf.mxu0
    %430 = vdwg.mxu0
    %v431 = vld [vmem:[%s12] sm:$0xf]
    %v432 = vld [vmem:[%s18] sm:$0x1]
    %v434 = vlaneseq
    %v435 = vshrl.u32 %v434, 7
    %v436 = vsub.s32 0, %v435
    %v437 = vrot.slane %v432, %v436
    %v440 = vsel %vm94, %v431, 0
    %442 = vmatprep.subr.mxu0 0.0
    %443 = vmatpush1.msra.mxu0 0.0
    %444 = vmatprep.subr.mxu0 0.0
    %445 = vmatpush1.msra.mxu0 0.0
    %446 = vmatprep.subr.mxu0 0.0
    %447 = vmatpush1.msra.mxu0 0.0
    %448 = vmatprep.subr.mxu0 0.0
    %449 = vmatpush1.msra.mxu0 0.0
    %450 = vmatprep.subr.mxu0 0.0
    %451 = vmatpush1.msra.mxu0 0.0
    %452 = vmatprep.subr.mxu0 0.0
    %453 = vmatpush1.msra.mxu0 0.0
    %454 = vmatprep.subr.mxu0 0.0
    %455 = vmatpush1.msra.mxu0 0.0
    %456 = vmatprep.subr.mxu0 0.0
    %457 = vmatpush1.msra.mxu0 0.0
    %458 = vmatprep.subr.mxu0 0.0
    %459 = vmatpush1.msra.mxu0 0.0
    %460 = vmatprep.subr.mxu0 0.0
    %461 = vmatpush1.msra.mxu0 0.0
    %462 = vmatprep.subr.mxu0 0.0
    %463 = vmatpush1.msra.mxu0 0.0
    %464 = vmatprep.subr.mxu0 0.0
    %465 = vmatpush1.msra.mxu0 0.0
    %466 = vmatprep.subr.mxu0 0.0
    %467 = vmatpush1.msra.mxu0 0.0
    %468 = vmatprep.subr.mxu0 0.0
    %469 = vmatpush1.msra.mxu0 0.0
    %470 = vmatprep.subr.mxu0 0.0
    %471 = vmatpush1.msra.mxu0 0.0
    %472 = vmatprep.subr.mxu0 0.0
    %473 = vmatpush1.msra.mxu0 %v440
    %474 = vmatprep.subr.mxu0 0.0
    %475 = vmatpush2.msra.mxu0 0.0
    %476 = vmatprep.subr.mxu0 0.0
    %477 = vmatpush2.msra.mxu0 0.0
    %478 = vmatprep.subr.mxu0 0.0
    %479 = vmatpush2.msra.mxu0 0.0
    %480 = vmatprep.subr.mxu0 0.0
    %481 = vmatpush2.msra.mxu0 0.0
    %482 = vmatprep.subr.mxu0 0.0
    %483 = vmatpush2.msra.mxu0 0.0
    %484 = vmatprep.subr.mxu0 0.0
    %485 = vmatpush2.msra.mxu0 0.0
    %486 = vmatprep.subr.mxu0 0.0
    %487 = vmatpush2.msra.mxu0 0.0
    %488 = vmatprep.subr.mxu0 0.0
    %489 = vmatpush2.msra.mxu0 0.0
    %490 = vmatprep.subr.mxu0 0.0
    %491 = vmatpush2.msra.mxu0 0.0
    %492 = vmatprep.subr.mxu0 0.0
    %493 = vmatpush2.msra.mxu0 0.0
    %494 = vmatprep.subr.mxu0 0.0
    %495 = vmatpush2.msra.mxu0 0.0
    %496 = vmatprep.subr.mxu0 0.0
    %497 = vmatpush2.msra.mxu0 0.0
    %498 = vmatprep.subr.mxu0 0.0
    %499 = vmatpush2.msra.mxu0 0.0
    %500 = vmatprep.subr.mxu0 0.0
    %501 = vmatpush2.msra.mxu0 0.0
    %502 = vmatprep.subr.mxu0 0.0
    %503 = vmatpush2.msra.mxu0 0.0
    %504 = vmatprep.subr.mxu0 0.0
    %505 = vmatpush2.msra.mxu0 0.0
    %506 = vmatprep.mubr.f32.mxu0 0.0
    %507 = vmatmul.mubr.f32.gmra.mxu0 %v89
    %v508 = vpop.f32.mrf.mxu0
    %v509 = vadd.f32 %v437, %v508
    %v510 = vpop.f32.mrf.mxu0
    %511 = vmatprep.mubr.f32.mxu0 0.0
    %512 = vmatmul.mubr.f32.gmra.mxu0 %v92
    %v513 = vpop.f32.mrf.mxu0
    %v514 = vadd.f32 %v437, %v513
    %v515 = vpop.f32.mrf.mxu0
    %516 = vdwg.mxu0
    %v517 = vld [vmem:[%s13] sm:$0xf]
    %v518 = vld [vmem:[%s19] sm:$0x1]
    %v520 = vlaneseq
    %v521 = vshrl.u32 %v520, 7
    %v522 = vsub.s32 0, %v521
    %v523 = vrot.slane %v518, %v522
    %v526 = vsel %vm94, %v517, 0
    %528 = vmatprep.subr.mxu0 0.0
    %529 = vmatpush1.msra.mxu0 0.0
    %530 = vmatprep.subr.mxu0 0.0
    %531 = vmatpush1.msra.mxu0 0.0
    %532 = vmatprep.subr.mxu0 0.0
    %533 = vmatpush1.msra.mxu0 0.0
    %534 = vmatprep.subr.mxu0 0.0
    %535 = vmatpush1.msra.mxu0 0.0
    %536 = vmatprep.subr.mxu0 0.0
    %537 = vmatpush1.msra.mxu0 0.0
    %538 = vmatprep.subr.mxu0 0.0
    %539 = vmatpush1.msra.mxu0 0.0
    %540 = vmatprep.subr.mxu0 0.0
    %541 = vmatpush1.msra.mxu0 0.0
    %542 = vmatprep.subr.mxu0 0.0
    %543 = vmatpush1.msra.mxu0 0.0
    %544 = vmatprep.subr.mxu0 0.0
    %545 = vmatpush1.msra.mxu0 0.0
    %546 = vmatprep.subr.mxu0 0.0
    %547 = vmatpush1.msra.mxu0 0.0
    %548 = vmatprep.subr.mxu0 0.0
    %549 = vmatpush1.msra.mxu0 0.0
    %550 = vmatprep.subr.mxu0 0.0
    %551 = vmatpush1.msra.mxu0 0.0
    %552 = vmatprep.subr.mxu0 0.0
    %553 = vmatpush1.msra.mxu0 0.0
    %554 = vmatprep.subr.mxu0 0.0
    %555 = vmatpush1.msra.mxu0 0.0
    %556 = vmatprep.subr.mxu0 0.0
    %557 = vmatpush1.msra.mxu0 0.0
    %558 = vmatprep.subr.mxu0 0.0
    %559 = vmatpush1.msra.mxu0 %v526
    %560 = vmatprep.subr.mxu0 0.0
    %561 = vmatpush2.msra.mxu0 0.0
    %562 = vmatprep.subr.mxu0 0.0
    %563 = vmatpush2.msra.mxu0 0.0
    %564 = vmatprep.subr.mxu0 0.0
    %565 = vmatpush2.msra.mxu0 0.0
    %566 = vmatprep.subr.mxu0 0.0
    %567 = vmatpush2.msra.mxu0 0.0
    %568 = vmatprep.subr.mxu0 0.0
    %569 = vmatpush2.msra.mxu0 0.0
    %570 = vmatprep.subr.mxu0 0.0
    %571 = vmatpush2.msra.mxu0 0.0
    %572 = vmatprep.subr.mxu0 0.0
    %573 = vmatpush2.msra.mxu0 0.0
    %574 = vmatprep.subr.mxu0 0.0
    %575 = vmatpush2.msra.mxu0 0.0
    %576 = vmatprep.subr.mxu0 0.0
    %577 = vmatpush2.msra.mxu0 0.0
    %578 = vmatprep.subr.mxu0 0.0
    %579 = vmatpush2.msra.mxu0 0.0
    %580 = vmatprep.subr.mxu0 0.0
    %581 = vmatpush2.msra.mxu0 0.0
    %582 = vmatprep.subr.mxu0 0.0
    %583 = vmatpush2.msra.mxu0 0.0
    %584 = vmatprep.subr.mxu0 0.0
    %585 = vmatpush2.msra.mxu0 0.0
    %586 = vmatprep.subr.mxu0 0.0
    %587 = vmatpush2.msra.mxu0 0.0
    %588 = vmatprep.subr.mxu0 0.0
    %589 = vmatpush2.msra.mxu0 0.0
    %590 = vmatprep.subr.mxu0 0.0
    %591 = vmatpush2.msra.mxu0 0.0
    %592 = vmatprep.mubr.f32.mxu0 0.0
    %593 = vmatmul.mubr.f32.gmra.mxu0 %v89
    %v594 = vpop.f32.mrf.mxu0
    %v595 = vadd.f32 %v523, %v594
    %v596 = vpop.f32.mrf.mxu0
    %597 = vmatprep.mubr.f32.mxu0 0.0
    %598 = vmatmul.mubr.f32.gmra.mxu0 %v92
    %v599 = vpop.f32.mrf.mxu0
    %v600 = vadd.f32 %v523, %v599
    %v601 = vpop.f32.mrf.mxu0
    %602 = vdwg.mxu0
    %v603 = vld [vmem:[%s4] sm:$0xff]
    %v604 = vld [vmem:[%s4 + $0x8] sm:$0xff]
    %v605 = vld [vmem:[%s4 + $0x10] sm:$0xff]
    %v606 = vld [vmem:[%s4 + $0x18] sm:$0xff]
    %v607 = vld [vmem:[%s5] sm:$0xff]
    %v608 = vld [vmem:[%s5 + $0x8] sm:$0xff]
    %v609 = vld [vmem:[%s5 + $0x10] sm:$0xff]
    %v610 = vld [vmem:[%s5 + $0x18] sm:$0xff]
    %v611 = vld [vmem:[%s6] sm:$0xff]
    %v612 = vld [vmem:[%s6 + $0x8] sm:$0xff]
    %v613 = vld [vmem:[%s6 + $0x10] sm:$0xff]
    %v614 = vld [vmem:[%s6 + $0x18] sm:$0xff]
    %v615 = vld [vmem:[%s14] sm:$0xff]
    %v616 = vld [vmem:[%s14 + $0x8] sm:$0xff]
    %v617 = vld [vmem:[%s14 + $0x10] sm:$0xff]
    %v618 = vld [vmem:[%s14 + $0x18] sm:$0xff]
    %v619 = vld [vmem:[%s15] sm:$0xff]
    %v620 = vld [vmem:[%s15 + $0x8] sm:$0xff]
    %v621 = vld [vmem:[%s15 + $0x10] sm:$0xff]
    %v622 = vld [vmem:[%s15 + $0x18] sm:$0xff]
    %v623 = vld [vmem:[%s16] sm:$0xff]
    %v624 = vld [vmem:[%s16 + $0x8] sm:$0xff]
    %v625 = vld [vmem:[%s16 + $0x10] sm:$0xff]
    %v626 = vld [vmem:[%s16 + $0x18] sm:$0xff]
    %v627 = vld [vmem:[%s10] sm:$0x1]
    %v628 = vld [vmem:[%s20] sm:$0x1]
    %vm629 = vcmask 261120
    %v631 = vsel %vm629, 0.0, 0
    %633 = vmatprep.subr.mxu0 0.0
    %634 = vmatpush1.msra.mxu0 0.0
    %635 = vmatprep.subr.mxu0 0.0
    %636 = vmatpush1.msra.mxu0 0.0
    %637 = vmatprep.subr.mxu0 0.0
    %638 = vmatpush1.msra.mxu0 0.0
    %639 = vmatprep.subr.mxu0 0.0
    %640 = vmatpush1.msra.mxu0 0.0
    %641 = vmatprep.subr.mxu0 0.0
    %642 = vmatpush1.msra.mxu0 0.0
    %643 = vmatprep.subr.mxu0 0.0
    %644 = vmatpush1.msra.mxu0 0.0
    %645 = vmatprep.subr.mxu0 0.0
    %646 = vmatpush1.msra.mxu0 0.0
    %647 = vmatprep.subr.mxu0 0.0
    %648 = vmatpush1.msra.mxu0 0.0
    %649 = vmatprep.subr.mxu0 0.0
    %650 = vmatpush1.msra.mxu0 0.0
    %651 = vmatprep.subr.mxu0 0.0
    %652 = vmatpush1.msra.mxu0 0.0
    %653 = vmatprep.subr.mxu0 0.0
    %654 = vmatpush1.msra.mxu0 0.0
    %655 = vmatprep.subr.mxu0 0.0
    %656 = vmatpush1.msra.mxu0 0.0
    %657 = vmatprep.subr.mxu0 0.0
    %658 = vmatpush1.msra.mxu0 %v606
    %659 = vmatprep.subr.mxu0 0.0
    %660 = vmatpush1.msra.mxu0 %v605
    %661 = vmatprep.subr.mxu0 0.0
    %662 = vmatpush1.msra.mxu0 %v604
    %663 = vmatprep.subr.mxu0 0.0
    %664 = vmatpush1.msra.mxu0 %v603
    %665 = vmatprep.subr.mxu0 0.0
    %666 = vmatpush2.msra.mxu0 0.0
    %667 = vmatprep.subr.mxu0 0.0
    %668 = vmatpush2.msra.mxu0 0.0
    %669 = vmatprep.subr.mxu0 0.0
    %670 = vmatpush2.msra.mxu0 0.0
    %671 = vmatprep.subr.mxu0 0.0
    %672 = vmatpush2.msra.mxu0 0.0
    %673 = vmatprep.subr.mxu0 0.0
    %674 = vmatpush2.msra.mxu0 0.0
    %675 = vmatprep.subr.mxu0 0.0
    %676 = vmatpush2.msra.mxu0 0.0
    %677 = vmatprep.subr.mxu0 0.0
    %678 = vmatpush2.msra.mxu0 0.0
    %679 = vmatprep.subr.mxu0 0.0
    %680 = vmatpush2.msra.mxu0 0.0
    %681 = vmatprep.subr.mxu0 0.0
    %682 = vmatpush2.msra.mxu0 0.0
    %683 = vmatprep.subr.mxu0 0.0
    %684 = vmatpush2.msra.mxu0 0.0
    %685 = vmatprep.subr.mxu0 0.0
    %686 = vmatpush2.msra.mxu0 0.0
    %687 = vmatprep.subr.mxu0 0.0
    %688 = vmatpush2.msra.mxu0 0.0
    %689 = vmatprep.subr.mxu0 0.0
    %690 = vmatpush2.msra.mxu0 0.0
    %691 = vmatprep.subr.mxu0 0.0
    %692 = vmatpush2.msra.mxu0 0.0
    %693 = vmatprep.subr.mxu0 0.0
    %694 = vmatpush2.msra.mxu0 0.0
    %695 = vmatprep.subr.mxu0 0.0
    %696 = vmatpush2.msra.mxu0 0.0
    %697 = vmatprep.mubr.f32.mxu0 0.0
    %698 = vmatmul.mubr.f32.gmra.mxu0 %v631
    %v699 = vpop.f32.mrf.mxu0
    %v700 = vadd.f32 0.0, %v699
    %v701 = vpop.f32.mrf.mxu0
    %702 = vdwg.mxu0
    %703 = vmatprep.subr.mxu0 0.0
    %704 = vmatpush1.msra.mxu0 0.0
    %705 = vmatprep.subr.mxu0 0.0
    %706 = vmatpush1.msra.mxu0 0.0
    %707 = vmatprep.subr.mxu0 0.0
    %708 = vmatpush1.msra.mxu0 0.0
    %709 = vmatprep.subr.mxu0 0.0
    %710 = vmatpush1.msra.mxu0 0.0
    %711 = vmatprep.subr.mxu0 0.0
    %712 = vmatpush1.msra.mxu0 0.0
    %713 = vmatprep.subr.mxu0 0.0
    %714 = vmatpush1.msra.mxu0 0.0
    %715 = vmatprep.subr.mxu0 0.0
    %716 = vmatpush1.msra.mxu0 0.0
    %717 = vmatprep.subr.mxu0 0.0
    %718 = vmatpush1.msra.mxu0 0.0
    %719 = vmatprep.subr.mxu0 0.0
    %720 = vmatpush1.msra.mxu0 0.0
    %721 = vmatprep.subr.mxu0 0.0
    %722 = vmatpush1.msra.mxu0 0.0
    %723 = vmatprep.subr.mxu0 0.0
    %724 = vmatpush1.msra.mxu0 0.0
    %725 = vmatprep.subr.mxu0 0.0
    %726 = vmatpush1.msra.mxu0 0.0
    %727 = vmatprep.subr.mxu0 0.0
    %728 = vmatpush1.msra.mxu0 %v610
    %729 = vmatprep.subr.mxu0 0.0
    %730 = vmatpush1.msra.mxu0 %v609
    %731 = vmatprep.subr.mxu0 0.0
    %732 = vmatpush1.msra.mxu0 %v608
    %733 = vmatprep.subr.mxu0 0.0
    %734 = vmatpush1.msra.mxu0 %v607
    %735 = vmatprep.subr.mxu0 0.0
    %736 = vmatpush2.msra.mxu0 0.0
    %737 = vmatprep.subr.mxu0 0.0
    %738 = vmatpush2.msra.mxu0 0.0
    %739 = vmatprep.subr.mxu0 0.0
    %740 = vmatpush2.msra.mxu0 0.0
    %741 = vmatprep.subr.mxu0 0.0
    %742 = vmatpush2.msra.mxu0 0.0
    %743 = vmatprep.subr.mxu0 0.0
    %744 = vmatpush2.msra.mxu0 0.0
    %745 = vmatprep.subr.mxu0 0.0
    %746 = vmatpush2.msra.mxu0 0.0
    %747 = vmatprep.subr.mxu0 0.0
    %748 = vmatpush2.msra.mxu0 0.0
    %749 = vmatprep.subr.mxu0 0.0
    %750 = vmatpush2.msra.mxu0 0.0
    %751 = vmatprep.subr.mxu0 0.0
    %752 = vmatpush2.msra.mxu0 0.0
    %753 = vmatprep.subr.mxu0 0.0
    %754 = vmatpush2.msra.mxu0 0.0
    %755 = vmatprep.subr.mxu0 0.0
    %756 = vmatpush2.msra.mxu0 0.0
    %757 = vmatprep.subr.mxu0 0.0
    %758 = vmatpush2.msra.mxu0 0.0
    %759 = vmatprep.subr.mxu0 0.0
    %760 = vmatpush2.msra.mxu0 0.0
    %761 = vmatprep.subr.mxu0 0.0
    %762 = vmatpush2.msra.mxu0 0.0
    %763 = vmatprep.subr.mxu0 0.0
    %764 = vmatpush2.msra.mxu0 0.0
    %765 = vmatprep.subr.mxu0 0.0
    %766 = vmatpush2.msra.mxu0 0.0
    %767 = vmatprep.mubr.f32.mxu0 0.0
    %768 = vmatmul.mubr.f32.gmra.mxu0 %v631
    %v769 = vpop.f32.mrf.mxu0
    %v770 = vadd.f32 0.0, %v769
    %v771 = vpop.f32.mrf.mxu0
    %772 = vdwg.mxu0
    %v774 = vlaneseq
    %v775 = vshrl.u32 %v774, 7
    %v776 = vsub.s32 0, %v775
    %v777 = vrot.slane %v627, %v776
    %779 = vmatprep.subr.mxu0 0.0
    %780 = vmatpush1.msra.mxu0 0.0
    %781 = vmatprep.subr.mxu0 0.0
    %782 = vmatpush1.msra.mxu0 0.0
    %783 = vmatprep.subr.mxu0 0.0
    %784 = vmatpush1.msra.mxu0 0.0
    %785 = vmatprep.subr.mxu0 0.0
    %786 = vmatpush1.msra.mxu0 0.0
    %787 = vmatprep.subr.mxu0 0.0
    %788 = vmatpush1.msra.mxu0 0.0
    %789 = vmatprep.subr.mxu0 0.0
    %790 = vmatpush1.msra.mxu0 0.0
    %791 = vmatprep.subr.mxu0 0.0
    %792 = vmatpush1.msra.mxu0 0.0
    %793 = vmatprep.subr.mxu0 0.0
    %794 = vmatpush1.msra.mxu0 0.0
    %795 = vmatprep.subr.mxu0 0.0
    %796 = vmatpush1.msra.mxu0 0.0
    %797 = vmatprep.subr.mxu0 0.0
    %798 = vmatpush1.msra.mxu0 0.0
    %799 = vmatprep.subr.mxu0 0.0
    %800 = vmatpush1.msra.mxu0 0.0
    %801 = vmatprep.subr.mxu0 0.0
    %802 = vmatpush1.msra.mxu0 0.0
    %803 = vmatprep.subr.mxu0 0.0
    %804 = vmatpush1.msra.mxu0 %v614
    %805 = vmatprep.subr.mxu0 0.0
    %806 = vmatpush1.msra.mxu0 %v613
    %807 = vmatprep.subr.mxu0 0.0
    %808 = vmatpush1.msra.mxu0 %v612
    %809 = vmatprep.subr.mxu0 0.0
    %810 = vmatpush1.msra.mxu0 %v611
    %811 = vmatprep.subr.mxu0 0.0
    %812 = vmatpush2.msra.mxu0 0.0
    %813 = vmatprep.subr.mxu0 0.0
    %814 = vmatpush2.msra.mxu0 0.0
    %815 = vmatprep.subr.mxu0 0.0
    %816 = vmatpush2.msra.mxu0 0.0
    %817 = vmatprep.subr.mxu0 0.0
    %818 = vmatpush2.msra.mxu0 0.0
    %819 = vmatprep.subr.mxu0 0.0
    %820 = vmatpush2.msra.mxu0 0.0
    %821 = vmatprep.subr.mxu0 0.0
    %822 = vmatpush2.msra.mxu0 0.0
    %823 = vmatprep.subr.mxu0 0.0
    %824 = vmatpush2.msra.mxu0 0.0
    %825 = vmatprep.subr.mxu0 0.0
    %826 = vmatpush2.msra.mxu0 0.0
    %827 = vmatprep.subr.mxu0 0.0
    %828 = vmatpush2.msra.mxu0 0.0
    %829 = vmatprep.subr.mxu0 0.0
    %830 = vmatpush2.msra.mxu0 0.0
    %831 = vmatprep.subr.mxu0 0.0
    %832 = vmatpush2.msra.mxu0 0.0
    %833 = vmatprep.subr.mxu0 0.0
    %834 = vmatpush2.msra.mxu0 0.0
    %835 = vmatprep.subr.mxu0 0.0
    %836 = vmatpush2.msra.mxu0 0.0
    %837 = vmatprep.subr.mxu0 0.0
    %838 = vmatpush2.msra.mxu0 0.0
    %839 = vmatprep.subr.mxu0 0.0
    %840 = vmatpush2.msra.mxu0 0.0
    %841 = vmatprep.subr.mxu0 0.0
    %842 = vmatpush2.msra.mxu0 0.0
    %843 = vmatprep.mubr.f32.mxu0 0.0
    %844 = vmatmul.mubr.f32.gmra.mxu0 %v631
    %v845 = vpop.f32.mrf.mxu0
    %v846 = vadd.f32 %v777, %v845
    %v847 = vpop.f32.mrf.mxu0
    %848 = vdwg.mxu0
    %v849 = vadd.f32 %v165, %v700
    %v850 = vxor.u32 %v849, 2147483648
    %v851 = vmul.f32 %v850, 1.442695
    %v852 = vpow.pop %v851
    %v853 = vadd.f32 %v852, 1.0
    %v854 = vrcp.pop %v853
    %v855 = vmul.f32 1.0, %v854
    %v856 = vadd.f32 %v251, %v770
    %v857 = vxor.u32 %v856, 2147483648
    %v858 = vmul.f32 %v857, 1.442695
    %v859 = vpow.pop %v858
    %v860 = vadd.f32 %v859, 1.0
    %v861 = vrcp.pop %v860
    %v862 = vmul.f32 1.0, %v861
    %v863 = vmul.f32 %v855, %v846
    %v864 = vadd.f32 %v337, %v863
    %v865 = vtanh.pop %v864
    %v866 = vsub.f32 1.0, %v862
    %v867 = vmul.f32 %v866, %v865
    %v868 = vmul.f32 %v862, 0.0
    %v869 = vadd.f32 %v867, %v868
    %v871 = vsel %vm629, %v869, 0
    %873 = vmatprep.subr.mxu0 0.0
    %874 = vmatpush1.msra.mxu0 0.0
    %875 = vmatprep.subr.mxu0 0.0
    %876 = vmatpush1.msra.mxu0 0.0
    %877 = vmatprep.subr.mxu0 0.0
    %878 = vmatpush1.msra.mxu0 0.0
    %879 = vmatprep.subr.mxu0 0.0
    %880 = vmatpush1.msra.mxu0 0.0
    %881 = vmatprep.subr.mxu0 0.0
    %882 = vmatpush1.msra.mxu0 0.0
    %883 = vmatprep.subr.mxu0 0.0
    %884 = vmatpush1.msra.mxu0 0.0
    %885 = vmatprep.subr.mxu0 0.0
    %886 = vmatpush1.msra.mxu0 0.0
    %887 = vmatprep.subr.mxu0 0.0
    %888 = vmatpush1.msra.mxu0 0.0
    %889 = vmatprep.subr.mxu0 0.0
    %890 = vmatpush1.msra.mxu0 0.0
    %891 = vmatprep.subr.mxu0 0.0
    %892 = vmatpush1.msra.mxu0 0.0
    %893 = vmatprep.subr.mxu0 0.0
    %894 = vmatpush1.msra.mxu0 0.0
    %895 = vmatprep.subr.mxu0 0.0
    %896 = vmatpush1.msra.mxu0 0.0
    %897 = vmatprep.subr.mxu0 0.0
    %898 = vmatpush1.msra.mxu0 %v606
    %899 = vmatprep.subr.mxu0 0.0
    %900 = vmatpush1.msra.mxu0 %v605
    %901 = vmatprep.subr.mxu0 0.0
    %902 = vmatpush1.msra.mxu0 %v604
    %903 = vmatprep.subr.mxu0 0.0
    %904 = vmatpush1.msra.mxu0 %v603
    %905 = vmatprep.subr.mxu0 0.0
    %906 = vmatpush2.msra.mxu0 0.0
    %907 = vmatprep.subr.mxu0 0.0
    %908 = vmatpush2.msra.mxu0 0.0
    %909 = vmatprep.subr.mxu0 0.0
    %910 = vmatpush2.msra.mxu0 0.0
    %911 = vmatprep.subr.mxu0 0.0
    %912 = vmatpush2.msra.mxu0 0.0
    %913 = vmatprep.subr.mxu0 0.0
    %914 = vmatpush2.msra.mxu0 0.0
    %915 = vmatprep.subr.mxu0 0.0
    %916 = vmatpush2.msra.mxu0 0.0
    %917 = vmatprep.subr.mxu0 0.0
    %918 = vmatpush2.msra.mxu0 0.0
    %919 = vmatprep.subr.mxu0 0.0
    %920 = vmatpush2.msra.mxu0 0.0
    %921 = vmatprep.subr.mxu0 0.0
    %922 = vmatpush2.msra.mxu0 0.0
    %923 = vmatprep.subr.mxu0 0.0
    %924 = vmatpush2.msra.mxu0 0.0
    %925 = vmatprep.subr.mxu0 0.0
    %926 = vmatpush2.msra.mxu0 0.0
    %927 = vmatprep.subr.mxu0 0.0
    %928 = vmatpush2.msra.mxu0 0.0
    %929 = vmatprep.subr.mxu0 0.0
    %930 = vmatpush2.msra.mxu0 0.0
    %931 = vmatprep.subr.mxu0 0.0
    %932 = vmatpush2.msra.mxu0 0.0
    %933 = vmatprep.subr.mxu0 0.0
    %934 = vmatpush2.msra.mxu0 0.0
    %935 = vmatprep.subr.mxu0 0.0
    %936 = vmatpush2.msra.mxu0 0.0
    %937 = vmatprep.mubr.f32.mxu0 0.0
    %938 = vmatmul.mubr.f32.gmra.mxu0 %v871
    %v939 = vpop.f32.mrf.mxu0
    %v940 = vadd.f32 0.0, %v939
    %v941 = vpop.f32.mrf.mxu0
    %942 = vdwg.mxu0
    %943 = vmatprep.subr.mxu0 0.0
    %944 = vmatpush1.msra.mxu0 0.0
    %945 = vmatprep.subr.mxu0 0.0
    %946 = vmatpush1.msra.mxu0 0.0
    %947 = vmatprep.subr.mxu0 0.0
    %948 = vmatpush1.msra.mxu0 0.0
    %949 = vmatprep.subr.mxu0 0.0
    %950 = vmatpush1.msra.mxu0 0.0
    %951 = vmatprep.subr.mxu0 0.0
    %952 = vmatpush1.msra.mxu0 0.0
    %953 = vmatprep.subr.mxu0 0.0
    %954 = vmatpush1.msra.mxu0 0.0
    %955 = vmatprep.subr.mxu0 0.0
    %956 = vmatpush1.msra.mxu0 0.0
    %957 = vmatprep.subr.mxu0 0.0
    %958 = vmatpush1.msra.mxu0 0.0
    %959 = vmatprep.subr.mxu0 0.0
    %960 = vmatpush1.msra.mxu0 0.0
    %961 = vmatprep.subr.mxu0 0.0
    %962 = vmatpush1.msra.mxu0 0.0
    %963 = vmatprep.subr.mxu0 0.0
    %964 = vmatpush1.msra.mxu0 0.0
    %965 = vmatprep.subr.mxu0 0.0
    %966 = vmatpush1.msra.mxu0 0.0
    %967 = vmatprep.subr.mxu0 0.0
    %968 = vmatpush1.msra.mxu0 %v610
    %969 = vmatprep.subr.mxu0 0.0
    %970 = vmatpush1.msra.mxu0 %v609
    %971 = vmatprep.subr.mxu0 0.0
    %972 = vmatpush1.msra.mxu0 %v608
    %973 = vmatprep.subr.mxu0 0.0
    %974 = vmatpush1.msra.mxu0 %v607
    %975 = vmatprep.subr.mxu0 0.0
    %976 = vmatpush2.msra.mxu0 0.0
    %977 = vmatprep.subr.mxu0 0.0
    %978 = vmatpush2.msra.mxu0 0.0
    %979 = vmatprep.subr.mxu0 0.0
    %980 = vmatpush2.msra.mxu0 0.0
    %981 = vmatprep.subr.mxu0 0.0
    %982 = vmatpush2.msra.mxu0 0.0
    %983 = vmatprep.subr.mxu0 0.0
    %984 = vmatpush2.msra.mxu0 0.0
    %985 = vmatprep.subr.mxu0 0.0
    %986 = vmatpush2.msra.mxu0 0.0
    %987 = vmatprep.subr.mxu0 0.0
    %988 = vmatpush2.msra.mxu0 0.0
    %989 = vmatprep.subr.mxu0 0.0
    %990 = vmatpush2.msra.mxu0 0.0
    %991 = vmatprep.subr.mxu0 0.0
    %992 = vmatpush2.msra.mxu0 0.0
    %993 = vmatprep.subr.mxu0 0.0
    %994 = vmatpush2.msra.mxu0 0.0
    %995 = vmatprep.subr.mxu0 0.0
    %996 = vmatpush2.msra.mxu0 0.0
    %997 = vmatprep.subr.mxu0 0.0
    %998 = vmatpush2.msra.mxu0 0.0
    %999 = vmatprep.subr.mxu0 0.0
    %1000 = vmatpush2.msra.mxu0 0.0
    %1001 = vmatprep.subr.mxu0 0.0
    %1002 = vmatpush2.msra.mxu0 0.0
    %1003 = vmatprep.subr.mxu0 0.0
    %1004 = vmatpush2.msra.mxu0 0.0
    %1005 = vmatprep.subr.mxu0 0.0
    %1006 = vmatpush2.msra.mxu0 0.0
    %1007 = vmatprep.mubr.f32.mxu0 0.0
    %1008 = vmatmul.mubr.f32.gmra.mxu0 %v871
    %v1009 = vpop.f32.mrf.mxu0
    %v1010 = vadd.f32 0.0, %v1009
    %v1011 = vpop.f32.mrf.mxu0
    %1012 = vdwg.mxu0
    %1013 = vmatprep.subr.mxu0 0.0
    %1014 = vmatpush1.msra.mxu0 0.0
    %1015 = vmatprep.subr.mxu0 0.0
    %1016 = vmatpush1.msra.mxu0 0.0
    %1017 = vmatprep.subr.mxu0 0.0
    %1018 = vmatpush1.msra.mxu0 0.0
    %1019 = vmatprep.subr.mxu0 0.0
    %1020 = vmatpush1.msra.mxu0 0.0
    %1021 = vmatprep.subr.mxu0 0.0
    %1022 = vmatpush1.msra.mxu0 0.0
    %1023 = vmatprep.subr.mxu0 0.0
    %1024 = vmatpush1.msra.mxu0 0.0
    %1025 = vmatprep.subr.mxu0 0.0
    %1026 = vmatpush1.msra.mxu0 0.0
    %1027 = vmatprep.subr.mxu0 0.0
    %1028 = vmatpush1.msra.mxu0 0.0
    %1029 = vmatprep.subr.mxu0 0.0
    %1030 = vmatpush1.msra.mxu0 0.0
    %1031 = vmatprep.subr.mxu0 0.0
    %1032 = vmatpush1.msra.mxu0 0.0
    %1033 = vmatprep.subr.mxu0 0.0
    %1034 = vmatpush1.msra.mxu0 0.0
    %1035 = vmatprep.subr.mxu0 0.0
    %1036 = vmatpush1.msra.mxu0 0.0
    %1037 = vmatprep.subr.mxu0 0.0
    %1038 = vmatpush1.msra.mxu0 %v614
    %1039 = vmatprep.subr.mxu0 0.0
    %1040 = vmatpush1.msra.mxu0 %v613
    %1041 = vmatprep.subr.mxu0 0.0
    %1042 = vmatpush1.msra.mxu0 %v612
    %1043 = vmatprep.subr.mxu0 0.0
    %1044 = vmatpush1.msra.mxu0 %v611
    %1045 = vmatprep.subr.mxu0 0.0
    %1046 = vmatpush2.msra.mxu0 0.0
    %1047 = vmatprep.subr.mxu0 0.0
    %1048 = vmatpush2.msra.mxu0 0.0
    %1049 = vmatprep.subr.mxu0 0.0
    %1050 = vmatpush2.msra.mxu0 0.0
    %1051 = vmatprep.subr.mxu0 0.0
    %1052 = vmatpush2.msra.mxu0 0.0
    %1053 = vmatprep.subr.mxu0 0.0
    %1054 = vmatpush2.msra.mxu0 0.0
    %1055 = vmatprep.subr.mxu0 0.0
    %1056 = vmatpush2.msra.mxu0 0.0
    %1057 = vmatprep.subr.mxu0 0.0
    %1058 = vmatpush2.msra.mxu0 0.0
    %1059 = vmatprep.subr.mxu0 0.0
    %1060 = vmatpush2.msra.mxu0 0.0
    %1061 = vmatprep.subr.mxu0 0.0
    %1062 = vmatpush2.msra.mxu0 0.0
    %1063 = vmatprep.subr.mxu0 0.0
    %1064 = vmatpush2.msra.mxu0 0.0
    %1065 = vmatprep.subr.mxu0 0.0
    %1066 = vmatpush2.msra.mxu0 0.0
    %1067 = vmatprep.subr.mxu0 0.0
    %1068 = vmatpush2.msra.mxu0 0.0
    %1069 = vmatprep.subr.mxu0 0.0
    %1070 = vmatpush2.msra.mxu0 0.0
    %1071 = vmatprep.subr.mxu0 0.0
    %1072 = vmatpush2.msra.mxu0 0.0
    %1073 = vmatprep.subr.mxu0 0.0
    %1074 = vmatpush2.msra.mxu0 0.0
    %1075 = vmatprep.subr.mxu0 0.0
    %1076 = vmatpush2.msra.mxu0 0.0
    %1077 = vmatprep.mubr.f32.mxu0 0.0
    %1078 = vmatmul.mubr.f32.gmra.mxu0 %v871
    %v1079 = vpop.f32.mrf.mxu0
    %v1080 = vadd.f32 %v777, %v1079
    %v1081 = vpop.f32.mrf.mxu0
    %1082 = vdwg.mxu0
    %v1084 = vrot.slane %v940, 6
    %v1086 = vadd.f32 %v165, %v1084
    %v1087 = vxor.u32 %v1086, 2147483648
    %v1088 = vmul.f32 %v1087, 1.442695
    %v1089 = vpow.pop %v1088
    %v1090 = vadd.f32 %v1089, 1.0
    %v1091 = vrcp.pop %v1090
    %v1092 = vmul.f32 1.0, %v1091
    %v1094 = vrot.slane %v1010, 6
    %v1096 = vadd.f32 %v251, %v1094
    %v1097 = vxor.u32 %v1096, 2147483648
    %v1098 = vmul.f32 %v1097, 1.442695
    %v1099 = vpow.pop %v1098
    %v1100 = vadd.f32 %v1099, 1.0
    %v1101 = vrcp.pop %v1100
    %v1102 = vmul.f32 1.0, %v1101
    %v1104 = vrot.slane %v1080, 6
    %v1106 = vmul.f32 %v1092, %v1104
    %v1107 = vadd.f32 %v337, %v1106
    %v1108 = vtanh.pop %v1107
    %v1109 = vsub.f32 1.0, %v1102
    %v1110 = vmul.f32 %v1109, %v1108
    %v1111 = vrot.slane %v869, 6
    %v1113 = vmul.f32 %v1102, %v1111
    %v1114 = vadd.f32 %v1110, %v1113
    %v1116 = vrot.slane %v1114, 2
    %v1117 = vsel %vm629, %v1116, 0
    %1119 = vmatprep.subr.mxu0 0.0
    %1120 = vmatpush1.msra.mxu0 0.0
    %1121 = vmatprep.subr.mxu0 0.0
    %1122 = vmatpush1.msra.mxu0 0.0
    %1123 = vmatprep.subr.mxu0 0.0
    %1124 = vmatpush1.msra.mxu0 0.0
    %1125 = vmatprep.subr.mxu0 0.0
    %1126 = vmatpush1.msra.mxu0 0.0
    %1127 = vmatprep.subr.mxu0 0.0
    %1128 = vmatpush1.msra.mxu0 0.0
    %1129 = vmatprep.subr.mxu0 0.0
    %1130 = vmatpush1.msra.mxu0 0.0
    %1131 = vmatprep.subr.mxu0 0.0
    %1132 = vmatpush1.msra.mxu0 0.0
    %1133 = vmatprep.subr.mxu0 0.0
    %1134 = vmatpush1.msra.mxu0 0.0
    %1135 = vmatprep.subr.mxu0 0.0
    %1136 = vmatpush1.msra.mxu0 0.0
    %1137 = vmatprep.subr.mxu0 0.0
    %1138 = vmatpush1.msra.mxu0 0.0
    %1139 = vmatprep.subr.mxu0 0.0
    %1140 = vmatpush1.msra.mxu0 0.0
    %1141 = vmatprep.subr.mxu0 0.0
    %1142 = vmatpush1.msra.mxu0 0.0
    %1143 = vmatprep.subr.mxu0 0.0
    %1144 = vmatpush1.msra.mxu0 %v606
    %1145 = vmatprep.subr.mxu0 0.0
    %1146 = vmatpush1.msra.mxu0 %v605
    %1147 = vmatprep.subr.mxu0 0.0
    %1148 = vmatpush1.msra.mxu0 %v604
    %1149 = vmatprep.subr.mxu0 0.0
    %1150 = vmatpush1.msra.mxu0 %v603
    %1151 = vmatprep.subr.mxu0 0.0
    %1152 = vmatpush2.msra.mxu0 0.0
    %1153 = vmatprep.subr.mxu0 0.0
    %1154 = vmatpush2.msra.mxu0 0.0
    %1155 = vmatprep.subr.mxu0 0.0
    %1156 = vmatpush2.msra.mxu0 0.0
    %1157 = vmatprep.subr.mxu0 0.0
    %1158 = vmatpush2.msra.mxu0 0.0
    %1159 = vmatprep.subr.mxu0 0.0
    %1160 = vmatpush2.msra.mxu0 0.0
    %1161 = vmatprep.subr.mxu0 0.0
    %1162 = vmatpush2.msra.mxu0 0.0
    %1163 = vmatprep.subr.mxu0 0.0
    %1164 = vmatpush2.msra.mxu0 0.0
    %1165 = vmatprep.subr.mxu0 0.0
    %1166 = vmatpush2.msra.mxu0 0.0
    %1167 = vmatprep.subr.mxu0 0.0
    %1168 = vmatpush2.msra.mxu0 0.0
    %1169 = vmatprep.subr.mxu0 0.0
    %1170 = vmatpush2.msra.mxu0 0.0
    %1171 = vmatprep.subr.mxu0 0.0
    %1172 = vmatpush2.msra.mxu0 0.0
    %1173 = vmatprep.subr.mxu0 0.0
    %1174 = vmatpush2.msra.mxu0 0.0
    %1175 = vmatprep.subr.mxu0 0.0
    %1176 = vmatpush2.msra.mxu0 0.0
    %1177 = vmatprep.subr.mxu0 0.0
    %1178 = vmatpush2.msra.mxu0 0.0
    %1179 = vmatprep.subr.mxu0 0.0
    %1180 = vmatpush2.msra.mxu0 0.0
    %1181 = vmatprep.subr.mxu0 0.0
    %1182 = vmatpush2.msra.mxu0 0.0
    %1183 = vmatprep.mubr.f32.mxu0 0.0
    %1184 = vmatmul.mubr.f32.gmra.mxu0 %v1117
    %v1185 = vpop.f32.mrf.mxu0
    %v1186 = vadd.f32 0.0, %v1185
    %v1187 = vpop.f32.mrf.mxu0
    %1188 = vdwg.mxu0
    %1189 = vmatprep.subr.mxu0 0.0
    %1190 = vmatpush1.msra.mxu0 0.0
    %1191 = vmatprep.subr.mxu0 0.0
    %1192 = vmatpush1.msra.mxu0 0.0
    %1193 = vmatprep.subr.mxu0 0.0
    %1194 = vmatpush1.msra.mxu0 0.0
    %1195 = vmatprep.subr.mxu0 0.0
    %1196 = vmatpush1.msra.mxu0 0.0
    %1197 = vmatprep.subr.mxu0 0.0
    %1198 = vmatpush1.msra.mxu0 0.0
    %1199 = vmatprep.subr.mxu0 0.0
    %1200 = vmatpush1.msra.mxu0 0.0
    %1201 = vmatprep.subr.mxu0 0.0
    %1202 = vmatpush1.msra.mxu0 0.0
    %1203 = vmatprep.subr.mxu0 0.0
    %1204 = vmatpush1.msra.mxu0 0.0
    %1205 = vmatprep.subr.mxu0 0.0
    %1206 = vmatpush1.msra.mxu0 0.0
    %1207 = vmatprep.subr.mxu0 0.0
    %1208 = vmatpush1.msra.mxu0 0.0
    %1209 = vmatprep.subr.mxu0 0.0
    %1210 = vmatpush1.msra.mxu0 0.0
    %1211 = vmatprep.subr.mxu0 0.0
    %1212 = vmatpush1.msra.mxu0 0.0
    %1213 = vmatprep.subr.mxu0 0.0
    %1214 = vmatpush1.msra.mxu0 %v610
    %1215 = vmatprep.subr.mxu0 0.0
    %1216 = vmatpush1.msra.mxu0 %v609
    %1217 = vmatprep.subr.mxu0 0.0
    %1218 = vmatpush1.msra.mxu0 %v608
    %1219 = vmatprep.subr.mxu0 0.0
    %1220 = vmatpush1.msra.mxu0 %v607
    %1221 = vmatprep.subr.mxu0 0.0
    %1222 = vmatpush2.msra.mxu0 0.0
    %1223 = vmatprep.subr.mxu0 0.0
    %1224 = vmatpush2.msra.mxu0 0.0
    %1225 = vmatprep.subr.mxu0 0.0
    %1226 = vmatpush2.msra.mxu0 0.0
    %1227 = vmatprep.subr.mxu0 0.0
    %1228 = vmatpush2.msra.mxu0 0.0
    %1229 = vmatprep.subr.mxu0 0.0
    %1230 = vmatpush2.msra.mxu0 0.0
    %1231 = vmatprep.subr.mxu0 0.0
    %1232 = vmatpush2.msra.mxu0 0.0
    %1233 = vmatprep.subr.mxu0 0.0
    %1234 = vmatpush2.msra.mxu0 0.0
    %1235 = vmatprep.subr.mxu0 0.0
    %1236 = vmatpush2.msra.mxu0 0.0
    %1237 = vmatprep.subr.mxu0 0.0
    %1238 = vmatpush2.msra.mxu0 0.0
    %1239 = vmatprep.subr.mxu0 0.0
    %1240 = vmatpush2.msra.mxu0 0.0
    %1241 = vmatprep.subr.mxu0 0.0
    %1242 = vmatpush2.msra.mxu0 0.0
    %1243 = vmatprep.subr.mxu0 0.0
    %1244 = vmatpush2.msra.mxu0 0.0
    %1245 = vmatprep.subr.mxu0 0.0
    %1246 = vmatpush2.msra.mxu0 0.0
    %1247 = vmatprep.subr.mxu0 0.0
    %1248 = vmatpush2.msra.mxu0 0.0
    %1249 = vmatprep.subr.mxu0 0.0
    %1250 = vmatpush2.msra.mxu0 0.0
    %1251 = vmatprep.subr.mxu0 0.0
    %1252 = vmatpush2.msra.mxu0 0.0
    %1253 = vmatprep.mubr.f32.mxu0 0.0
    %1254 = vmatmul.mubr.f32.gmra.mxu0 %v1117
    %v1255 = vpop.f32.mrf.mxu0
    %v1256 = vadd.f32 0.0, %v1255
    %v1257 = vpop.f32.mrf.mxu0
    %1258 = vdwg.mxu0
    %1259 = vmatprep.subr.mxu0 0.0
    %1260 = vmatpush1.msra.mxu0 0.0
    %1261 = vmatprep.subr.mxu0 0.0
    %1262 = vmatpush1.msra.mxu0 0.0
    %1263 = vmatprep.subr.mxu0 0.0
    %1264 = vmatpush1.msra.mxu0 0.0
    %1265 = vmatprep.subr.mxu0 0.0
    %1266 = vmatpush1.msra.mxu0 0.0
    %1267 = vmatprep.subr.mxu0 0.0
    %1268 = vmatpush1.msra.mxu0 0.0
    %1269 = vmatprep.subr.mxu0 0.0
    %1270 = vmatpush1.msra.mxu0 0.0
    %1271 = vmatprep.subr.mxu0 0.0
    %1272 = vmatpush1.msra.mxu0 0.0
    %1273 = vmatprep.subr.mxu0 0.0
    %1274 = vmatpush1.msra.mxu0 0.0
    %1275 = vmatprep.subr.mxu0 0.0
    %1276 = vmatpush1.msra.mxu0 0.0
    %1277 = vmatprep.subr.mxu0 0.0
    %1278 = vmatpush1.msra.mxu0 0.0
    %1279 = vmatprep.subr.mxu0 0.0
    %1280 = vmatpush1.msra.mxu0 0.0
    %1281 = vmatprep.subr.mxu0 0.0
    %1282 = vmatpush1.msra.mxu0 0.0
    %1283 = vmatprep.subr.mxu0 0.0
    %1284 = vmatpush1.msra.mxu0 %v614
    %1285 = vmatprep.subr.mxu0 0.0
    %1286 = vmatpush1.msra.mxu0 %v613
    %1287 = vmatprep.subr.mxu0 0.0
    %1288 = vmatpush1.msra.mxu0 %v612
    %1289 = vmatprep.subr.mxu0 0.0
    %1290 = vmatpush1.msra.mxu0 %v611
    %1291 = vmatprep.subr.mxu0 0.0
    %1292 = vmatpush2.msra.mxu0 0.0
    %1293 = vmatprep.subr.mxu0 0.0
    %1294 = vmatpush2.msra.mxu0 0.0
    %1295 = vmatprep.subr.mxu0 0.0
    %1296 = vmatpush2.msra.mxu0 0.0
    %1297 = vmatprep.subr.mxu0 0.0
    %1298 = vmatpush2.msra.mxu0 0.0
    %1299 = vmatprep.subr.mxu0 0.0
    %1300 = vmatpush2.msra.mxu0 0.0
    %1301 = vmatprep.subr.mxu0 0.0
    %1302 = vmatpush2.msra.mxu0 0.0
    %1303 = vmatprep.subr.mxu0 0.0
    %1304 = vmatpush2.msra.mxu0 0.0
    %1305 = vmatprep.subr.mxu0 0.0
    %1306 = vmatpush2.msra.mxu0 0.0
    %1307 = vmatprep.subr.mxu0 0.0
    %1308 = vmatpush2.msra.mxu0 0.0
    %1309 = vmatprep.subr.mxu0 0.0
    %1310 = vmatpush2.msra.mxu0 0.0
    %1311 = vmatprep.subr.mxu0 0.0
    %1312 = vmatpush2.msra.mxu0 0.0
    %1313 = vmatprep.subr.mxu0 0.0
    %1314 = vmatpush2.msra.mxu0 0.0
    %1315 = vmatprep.subr.mxu0 0.0
    %1316 = vmatpush2.msra.mxu0 0.0
    %1317 = vmatprep.subr.mxu0 0.0
    %1318 = vmatpush2.msra.mxu0 0.0
    %1319 = vmatprep.subr.mxu0 0.0
    %1320 = vmatpush2.msra.mxu0 0.0
    %1321 = vmatprep.subr.mxu0 0.0
    %1322 = vmatpush2.msra.mxu0 0.0
    %1323 = vmatprep.mubr.f32.mxu0 0.0
    %1324 = vmatmul.mubr.f32.gmra.mxu0 %v1117
    %v1325 = vpop.f32.mrf.mxu0
    %v1326 = vadd.f32 %v777, %v1325
    %v1327 = vpop.f32.mrf.mxu0
    %1328 = vdwg.mxu0
    %v1330 = vrot.slane %v1186, 4
    %v1332 = vadd.f32 %v165, %v1330
    %v1333 = vxor.u32 %v1332, 2147483648
    %v1334 = vmul.f32 %v1333, 1.442695
    %v1335 = vpow.pop %v1334
    %v1336 = vadd.f32 %v1335, 1.0
    %v1337 = vrcp.pop %v1336
    %v1338 = vmul.f32 1.0, %v1337
    %v1340 = vrot.slane %v1256, 4
    %v1342 = vadd.f32 %v251, %v1340
    %v1343 = vxor.u32 %v1342, 2147483648
    %v1344 = vmul.f32 %v1343, 1.442695
    %v1345 = vpow.pop %v1344
    %v1346 = vadd.f32 %v1345, 1.0
    %v1347 = vrcp.pop %v1346
    %v1348 = vmul.f32 1.0, %v1347
    %v1350 = vrot.slane %v1326, 4
    %v1352 = vmul.f32 %v1338, %v1350
    %v1353 = vadd.f32 %v337, %v1352
    %v1354 = vtanh.pop %v1353
    %v1355 = vsub.f32 1.0, %v1348
    %v1356 = vmul.f32 %v1355, %v1354
    %v1357 = vrot.slane %v1114, 6
    %v1359 = vmul.f32 %v1348, %v1357
    %v1360 = vadd.f32 %v1356, %v1359
    %v1362 = vrot.slane %v1360, 4
    %v1363 = vsel %vm629, %v1362, 0
    %1365 = vmatprep.subr.mxu0 0.0
    %1366 = vmatpush1.msra.mxu0 0.0
    %1367 = vmatprep.subr.mxu0 0.0
    %1368 = vmatpush1.msra.mxu0 0.0
    %1369 = vmatprep.subr.mxu0 0.0
    %1370 = vmatpush1.msra.mxu0 0.0
    %1371 = vmatprep.subr.mxu0 0.0
    %1372 = vmatpush1.msra.mxu0 0.0
    %1373 = vmatprep.subr.mxu0 0.0
    %1374 = vmatpush1.msra.mxu0 0.0
    %1375 = vmatprep.subr.mxu0 0.0
    %1376 = vmatpush1.msra.mxu0 0.0
    %1377 = vmatprep.subr.mxu0 0.0
    %1378 = vmatpush1.msra.mxu0 0.0
    %1379 = vmatprep.subr.mxu0 0.0
    %1380 = vmatpush1.msra.mxu0 0.0
    %1381 = vmatprep.subr.mxu0 0.0
    %1382 = vmatpush1.msra.mxu0 0.0
    %1383 = vmatprep.subr.mxu0 0.0
    %1384 = vmatpush1.msra.mxu0 0.0
    %1385 = vmatprep.subr.mxu0 0.0
    %1386 = vmatpush1.msra.mxu0 0.0
    %1387 = vmatprep.subr.mxu0 0.0
    %1388 = vmatpush1.msra.mxu0 0.0
    %1389 = vmatprep.subr.mxu0 0.0
    %1390 = vmatpush1.msra.mxu0 %v606
    %1391 = vmatprep.subr.mxu0 0.0
    %1392 = vmatpush1.msra.mxu0 %v605
    %1393 = vmatprep.subr.mxu0 0.0
    %1394 = vmatpush1.msra.mxu0 %v604
    %1395 = vmatprep.subr.mxu0 0.0
    %1396 = vmatpush1.msra.mxu0 %v603
    %1397 = vmatprep.subr.mxu0 0.0
    %1398 = vmatpush2.msra.mxu0 0.0
    %1399 = vmatprep.subr.mxu0 0.0
    %1400 = vmatpush2.msra.mxu0 0.0
    %1401 = vmatprep.subr.mxu0 0.0
    %1402 = vmatpush2.msra.mxu0 0.0
    %1403 = vmatprep.subr.mxu0 0.0
    %1404 = vmatpush2.msra.mxu0 0.0
    %1405 = vmatprep.subr.mxu0 0.0
    %1406 = vmatpush2.msra.mxu0 0.0
    %1407 = vmatprep.subr.mxu0 0.0
    %1408 = vmatpush2.msra.mxu0 0.0
    %1409 = vmatprep.subr.mxu0 0.0
    %1410 = vmatpush2.msra.mxu0 0.0
    %1411 = vmatprep.subr.mxu0 0.0
    %1412 = vmatpush2.msra.mxu0 0.0
    %1413 = vmatprep.subr.mxu0 0.0
    %1414 = vmatpush2.msra.mxu0 0.0
    %1415 = vmatprep.subr.mxu0 0.0
    %1416 = vmatpush2.msra.mxu0 0.0
    %1417 = vmatprep.subr.mxu0 0.0
    %1418 = vmatpush2.msra.mxu0 0.0
    %1419 = vmatprep.subr.mxu0 0.0
    %1420 = vmatpush2.msra.mxu0 0.0
    %1421 = vmatprep.subr.mxu0 0.0
    %1422 = vmatpush2.msra.mxu0 0.0
    %1423 = vmatprep.subr.mxu0 0.0
    %1424 = vmatpush2.msra.mxu0 0.0
    %1425 = vmatprep.subr.mxu0 0.0
    %1426 = vmatpush2.msra.mxu0 0.0
    %1427 = vmatprep.subr.mxu0 0.0
    %1428 = vmatpush2.msra.mxu0 0.0
    %1429 = vmatprep.mubr.f32.mxu0 0.0
    %1430 = vmatmul.mubr.f32.gmra.mxu0 %v1363
    %v1431 = vpop.f32.mrf.mxu0
    %v1432 = vadd.f32 0.0, %v1431
    %v1433 = vpop.f32.mrf.mxu0
    %1434 = vdwg.mxu0
    %1435 = vmatprep.subr.mxu0 0.0
    %1436 = vmatpush1.msra.mxu0 0.0
    %1437 = vmatprep.subr.mxu0 0.0
    %1438 = vmatpush1.msra.mxu0 0.0
    %1439 = vmatprep.subr.mxu0 0.0
    %1440 = vmatpush1.msra.mxu0 0.0
    %1441 = vmatprep.subr.mxu0 0.0
    %1442 = vmatpush1.msra.mxu0 0.0
    %1443 = vmatprep.subr.mxu0 0.0
    %1444 = vmatpush1.msra.mxu0 0.0
    %1445 = vmatprep.subr.mxu0 0.0
    %1446 = vmatpush1.msra.mxu0 0.0
    %1447 = vmatprep.subr.mxu0 0.0
    %1448 = vmatpush1.msra.mxu0 0.0
    %1449 = vmatprep.subr.mxu0 0.0
    %1450 = vmatpush1.msra.mxu0 0.0
    %1451 = vmatprep.subr.mxu0 0.0
    %1452 = vmatpush1.msra.mxu0 0.0
    %1453 = vmatprep.subr.mxu0 0.0
    %1454 = vmatpush1.msra.mxu0 0.0
    %1455 = vmatprep.subr.mxu0 0.0
    %1456 = vmatpush1.msra.mxu0 0.0
    %1457 = vmatprep.subr.mxu0 0.0
    %1458 = vmatpush1.msra.mxu0 0.0
    %1459 = vmatprep.subr.mxu0 0.0
    %1460 = vmatpush1.msra.mxu0 %v610
    %1461 = vmatprep.subr.mxu0 0.0
    %1462 = vmatpush1.msra.mxu0 %v609
    %1463 = vmatprep.subr.mxu0 0.0
    %1464 = vmatpush1.msra.mxu0 %v608
    %1465 = vmatprep.subr.mxu0 0.0
    %1466 = vmatpush1.msra.mxu0 %v607
    %1467 = vmatprep.subr.mxu0 0.0
    %1468 = vmatpush2.msra.mxu0 0.0
    %1469 = vmatprep.subr.mxu0 0.0
    %1470 = vmatpush2.msra.mxu0 0.0
    %1471 = vmatprep.subr.mxu0 0.0
    %1472 = vmatpush2.msra.mxu0 0.0
    %1473 = vmatprep.subr.mxu0 0.0
    %1474 = vmatpush2.msra.mxu0 0.0
    %1475 = vmatprep.subr.mxu0 0.0
    %1476 = vmatpush2.msra.mxu0 0.0
    %1477 = vmatprep.subr.mxu0 0.0
    %1478 = vmatpush2.msra.mxu0 0.0
    %1479 = vmatprep.subr.mxu0 0.0
    %1480 = vmatpush2.msra.mxu0 0.0
    %1481 = vmatprep.subr.mxu0 0.0
    %1482 = vmatpush2.msra.mxu0 0.0
    %1483 = vmatprep.subr.mxu0 0.0
    %1484 = vmatpush2.msra.mxu0 0.0
    %1485 = vmatprep.subr.mxu0 0.0
    %1486 = vmatpush2.msra.mxu0 0.0
    %1487 = vmatprep.subr.mxu0 0.0
    %1488 = vmatpush2.msra.mxu0 0.0
    %1489 = vmatprep.subr.mxu0 0.0
    %1490 = vmatpush2.msra.mxu0 0.0
    %1491 = vmatprep.subr.mxu0 0.0
    %1492 = vmatpush2.msra.mxu0 0.0
    %1493 = vmatprep.subr.mxu0 0.0
    %1494 = vmatpush2.msra.mxu0 0.0
    %1495 = vmatprep.subr.mxu0 0.0
    %1496 = vmatpush2.msra.mxu0 0.0
    %1497 = vmatprep.subr.mxu0 0.0
    %1498 = vmatpush2.msra.mxu0 0.0
    %1499 = vmatprep.mubr.f32.mxu0 0.0
    %1500 = vmatmul.mubr.f32.gmra.mxu0 %v1363
    %v1501 = vpop.f32.mrf.mxu0
    %v1502 = vadd.f32 0.0, %v1501
    %v1503 = vpop.f32.mrf.mxu0
    %1504 = vdwg.mxu0
    %1505 = vmatprep.subr.mxu0 0.0
    %1506 = vmatpush1.msra.mxu0 0.0
    %1507 = vmatprep.subr.mxu0 0.0
    %1508 = vmatpush1.msra.mxu0 0.0
    %1509 = vmatprep.subr.mxu0 0.0
    %1510 = vmatpush1.msra.mxu0 0.0
    %1511 = vmatprep.subr.mxu0 0.0
    %1512 = vmatpush1.msra.mxu0 0.0
    %1513 = vmatprep.subr.mxu0 0.0
    %1514 = vmatpush1.msra.mxu0 0.0
    %1515 = vmatprep.subr.mxu0 0.0
    %1516 = vmatpush1.msra.mxu0 0.0
    %1517 = vmatprep.subr.mxu0 0.0
    %1518 = vmatpush1.msra.mxu0 0.0
    %1519 = vmatprep.subr.mxu0 0.0
    %1520 = vmatpush1.msra.mxu0 0.0
    %1521 = vmatprep.subr.mxu0 0.0
    %1522 = vmatpush1.msra.mxu0 0.0
    %1523 = vmatprep.subr.mxu0 0.0
    %1524 = vmatpush1.msra.mxu0 0.0
    %1525 = vmatprep.subr.mxu0 0.0
    %1526 = vmatpush1.msra.mxu0 0.0
    %1527 = vmatprep.subr.mxu0 0.0
    %1528 = vmatpush1.msra.mxu0 0.0
    %1529 = vmatprep.subr.mxu0 0.0
    %1530 = vmatpush1.msra.mxu0 %v614
    %1531 = vmatprep.subr.mxu0 0.0
    %1532 = vmatpush1.msra.mxu0 %v613
    %1533 = vmatprep.subr.mxu0 0.0
    %1534 = vmatpush1.msra.mxu0 %v612
    %1535 = vmatprep.subr.mxu0 0.0
    %1536 = vmatpush1.msra.mxu0 %v611
    %1537 = vmatprep.subr.mxu0 0.0
    %1538 = vmatpush2.msra.mxu0 0.0
    %1539 = vmatprep.subr.mxu0 0.0
    %1540 = vmatpush2.msra.mxu0 0.0
    %1541 = vmatprep.subr.mxu0 0.0
    %1542 = vmatpush2.msra.mxu0 0.0
    %1543 = vmatprep.subr.mxu0 0.0
    %1544 = vmatpush2.msra.mxu0 0.0
    %1545 = vmatprep.subr.mxu0 0.0
    %1546 = vmatpush2.msra.mxu0 0.0
    %1547 = vmatprep.subr.mxu0 0.0
    %1548 = vmatpush2.msra.mxu0 0.0
    %1549 = vmatprep.subr.mxu0 0.0
    %1550 = vmatpush2.msra.mxu0 0.0
    %1551 = vmatprep.subr.mxu0 0.0
    %1552 = vmatpush2.msra.mxu0 0.0
    %1553 = vmatprep.subr.mxu0 0.0
    %1554 = vmatpush2.msra.mxu0 0.0
    %1555 = vmatprep.subr.mxu0 0.0
    %1556 = vmatpush2.msra.mxu0 0.0
    %1557 = vmatprep.subr.mxu0 0.0
    %1558 = vmatpush2.msra.mxu0 0.0
    %1559 = vmatprep.subr.mxu0 0.0
    %1560 = vmatpush2.msra.mxu0 0.0
    %1561 = vmatprep.subr.mxu0 0.0
    %1562 = vmatpush2.msra.mxu0 0.0
    %1563 = vmatprep.subr.mxu0 0.0
    %1564 = vmatpush2.msra.mxu0 0.0
    %1565 = vmatprep.subr.mxu0 0.0
    %1566 = vmatpush2.msra.mxu0 0.0
    %1567 = vmatprep.subr.mxu0 0.0
    %1568 = vmatpush2.msra.mxu0 0.0
    %1569 = vmatprep.mubr.f32.mxu0 0.0
    %1570 = vmatmul.mubr.f32.gmra.mxu0 %v1363
    %v1571 = vpop.f32.mrf.mxu0
    %v1572 = vadd.f32 %v777, %v1571
    %v1573 = vpop.f32.mrf.mxu0
    %1574 = vdwg.mxu0
    %v1576 = vrot.slane %v1432, 2
    %v1578 = vadd.f32 %v165, %v1576
    %v1579 = vxor.u32 %v1578, 2147483648
    %v1580 = vmul.f32 %v1579, 1.442695
    %v1581 = vpow.pop %v1580
    %v1582 = vadd.f32 %v1581, 1.0
    %v1583 = vrcp.pop %v1582
    %v1584 = vmul.f32 1.0, %v1583
    %v1586 = vrot.slane %v1502, 2
    %v1588 = vadd.f32 %v251, %v1586
    %v1589 = vxor.u32 %v1588, 2147483648
    %v1590 = vmul.f32 %v1589, 1.442695
    %v1591 = vpow.pop %v1590
    %v1592 = vadd.f32 %v1591, 1.0
    %v1593 = vrcp.pop %v1592
    %v1594 = vmul.f32 1.0, %v1593
    %v1596 = vrot.slane %v1572, 2
    %v1598 = vmul.f32 %v1584, %v1596
    %v1599 = vadd.f32 %v337, %v1598
    %v1600 = vtanh.pop %v1599
    %v1601 = vsub.f32 1.0, %v1594
    %v1602 = vmul.f32 %v1601, %v1600
    %v1603 = vrot.slane %v1360, 6
    %v1605 = vmul.f32 %v1594, %v1603
    %v1606 = vadd.f32 %v1602, %v1605
    %v1608 = vrot.slane %v1606, 6
    %v1609 = vsel %vm629, %v1608, 0
    %1611 = vmatprep.subr.mxu0 0.0
    %1612 = vmatpush1.msra.mxu0 0.0
    %1613 = vmatprep.subr.mxu0 0.0
    %1614 = vmatpush1.msra.mxu0 0.0
    %1615 = vmatprep.subr.mxu0 0.0
    %1616 = vmatpush1.msra.mxu0 0.0
    %1617 = vmatprep.subr.mxu0 0.0
    %1618 = vmatpush1.msra.mxu0 0.0
    %1619 = vmatprep.subr.mxu0 0.0
    %1620 = vmatpush1.msra.mxu0 0.0
    %1621 = vmatprep.subr.mxu0 0.0
    %1622 = vmatpush1.msra.mxu0 0.0
    %1623 = vmatprep.subr.mxu0 0.0
    %1624 = vmatpush1.msra.mxu0 0.0
    %1625 = vmatprep.subr.mxu0 0.0
    %1626 = vmatpush1.msra.mxu0 0.0
    %1627 = vmatprep.subr.mxu0 0.0
    %1628 = vmatpush1.msra.mxu0 0.0
    %1629 = vmatprep.subr.mxu0 0.0
    %1630 = vmatpush1.msra.mxu0 0.0
    %1631 = vmatprep.subr.mxu0 0.0
    %1632 = vmatpush1.msra.mxu0 0.0
    %1633 = vmatprep.subr.mxu0 0.0
    %1634 = vmatpush1.msra.mxu0 0.0
    %1635 = vmatprep.subr.mxu0 0.0
    %1636 = vmatpush1.msra.mxu0 %v606
    %1637 = vmatprep.subr.mxu0 0.0
    %1638 = vmatpush1.msra.mxu0 %v605
    %1639 = vmatprep.subr.mxu0 0.0
    %1640 = vmatpush1.msra.mxu0 %v604
    %1641 = vmatprep.subr.mxu0 0.0
    %1642 = vmatpush1.msra.mxu0 %v603
    %1643 = vmatprep.subr.mxu0 0.0
    %1644 = vmatpush2.msra.mxu0 0.0
    %1645 = vmatprep.subr.mxu0 0.0
    %1646 = vmatpush2.msra.mxu0 0.0
    %1647 = vmatprep.subr.mxu0 0.0
    %1648 = vmatpush2.msra.mxu0 0.0
    %1649 = vmatprep.subr.mxu0 0.0
    %1650 = vmatpush2.msra.mxu0 0.0
    %1651 = vmatprep.subr.mxu0 0.0
    %1652 = vmatpush2.msra.mxu0 0.0
    %1653 = vmatprep.subr.mxu0 0.0
    %1654 = vmatpush2.msra.mxu0 0.0
    %1655 = vmatprep.subr.mxu0 0.0
    %1656 = vmatpush2.msra.mxu0 0.0
    %1657 = vmatprep.subr.mxu0 0.0
    %1658 = vmatpush2.msra.mxu0 0.0
    %1659 = vmatprep.subr.mxu0 0.0
    %1660 = vmatpush2.msra.mxu0 0.0
    %1661 = vmatprep.subr.mxu0 0.0
    %1662 = vmatpush2.msra.mxu0 0.0
    %1663 = vmatprep.subr.mxu0 0.0
    %1664 = vmatpush2.msra.mxu0 0.0
    %1665 = vmatprep.subr.mxu0 0.0
    %1666 = vmatpush2.msra.mxu0 0.0
    %1667 = vmatprep.subr.mxu0 0.0
    %1668 = vmatpush2.msra.mxu0 0.0
    %1669 = vmatprep.subr.mxu0 0.0
    %1670 = vmatpush2.msra.mxu0 0.0
    %1671 = vmatprep.subr.mxu0 0.0
    %1672 = vmatpush2.msra.mxu0 0.0
    %1673 = vmatprep.subr.mxu0 0.0
    %1674 = vmatpush2.msra.mxu0 0.0
    %1675 = vmatprep.mubr.f32.mxu0 0.0
    %1676 = vmatmul.mubr.f32.gmra.mxu0 %v1609
    %v1677 = vpop.f32.mrf.mxu0
    %v1678 = vadd.f32 0.0, %v1677
    %v1679 = vpop.f32.mrf.mxu0
    %1680 = vdwg.mxu0
    %1681 = vmatprep.subr.mxu0 0.0
    %1682 = vmatpush1.msra.mxu0 0.0
    %1683 = vmatprep.subr.mxu0 0.0
    %1684 = vmatpush1.msra.mxu0 0.0
    %1685 = vmatprep.subr.mxu0 0.0
    %1686 = vmatpush1.msra.mxu0 0.0
    %1687 = vmatprep.subr.mxu0 0.0
    %1688 = vmatpush1.msra.mxu0 0.0
    %1689 = vmatprep.subr.mxu0 0.0
    %1690 = vmatpush1.msra.mxu0 0.0
    %1691 = vmatprep.subr.mxu0 0.0
    %1692 = vmatpush1.msra.mxu0 0.0
    %1693 = vmatprep.subr.mxu0 0.0
    %1694 = vmatpush1.msra.mxu0 0.0
    %1695 = vmatprep.subr.mxu0 0.0
    %1696 = vmatpush1.msra.mxu0 0.0
    %1697 = vmatprep.subr.mxu0 0.0
    %1698 = vmatpush1.msra.mxu0 0.0
    %1699 = vmatprep.subr.mxu0 0.0
    %1700 = vmatpush1.msra.mxu0 0.0
    %1701 = vmatprep.subr.mxu0 0.0
    %1702 = vmatpush1.msra.mxu0 0.0
    %1703 = vmatprep.subr.mxu0 0.0
    %1704 = vmatpush1.msra.mxu0 0.0
    %1705 = vmatprep.subr.mxu0 0.0
    %1706 = vmatpush1.msra.mxu0 %v610
    %1707 = vmatprep.subr.mxu0 0.0
    %1708 = vmatpush1.msra.mxu0 %v609
    %1709 = vmatprep.subr.mxu0 0.0
    %1710 = vmatpush1.msra.mxu0 %v608
    %1711 = vmatprep.subr.mxu0 0.0
    %1712 = vmatpush1.msra.mxu0 %v607
    %1713 = vmatprep.subr.mxu0 0.0
    %1714 = vmatpush2.msra.mxu0 0.0
    %1715 = vmatprep.subr.mxu0 0.0
    %1716 = vmatpush2.msra.mxu0 0.0
    %1717 = vmatprep.subr.mxu0 0.0
    %1718 = vmatpush2.msra.mxu0 0.0
    %1719 = vmatprep.subr.mxu0 0.0
    %1720 = vmatpush2.msra.mxu0 0.0
    %1721 = vmatprep.subr.mxu0 0.0
    %1722 = vmatpush2.msra.mxu0 0.0
    %1723 = vmatprep.subr.mxu0 0.0
    %1724 = vmatpush2.msra.mxu0 0.0
    %1725 = vmatprep.subr.mxu0 0.0
    %1726 = vmatpush2.msra.mxu0 0.0
    %1727 = vmatprep.subr.mxu0 0.0
    %1728 = vmatpush2.msra.mxu0 0.0
    %1729 = vmatprep.subr.mxu0 0.0
    %1730 = vmatpush2.msra.mxu0 0.0
    %1731 = vmatprep.subr.mxu0 0.0
    %1732 = vmatpush2.msra.mxu0 0.0
    %1733 = vmatprep.subr.mxu0 0.0
    %1734 = vmatpush2.msra.mxu0 0.0
    %1735 = vmatprep.subr.mxu0 0.0
    %1736 = vmatpush2.msra.mxu0 0.0
    %1737 = vmatprep.subr.mxu0 0.0
    %1738 = vmatpush2.msra.mxu0 0.0
    %1739 = vmatprep.subr.mxu0 0.0
    %1740 = vmatpush2.msra.mxu0 0.0
    %1741 = vmatprep.subr.mxu0 0.0
    %1742 = vmatpush2.msra.mxu0 0.0
    %1743 = vmatprep.subr.mxu0 0.0
    %1744 = vmatpush2.msra.mxu0 0.0
    %1745 = vmatprep.mubr.f32.mxu0 0.0
    %1746 = vmatmul.mubr.f32.gmra.mxu0 %v1609
    %v1747 = vpop.f32.mrf.mxu0
    %v1748 = vadd.f32 0.0, %v1747
    %v1749 = vpop.f32.mrf.mxu0
    %1750 = vdwg.mxu0
    %1751 = vmatprep.subr.mxu0 0.0
    %1752 = vmatpush1.msra.mxu0 0.0
    %1753 = vmatprep.subr.mxu0 0.0
    %1754 = vmatpush1.msra.mxu0 0.0
    %1755 = vmatprep.subr.mxu0 0.0
    %1756 = vmatpush1.msra.mxu0 0.0
    %1757 = vmatprep.subr.mxu0 0.0
    %1758 = vmatpush1.msra.mxu0 0.0
    %1759 = vmatprep.subr.mxu0 0.0
    %1760 = vmatpush1.msra.mxu0 0.0
    %1761 = vmatprep.subr.mxu0 0.0
    %1762 = vmatpush1.msra.mxu0 0.0
    %1763 = vmatprep.subr.mxu0 0.0
    %1764 = vmatpush1.msra.mxu0 0.0
    %1765 = vmatprep.subr.mxu0 0.0
    %1766 = vmatpush1.msra.mxu0 0.0
    %1767 = vmatprep.subr.mxu0 0.0
    %1768 = vmatpush1.msra.mxu0 0.0
    %1769 = vmatprep.subr.mxu0 0.0
    %1770 = vmatpush1.msra.mxu0 0.0
    %1771 = vmatprep.subr.mxu0 0.0
    %1772 = vmatpush1.msra.mxu0 0.0
    %1773 = vmatprep.subr.mxu0 0.0
    %1774 = vmatpush1.msra.mxu0 0.0
    %1775 = vmatprep.subr.mxu0 0.0
    %1776 = vmatpush1.msra.mxu0 %v614
    %1777 = vmatprep.subr.mxu0 0.0
    %1778 = vmatpush1.msra.mxu0 %v613
    %1779 = vmatprep.subr.mxu0 0.0
    %1780 = vmatpush1.msra.mxu0 %v612
    %1781 = vmatprep.subr.mxu0 0.0
    %1782 = vmatpush1.msra.mxu0 %v611
    %1783 = vmatprep.subr.mxu0 0.0
    %1784 = vmatpush2.msra.mxu0 0.0
    %1785 = vmatprep.subr.mxu0 0.0
    %1786 = vmatpush2.msra.mxu0 0.0
    %1787 = vmatprep.subr.mxu0 0.0
    %1788 = vmatpush2.msra.mxu0 0.0
    %1789 = vmatprep.subr.mxu0 0.0
    %1790 = vmatpush2.msra.mxu0 0.0
    %1791 = vmatprep.subr.mxu0 0.0
    %1792 = vmatpush2.msra.mxu0 0.0
    %1793 = vmatprep.subr.mxu0 0.0
    %1794 = vmatpush2.msra.mxu0 0.0
    %1795 = vmatprep.subr.mxu0 0.0
    %1796 = vmatpush2.msra.mxu0 0.0
    %1797 = vmatprep.subr.mxu0 0.0
    %1798 = vmatpush2.msra.mxu0 0.0
    %1799 = vmatprep.subr.mxu0 0.0
    %1800 = vmatpush2.msra.mxu0 0.0
    %1801 = vmatprep.subr.mxu0 0.0
    %1802 = vmatpush2.msra.mxu0 0.0
    %1803 = vmatprep.subr.mxu0 0.0
    %1804 = vmatpush2.msra.mxu0 0.0
    %1805 = vmatprep.subr.mxu0 0.0
    %1806 = vmatpush2.msra.mxu0 0.0
    %1807 = vmatprep.subr.mxu0 0.0
    %1808 = vmatpush2.msra.mxu0 0.0
    %1809 = vmatprep.subr.mxu0 0.0
    %1810 = vmatpush2.msra.mxu0 0.0
    %1811 = vmatprep.subr.mxu0 0.0
    %1812 = vmatpush2.msra.mxu0 0.0
    %1813 = vmatprep.subr.mxu0 0.0
    %1814 = vmatpush2.msra.mxu0 0.0
    %1815 = vmatprep.mubr.f32.mxu0 0.0
    %1816 = vmatmul.mubr.f32.gmra.mxu0 %v1609
    %v1817 = vpop.f32.mrf.mxu0
    %v1818 = vadd.f32 %v777, %v1817
    %v1819 = vpop.f32.mrf.mxu0
    %1820 = vdwg.mxu0
    %v1821 = vadd.f32 %v170, %v1678
    %v1822 = vxor.u32 %v1821, 2147483648
    %v1823 = vmul.f32 %v1822, 1.442695
    %v1824 = vpow.pop %v1823
    %v1825 = vadd.f32 %v1824, 1.0
    %v1826 = vrcp.pop %v1825
    %v1827 = vmul.f32 1.0, %v1826
    %v1828 = vadd.f32 %v256, %v1748
    %v1829 = vxor.u32 %v1828, 2147483648
    %v1830 = vmul.f32 %v1829, 1.442695
    %v1831 = vpow.pop %v1830
    %v1832 = vadd.f32 %v1831, 1.0
    %v1833 = vrcp.pop %v1832
    %v1834 = vmul.f32 1.0, %v1833
    %v1835 = vmul.f32 %v1827, %v1818
    %v1836 = vadd.f32 %v342, %v1835
    %v1837 = vtanh.pop %v1836
    %v1838 = vsub.f32 1.0, %v1834
    %v1839 = vmul.f32 %v1838, %v1837
    %v1841 = vmul.f32 %v1834, %v1608
    %v1842 = vadd.f32 %v1839, %v1841
    %v1844 = vsel %vm629, %v1842, 0
    %1846 = vmatprep.subr.mxu0 0.0
    %1847 = vmatpush1.msra.mxu0 0.0
    %1848 = vmatprep.subr.mxu0 0.0
    %1849 = vmatpush1.msra.mxu0 0.0
    %1850 = vmatprep.subr.mxu0 0.0
    %1851 = vmatpush1.msra.mxu0 0.0
    %1852 = vmatprep.subr.mxu0 0.0
    %1853 = vmatpush1.msra.mxu0 0.0
    %1854 = vmatprep.subr.mxu0 0.0
    %1855 = vmatpush1.msra.mxu0 0.0
    %1856 = vmatprep.subr.mxu0 0.0
    %1857 = vmatpush1.msra.mxu0 0.0
    %1858 = vmatprep.subr.mxu0 0.0
    %1859 = vmatpush1.msra.mxu0 0.0
    %1860 = vmatprep.subr.mxu0 0.0
    %1861 = vmatpush1.msra.mxu0 0.0
    %1862 = vmatprep.subr.mxu0 0.0
    %1863 = vmatpush1.msra.mxu0 0.0
    %1864 = vmatprep.subr.mxu0 0.0
    %1865 = vmatpush1.msra.mxu0 0.0
    %1866 = vmatprep.subr.mxu0 0.0
    %1867 = vmatpush1.msra.mxu0 0.0
    %1868 = vmatprep.subr.mxu0 0.0
    %1869 = vmatpush1.msra.mxu0 0.0
    %1870 = vmatprep.subr.mxu0 0.0
    %1871 = vmatpush1.msra.mxu0 %v606
    %1872 = vmatprep.subr.mxu0 0.0
    %1873 = vmatpush1.msra.mxu0 %v605
    %1874 = vmatprep.subr.mxu0 0.0
    %1875 = vmatpush1.msra.mxu0 %v604
    %1876 = vmatprep.subr.mxu0 0.0
    %1877 = vmatpush1.msra.mxu0 %v603
    %1878 = vmatprep.subr.mxu0 0.0
    %1879 = vmatpush2.msra.mxu0 0.0
    %1880 = vmatprep.subr.mxu0 0.0
    %1881 = vmatpush2.msra.mxu0 0.0
    %1882 = vmatprep.subr.mxu0 0.0
    %1883 = vmatpush2.msra.mxu0 0.0
    %1884 = vmatprep.subr.mxu0 0.0
    %1885 = vmatpush2.msra.mxu0 0.0
    %1886 = vmatprep.subr.mxu0 0.0
    %1887 = vmatpush2.msra.mxu0 0.0
    %1888 = vmatprep.subr.mxu0 0.0
    %1889 = vmatpush2.msra.mxu0 0.0
    %1890 = vmatprep.subr.mxu0 0.0
    %1891 = vmatpush2.msra.mxu0 0.0
    %1892 = vmatprep.subr.mxu0 0.0
    %1893 = vmatpush2.msra.mxu0 0.0
    %1894 = vmatprep.subr.mxu0 0.0
    %1895 = vmatpush2.msra.mxu0 0.0
    %1896 = vmatprep.subr.mxu0 0.0
    %1897 = vmatpush2.msra.mxu0 0.0
    %1898 = vmatprep.subr.mxu0 0.0
    %1899 = vmatpush2.msra.mxu0 0.0
    %1900 = vmatprep.subr.mxu0 0.0
    %1901 = vmatpush2.msra.mxu0 0.0
    %1902 = vmatprep.subr.mxu0 0.0
    %1903 = vmatpush2.msra.mxu0 0.0
    %1904 = vmatprep.subr.mxu0 0.0
    %1905 = vmatpush2.msra.mxu0 0.0
    %1906 = vmatprep.subr.mxu0 0.0
    %1907 = vmatpush2.msra.mxu0 0.0
    %1908 = vmatprep.subr.mxu0 0.0
    %1909 = vmatpush2.msra.mxu0 0.0
    %1910 = vmatprep.mubr.f32.mxu0 0.0
    %1911 = vmatmul.mubr.f32.gmra.mxu0 %v1844
    %v1912 = vpop.f32.mrf.mxu0
    %v1913 = vadd.f32 0.0, %v1912
    %v1914 = vpop.f32.mrf.mxu0
    %1915 = vdwg.mxu0
    %1916 = vmatprep.subr.mxu0 0.0
    %1917 = vmatpush1.msra.mxu0 0.0
    %1918 = vmatprep.subr.mxu0 0.0
    %1919 = vmatpush1.msra.mxu0 0.0
    %1920 = vmatprep.subr.mxu0 0.0
    %1921 = vmatpush1.msra.mxu0 0.0
    %1922 = vmatprep.subr.mxu0 0.0
    %1923 = vmatpush1.msra.mxu0 0.0
    %1924 = vmatprep.subr.mxu0 0.0
    %1925 = vmatpush1.msra.mxu0 0.0
    %1926 = vmatprep.subr.mxu0 0.0
    %1927 = vmatpush1.msra.mxu0 0.0
    %1928 = vmatprep.subr.mxu0 0.0
    %1929 = vmatpush1.msra.mxu0 0.0
    %1930 = vmatprep.subr.mxu0 0.0
    %1931 = vmatpush1.msra.mxu0 0.0
    %1932 = vmatprep.subr.mxu0 0.0
    %1933 = vmatpush1.msra.mxu0 0.0
    %1934 = vmatprep.subr.mxu0 0.0
    %1935 = vmatpush1.msra.mxu0 0.0
    %1936 = vmatprep.subr.mxu0 0.0
    %1937 = vmatpush1.msra.mxu0 0.0
    %1938 = vmatprep.subr.mxu0 0.0
    %1939 = vmatpush1.msra.mxu0 0.0
    %1940 = vmatprep.subr.mxu0 0.0
    %1941 = vmatpush1.msra.mxu0 %v610
    %1942 = vmatprep.subr.mxu0 0.0
    %1943 = vmatpush1.msra.mxu0 %v609
    %1944 = vmatprep.subr.mxu0 0.0
    %1945 = vmatpush1.msra.mxu0 %v608
    %1946 = vmatprep.subr.mxu0 0.0
    %1947 = vmatpush1.msra.mxu0 %v607
    %1948 = vmatprep.subr.mxu0 0.0
    %1949 = vmatpush2.msra.mxu0 0.0
    %1950 = vmatprep.subr.mxu0 0.0
    %1951 = vmatpush2.msra.mxu0 0.0
    %1952 = vmatprep.subr.mxu0 0.0
    %1953 = vmatpush2.msra.mxu0 0.0
    %1954 = vmatprep.subr.mxu0 0.0
    %1955 = vmatpush2.msra.mxu0 0.0
    %1956 = vmatprep.subr.mxu0 0.0
    %1957 = vmatpush2.msra.mxu0 0.0
    %1958 = vmatprep.subr.mxu0 0.0
    %1959 = vmatpush2.msra.mxu0 0.0
    %1960 = vmatprep.subr.mxu0 0.0
    %1961 = vmatpush2.msra.mxu0 0.0
    %1962 = vmatprep.subr.mxu0 0.0
    %1963 = vmatpush2.msra.mxu0 0.0
    %1964 = vmatprep.subr.mxu0 0.0
    %1965 = vmatpush2.msra.mxu0 0.0
    %1966 = vmatprep.subr.mxu0 0.0
    %1967 = vmatpush2.msra.mxu0 0.0
    %1968 = vmatprep.subr.mxu0 0.0
    %1969 = vmatpush2.msra.mxu0 0.0
    %1970 = vmatprep.subr.mxu0 0.0
    %1971 = vmatpush2.msra.mxu0 0.0
    %1972 = vmatprep.subr.mxu0 0.0
    %1973 = vmatpush2.msra.mxu0 0.0
    %1974 = vmatprep.subr.mxu0 0.0
    %1975 = vmatpush2.msra.mxu0 0.0
    %1976 = vmatprep.subr.mxu0 0.0
    %1977 = vmatpush2.msra.mxu0 0.0
    %1978 = vmatprep.subr.mxu0 0.0
    %1979 = vmatpush2.msra.mxu0 0.0
    %1980 = vmatprep.mubr.f32.mxu0 0.0
    %1981 = vmatmul.mubr.f32.gmra.mxu0 %v1844
    %v1982 = vpop.f32.mrf.mxu0
    %v1983 = vadd.f32 0.0, %v1982
    %v1984 = vpop.f32.mrf.mxu0
    %1985 = vdwg.mxu0
    %1986 = vmatprep.subr.mxu0 0.0
    %1987 = vmatpush1.msra.mxu0 0.0
    %1988 = vmatprep.subr.mxu0 0.0
    %1989 = vmatpush1.msra.mxu0 0.0
    %1990 = vmatprep.subr.mxu0 0.0
    %1991 = vmatpush1.msra.mxu0 0.0
    %1992 = vmatprep.subr.mxu0 0.0
    %1993 = vmatpush1.msra.mxu0 0.0
    %1994 = vmatprep.subr.mxu0 0.0
    %1995 = vmatpush1.msra.mxu0 0.0
    %1996 = vmatprep.subr.mxu0 0.0
    %1997 = vmatpush1.msra.mxu0 0.0
    %1998 = vmatprep.subr.mxu0 0.0
    %1999 = vmatpush1.msra.mxu0 0.0
    %2000 = vmatprep.subr.mxu0 0.0
    %2001 = vmatpush1.msra.mxu0 0.0
    %2002 = vmatprep.subr.mxu0 0.0
    %2003 = vmatpush1.msra.mxu0 0.0
    %2004 = vmatprep.subr.mxu0 0.0
    %2005 = vmatpush1.msra.mxu0 0.0
    %2006 = vmatprep.subr.mxu0 0.0
    %2007 = vmatpush1.msra.mxu0 0.0
    %2008 = vmatprep.subr.mxu0 0.0
    %2009 = vmatpush1.msra.mxu0 0.0
    %2010 = vmatprep.subr.mxu0 0.0
    %2011 = vmatpush1.msra.mxu0 %v614
    %2012 = vmatprep.subr.mxu0 0.0
    %2013 = vmatpush1.msra.mxu0 %v613
    %2014 = vmatprep.subr.mxu0 0.0
    %2015 = vmatpush1.msra.mxu0 %v612
    %2016 = vmatprep.subr.mxu0 0.0
    %2017 = vmatpush1.msra.mxu0 %v611
    %2018 = vmatprep.subr.mxu0 0.0
    %2019 = vmatpush2.msra.mxu0 0.0
    %2020 = vmatprep.subr.mxu0 0.0
    %2021 = vmatpush2.msra.mxu0 0.0
    %2022 = vmatprep.subr.mxu0 0.0
    %2023 = vmatpush2.msra.mxu0 0.0
    %2024 = vmatprep.subr.mxu0 0.0
    %2025 = vmatpush2.msra.mxu0 0.0
    %2026 = vmatprep.subr.mxu0 0.0
    %2027 = vmatpush2.msra.mxu0 0.0
    %2028 = vmatprep.subr.mxu0 0.0
    %2029 = vmatpush2.msra.mxu0 0.0
    %2030 = vmatprep.subr.mxu0 0.0
    %2031 = vmatpush2.msra.mxu0 0.0
    %2032 = vmatprep.subr.mxu0 0.0
    %2033 = vmatpush2.msra.mxu0 0.0
    %2034 = vmatprep.subr.mxu0 0.0
    %2035 = vmatpush2.msra.mxu0 0.0
    %2036 = vmatprep.subr.mxu0 0.0
    %2037 = vmatpush2.msra.mxu0 0.0
    %2038 = vmatprep.subr.mxu0 0.0
    %2039 = vmatpush2.msra.mxu0 0.0
    %2040 = vmatprep.subr.mxu0 0.0
    %2041 = vmatpush2.msra.mxu0 0.0
    %2042 = vmatprep.subr.mxu0 0.0
    %2043 = vmatpush2.msra.mxu0 0.0
    %2044 = vmatprep.subr.mxu0 0.0
    %2045 = vmatpush2.msra.mxu0 0.0
    %2046 = vmatprep.subr.mxu0 0.0
    %2047 = vmatpush2.msra.mxu0 0.0
    %2048 = vmatprep.subr.mxu0 0.0
    %2049 = vmatpush2.msra.mxu0 0.0
    %2050 = vmatprep.mubr.f32.mxu0 0.0
    %2051 = vmatmul.mubr.f32.gmra.mxu0 %v1844
    %v2052 = vpop.f32.mrf.mxu0
    %v2053 = vadd.f32 %v777, %v2052
    %v2054 = vpop.f32.mrf.mxu0
    %2055 = vdwg.mxu0
    %v2057 = vrot.slane %v1913, 6
    %v2059 = vadd.f32 %v170, %v2057
    %v2060 = vxor.u32 %v2059, 2147483648
    %v2061 = vmul.f32 %v2060, 1.442695
    %v2062 = vpow.pop %v2061
    %v2063 = vadd.f32 %v2062, 1.0
    %v2064 = vrcp.pop %v2063
    %v2065 = vmul.f32 1.0, %v2064
    %v2067 = vrot.slane %v1983, 6
    %v2069 = vadd.f32 %v256, %v2067
    %v2070 = vxor.u32 %v2069, 2147483648
    %v2071 = vmul.f32 %v2070, 1.442695
    %v2072 = vpow.pop %v2071
    %v2073 = vadd.f32 %v2072, 1.0
    %v2074 = vrcp.pop %v2073
    %v2075 = vmul.f32 1.0, %v2074
    %v2077 = vrot.slane %v2053, 6
    %v2079 = vmul.f32 %v2065, %v2077
    %v2080 = vadd.f32 %v342, %v2079
    %v2081 = vtanh.pop %v2080
    %v2082 = vsub.f32 1.0, %v2075
    %v2083 = vmul.f32 %v2082, %v2081
    %v2084 = vrot.slane %v1842, 6
    %v2086 = vmul.f32 %v2075, %v2084
    %v2087 = vadd.f32 %v2083, %v2086
    %v2089 = vrot.slane %v2087, 2
    %v2090 = vsel %vm629, %v2089, 0
    %2092 = vmatprep.subr.mxu0 0.0
    %2093 = vmatpush1.msra.mxu0 0.0
    %2094 = vmatprep.subr.mxu0 0.0
    %2095 = vmatpush1.msra.mxu0 0.0
    %2096 = vmatprep.subr.mxu0 0.0
    %2097 = vmatpush1.msra.mxu0 0.0
    %2098 = vmatprep.subr.mxu0 0.0
    %2099 = vmatpush1.msra.mxu0 0.0
    %2100 = vmatprep.subr.mxu0 0.0
    %2101 = vmatpush1.msra.mxu0 0.0
    %2102 = vmatprep.subr.mxu0 0.0
    %2103 = vmatpush1.msra.mxu0 0.0
    %2104 = vmatprep.subr.mxu0 0.0
    %2105 = vmatpush1.msra.mxu0 0.0
    %2106 = vmatprep.subr.mxu0 0.0
    %2107 = vmatpush1.msra.mxu0 0.0
    %2108 = vmatprep.subr.mxu0 0.0
    %2109 = vmatpush1.msra.mxu0 0.0
    %2110 = vmatprep.subr.mxu0 0.0
    %2111 = vmatpush1.msra.mxu0 0.0
    %2112 = vmatprep.subr.mxu0 0.0
    %2113 = vmatpush1.msra.mxu0 0.0
    %2114 = vmatprep.subr.mxu0 0.0
    %2115 = vmatpush1.msra.mxu0 0.0
    %2116 = vmatprep.subr.mxu0 0.0
    %2117 = vmatpush1.msra.mxu0 %v606
    %2118 = vmatprep.subr.mxu0 0.0
    %2119 = vmatpush1.msra.mxu0 %v605
    %2120 = vmatprep.subr.mxu0 0.0
    %2121 = vmatpush1.msra.mxu0 %v604
    %2122 = vmatprep.subr.mxu0 0.0
    %2123 = vmatpush1.msra.mxu0 %v603
    %2124 = vmatprep.subr.mxu0 0.0
    %2125 = vmatpush2.msra.mxu0 0.0
    %2126 = vmatprep.subr.mxu0 0.0
    %2127 = vmatpush2.msra.mxu0 0.0
    %2128 = vmatprep.subr.mxu0 0.0
    %2129 = vmatpush2.msra.mxu0 0.0
    %2130 = vmatprep.subr.mxu0 0.0
    %2131 = vmatpush2.msra.mxu0 0.0
    %2132 = vmatprep.subr.mxu0 0.0
    %2133 = vmatpush2.msra.mxu0 0.0
    %2134 = vmatprep.subr.mxu0 0.0
    %2135 = vmatpush2.msra.mxu0 0.0
    %2136 = vmatprep.subr.mxu0 0.0
    %2137 = vmatpush2.msra.mxu0 0.0
    %2138 = vmatprep.subr.mxu0 0.0
    %2139 = vmatpush2.msra.mxu0 0.0
    %2140 = vmatprep.subr.mxu0 0.0
    %2141 = vmatpush2.msra.mxu0 0.0
    %2142 = vmatprep.subr.mxu0 0.0
    %2143 = vmatpush2.msra.mxu0 0.0
    %2144 = vmatprep.subr.mxu0 0.0
    %2145 = vmatpush2.msra.mxu0 0.0
    %2146 = vmatprep.subr.mxu0 0.0
    %2147 = vmatpush2.msra.mxu0 0.0
    %2148 = vmatprep.subr.mxu0 0.0
    %2149 = vmatpush2.msra.mxu0 0.0
    %2150 = vmatprep.subr.mxu0 0.0
    %2151 = vmatpush2.msra.mxu0 0.0
    %2152 = vmatprep.subr.mxu0 0.0
    %2153 = vmatpush2.msra.mxu0 0.0
    %2154 = vmatprep.subr.mxu0 0.0
    %2155 = vmatpush2.msra.mxu0 0.0
    %2156 = vmatprep.mubr.f32.mxu0 0.0
    %2157 = vmatmul.mubr.f32.gmra.mxu0 %v2090
    %v2158 = vpop.f32.mrf.mxu0
    %v2159 = vadd.f32 0.0, %v2158
    %v2160 = vpop.f32.mrf.mxu0
    %2161 = vdwg.mxu0
    %2162 = vmatprep.subr.mxu0 0.0
    %2163 = vmatpush1.msra.mxu0 0.0
    %2164 = vmatprep.subr.mxu0 0.0
    %2165 = vmatpush1.msra.mxu0 0.0
    %2166 = vmatprep.subr.mxu0 0.0
    %2167 = vmatpush1.msra.mxu0 0.0
    %2168 = vmatprep.subr.mxu0 0.0
    %2169 = vmatpush1.msra.mxu0 0.0
    %2170 = vmatprep.subr.mxu0 0.0
    %2171 = vmatpush1.msra.mxu0 0.0
    %2172 = vmatprep.subr.mxu0 0.0
    %2173 = vmatpush1.msra.mxu0 0.0
    %2174 = vmatprep.subr.mxu0 0.0
    %2175 = vmatpush1.msra.mxu0 0.0
    %2176 = vmatprep.subr.mxu0 0.0
    %2177 = vmatpush1.msra.mxu0 0.0
    %2178 = vmatprep.subr.mxu0 0.0
    %2179 = vmatpush1.msra.mxu0 0.0
    %2180 = vmatprep.subr.mxu0 0.0
    %2181 = vmatpush1.msra.mxu0 0.0
    %2182 = vmatprep.subr.mxu0 0.0
    %2183 = vmatpush1.msra.mxu0 0.0
    %2184 = vmatprep.subr.mxu0 0.0
    %2185 = vmatpush1.msra.mxu0 0.0
    %2186 = vmatprep.subr.mxu0 0.0
    %2187 = vmatpush1.msra.mxu0 %v610
    %2188 = vmatprep.subr.mxu0 0.0
    %2189 = vmatpush1.msra.mxu0 %v609
    %2190 = vmatprep.subr.mxu0 0.0
    %2191 = vmatpush1.msra.mxu0 %v608
    %2192 = vmatprep.subr.mxu0 0.0
    %2193 = vmatpush1.msra.mxu0 %v607
    %2194 = vmatprep.subr.mxu0 0.0
    %2195 = vmatpush2.msra.mxu0 0.0
    %2196 = vmatprep.subr.mxu0 0.0
    %2197 = vmatpush2.msra.mxu0 0.0
    %2198 = vmatprep.subr.mxu0 0.0
    %2199 = vmatpush2.msra.mxu0 0.0
    %2200 = vmatprep.subr.mxu0 0.0
    %2201 = vmatpush2.msra.mxu0 0.0
    %2202 = vmatprep.subr.mxu0 0.0
    %2203 = vmatpush2.msra.mxu0 0.0
    %2204 = vmatprep.subr.mxu0 0.0
    %2205 = vmatpush2.msra.mxu0 0.0
    %2206 = vmatprep.subr.mxu0 0.0
    %2207 = vmatpush2.msra.mxu0 0.0
    %2208 = vmatprep.subr.mxu0 0.0
    %2209 = vmatpush2.msra.mxu0 0.0
    %2210 = vmatprep.subr.mxu0 0.0
    %2211 = vmatpush2.msra.mxu0 0.0
    %2212 = vmatprep.subr.mxu0 0.0
    %2213 = vmatpush2.msra.mxu0 0.0
    %2214 = vmatprep.subr.mxu0 0.0
    %2215 = vmatpush2.msra.mxu0 0.0
    %2216 = vmatprep.subr.mxu0 0.0
    %2217 = vmatpush2.msra.mxu0 0.0
    %2218 = vmatprep.subr.mxu0 0.0
    %2219 = vmatpush2.msra.mxu0 0.0
    %2220 = vmatprep.subr.mxu0 0.0
    %2221 = vmatpush2.msra.mxu0 0.0
    %2222 = vmatprep.subr.mxu0 0.0
    %2223 = vmatpush2.msra.mxu0 0.0
    %2224 = vmatprep.subr.mxu0 0.0
    %2225 = vmatpush2.msra.mxu0 0.0
    %2226 = vmatprep.mubr.f32.mxu0 0.0
    %2227 = vmatmul.mubr.f32.gmra.mxu0 %v2090
    %v2228 = vpop.f32.mrf.mxu0
    %v2229 = vadd.f32 0.0, %v2228
    %v2230 = vpop.f32.mrf.mxu0
    %2231 = vdwg.mxu0
    %2232 = vmatprep.subr.mxu0 0.0
    %2233 = vmatpush1.msra.mxu0 0.0
    %2234 = vmatprep.subr.mxu0 0.0
    %2235 = vmatpush1.msra.mxu0 0.0
    %2236 = vmatprep.subr.mxu0 0.0
    %2237 = vmatpush1.msra.mxu0 0.0
    %2238 = vmatprep.subr.mxu0 0.0
    %2239 = vmatpush1.msra.mxu0 0.0
    %2240 = vmatprep.subr.mxu0 0.0
    %2241 = vmatpush1.msra.mxu0 0.0
    %2242 = vmatprep.subr.mxu0 0.0
    %2243 = vmatpush1.msra.mxu0 0.0
    %2244 = vmatprep.subr.mxu0 0.0
    %2245 = vmatpush1.msra.mxu0 0.0
    %2246 = vmatprep.subr.mxu0 0.0
    %2247 = vmatpush1.msra.mxu0 0.0
    %2248 = vmatprep.subr.mxu0 0.0
    %2249 = vmatpush1.msra.mxu0 0.0
    %2250 = vmatprep.subr.mxu0 0.0
    %2251 = vmatpush1.msra.mxu0 0.0
    %2252 = vmatprep.subr.mxu0 0.0
    %2253 = vmatpush1.msra.mxu0 0.0
    %2254 = vmatprep.subr.mxu0 0.0
    %2255 = vmatpush1.msra.mxu0 0.0
    %2256 = vmatprep.subr.mxu0 0.0
    %2257 = vmatpush1.msra.mxu0 %v614
    %2258 = vmatprep.subr.mxu0 0.0
    %2259 = vmatpush1.msra.mxu0 %v613
    %2260 = vmatprep.subr.mxu0 0.0
    %2261 = vmatpush1.msra.mxu0 %v612
    %2262 = vmatprep.subr.mxu0 0.0
    %2263 = vmatpush1.msra.mxu0 %v611
    %2264 = vmatprep.subr.mxu0 0.0
    %2265 = vmatpush2.msra.mxu0 0.0
    %2266 = vmatprep.subr.mxu0 0.0
    %2267 = vmatpush2.msra.mxu0 0.0
    %2268 = vmatprep.subr.mxu0 0.0
    %2269 = vmatpush2.msra.mxu0 0.0
    %2270 = vmatprep.subr.mxu0 0.0
    %2271 = vmatpush2.msra.mxu0 0.0
    %2272 = vmatprep.subr.mxu0 0.0
    %2273 = vmatpush2.msra.mxu0 0.0
    %2274 = vmatprep.subr.mxu0 0.0
    %2275 = vmatpush2.msra.mxu0 0.0
    %2276 = vmatprep.subr.mxu0 0.0
    %2277 = vmatpush2.msra.mxu0 0.0
    %2278 = vmatprep.subr.mxu0 0.0
    %2279 = vmatpush2.msra.mxu0 0.0
    %2280 = vmatprep.subr.mxu0 0.0
    %2281 = vmatpush2.msra.mxu0 0.0
    %2282 = vmatprep.subr.mxu0 0.0
    %2283 = vmatpush2.msra.mxu0 0.0
    %2284 = vmatprep.subr.mxu0 0.0
    %2285 = vmatpush2.msra.mxu0 0.0
    %2286 = vmatprep.subr.mxu0 0.0
    %2287 = vmatpush2.msra.mxu0 0.0
    %2288 = vmatprep.subr.mxu0 0.0
    %2289 = vmatpush2.msra.mxu0 0.0
    %2290 = vmatprep.subr.mxu0 0.0
    %2291 = vmatpush2.msra.mxu0 0.0
    %2292 = vmatprep.subr.mxu0 0.0
    %2293 = vmatpush2.msra.mxu0 0.0
    %2294 = vmatprep.subr.mxu0 0.0
    %2295 = vmatpush2.msra.mxu0 0.0
    %2296 = vmatprep.mubr.f32.mxu0 0.0
    %2297 = vmatmul.mubr.f32.gmra.mxu0 %v2090
    %v2298 = vpop.f32.mrf.mxu0
    %v2299 = vadd.f32 %v777, %v2298
    %v2300 = vpop.f32.mrf.mxu0
    %2301 = vdwg.mxu0
    %v2303 = vrot.slane %v2159, 4
    %v2305 = vadd.f32 %v170, %v2303
    %v2306 = vxor.u32 %v2305, 2147483648
    %v2307 = vmul.f32 %v2306, 1.442695
    %v2308 = vpow.pop %v2307
    %v2309 = vadd.f32 %v2308, 1.0
    %v2310 = vrcp.pop %v2309
    %v2311 = vmul.f32 1.0, %v2310
    %v2313 = vrot.slane %v2229, 4
    %v2315 = vadd.f32 %v256, %v2313
    %v2316 = vxor.u32 %v2315, 2147483648
    %v2317 = vmul.f32 %v2316, 1.442695
    %v2318 = vpow.pop %v2317
    %v2319 = vadd.f32 %v2318, 1.0
    %v2320 = vrcp.pop %v2319
    %v2321 = vmul.f32 1.0, %v2320
    %v2323 = vrot.slane %v2299, 4
    %v2325 = vmul.f32 %v2311, %v2323
    %v2326 = vadd.f32 %v342, %v2325
    %v2327 = vtanh.pop %v2326
    %v2328 = vsub.f32 1.0, %v2321
    %v2329 = vmul.f32 %v2328, %v2327
    %v2330 = vrot.slane %v2087, 6
    %v2332 = vmul.f32 %v2321, %v2330
    %v2333 = vadd.f32 %v2329, %v2332
    %v2335 = vrot.slane %v2333, 4
    %v2336 = vsel %vm629, %v2335, 0
    %2338 = vmatprep.subr.mxu0 0.0
    %2339 = vmatpush1.msra.mxu0 0.0
    %2340 = vmatprep.subr.mxu0 0.0
    %2341 = vmatpush1.msra.mxu0 0.0
    %2342 = vmatprep.subr.mxu0 0.0
    %2343 = vmatpush1.msra.mxu0 0.0
    %2344 = vmatprep.subr.mxu0 0.0
    %2345 = vmatpush1.msra.mxu0 0.0
    %2346 = vmatprep.subr.mxu0 0.0
    %2347 = vmatpush1.msra.mxu0 0.0
    %2348 = vmatprep.subr.mxu0 0.0
    %2349 = vmatpush1.msra.mxu0 0.0
    %2350 = vmatprep.subr.mxu0 0.0
    %2351 = vmatpush1.msra.mxu0 0.0
    %2352 = vmatprep.subr.mxu0 0.0
    %2353 = vmatpush1.msra.mxu0 0.0
    %2354 = vmatprep.subr.mxu0 0.0
    %2355 = vmatpush1.msra.mxu0 0.0
    %2356 = vmatprep.subr.mxu0 0.0
    %2357 = vmatpush1.msra.mxu0 0.0
    %2358 = vmatprep.subr.mxu0 0.0
    %2359 = vmatpush1.msra.mxu0 0.0
    %2360 = vmatprep.subr.mxu0 0.0
    %2361 = vmatpush1.msra.mxu0 0.0
    %2362 = vmatprep.subr.mxu0 0.0
    %2363 = vmatpush1.msra.mxu0 %v606
    %2364 = vmatprep.subr.mxu0 0.0
    %2365 = vmatpush1.msra.mxu0 %v605
    %2366 = vmatprep.subr.mxu0 0.0
    %2367 = vmatpush1.msra.mxu0 %v604
    %2368 = vmatprep.subr.mxu0 0.0
    %2369 = vmatpush1.msra.mxu0 %v603
    %2370 = vmatprep.subr.mxu0 0.0
    %2371 = vmatpush2.msra.mxu0 0.0
    %2372 = vmatprep.subr.mxu0 0.0
    %2373 = vmatpush2.msra.mxu0 0.0
    %2374 = vmatprep.subr.mxu0 0.0
    %2375 = vmatpush2.msra.mxu0 0.0
    %2376 = vmatprep.subr.mxu0 0.0
    %2377 = vmatpush2.msra.mxu0 0.0
    %2378 = vmatprep.subr.mxu0 0.0
    %2379 = vmatpush2.msra.mxu0 0.0
    %2380 = vmatprep.subr.mxu0 0.0
    %2381 = vmatpush2.msra.mxu0 0.0
    %2382 = vmatprep.subr.mxu0 0.0
    %2383 = vmatpush2.msra.mxu0 0.0
    %2384 = vmatprep.subr.mxu0 0.0
    %2385 = vmatpush2.msra.mxu0 0.0
    %2386 = vmatprep.subr.mxu0 0.0
    %2387 = vmatpush2.msra.mxu0 0.0
    %2388 = vmatprep.subr.mxu0 0.0
    %2389 = vmatpush2.msra.mxu0 0.0
    %2390 = vmatprep.subr.mxu0 0.0
    %2391 = vmatpush2.msra.mxu0 0.0
    %2392 = vmatprep.subr.mxu0 0.0
    %2393 = vmatpush2.msra.mxu0 0.0
    %2394 = vmatprep.subr.mxu0 0.0
    %2395 = vmatpush2.msra.mxu0 0.0
    %2396 = vmatprep.subr.mxu0 0.0
    %2397 = vmatpush2.msra.mxu0 0.0
    %2398 = vmatprep.subr.mxu0 0.0
    %2399 = vmatpush2.msra.mxu0 0.0
    %2400 = vmatprep.subr.mxu0 0.0
    %2401 = vmatpush2.msra.mxu0 0.0
    %2402 = vmatprep.mubr.f32.mxu0 0.0
    %2403 = vmatmul.mubr.f32.gmra.mxu0 %v2336
    %v2404 = vpop.f32.mrf.mxu0
    %v2405 = vadd.f32 0.0, %v2404
    %v2406 = vpop.f32.mrf.mxu0
    %2407 = vdwg.mxu0
    %2408 = vmatprep.subr.mxu0 0.0
    %2409 = vmatpush1.msra.mxu0 0.0
    %2410 = vmatprep.subr.mxu0 0.0
    %2411 = vmatpush1.msra.mxu0 0.0
    %2412 = vmatprep.subr.mxu0 0.0
    %2413 = vmatpush1.msra.mxu0 0.0
    %2414 = vmatprep.subr.mxu0 0.0
    %2415 = vmatpush1.msra.mxu0 0.0
    %2416 = vmatprep.subr.mxu0 0.0
    %2417 = vmatpush1.msra.mxu0 0.0
    %2418 = vmatprep.subr.mxu0 0.0
    %2419 = vmatpush1.msra.mxu0 0.0
    %2420 = vmatprep.subr.mxu0 0.0
    %2421 = vmatpush1.msra.mxu0 0.0
    %2422 = vmatprep.subr.mxu0 0.0
    %2423 = vmatpush1.msra.mxu0 0.0
    %2424 = vmatprep.subr.mxu0 0.0
    %2425 = vmatpush1.msra.mxu0 0.0
    %2426 = vmatprep.subr.mxu0 0.0
    %2427 = vmatpush1.msra.mxu0 0.0
    %2428 = vmatprep.subr.mxu0 0.0
    %2429 = vmatpush1.msra.mxu0 0.0
    %2430 = vmatprep.subr.mxu0 0.0
    %2431 = vmatpush1.msra.mxu0 0.0
    %2432 = vmatprep.subr.mxu0 0.0
    %2433 = vmatpush1.msra.mxu0 %v610
    %2434 = vmatprep.subr.mxu0 0.0
    %2435 = vmatpush1.msra.mxu0 %v609
    %2436 = vmatprep.subr.mxu0 0.0
    %2437 = vmatpush1.msra.mxu0 %v608
    %2438 = vmatprep.subr.mxu0 0.0
    %2439 = vmatpush1.msra.mxu0 %v607
    %2440 = vmatprep.subr.mxu0 0.0
    %2441 = vmatpush2.msra.mxu0 0.0
    %2442 = vmatprep.subr.mxu0 0.0
    %2443 = vmatpush2.msra.mxu0 0.0
    %2444 = vmatprep.subr.mxu0 0.0
    %2445 = vmatpush2.msra.mxu0 0.0
    %2446 = vmatprep.subr.mxu0 0.0
    %2447 = vmatpush2.msra.mxu0 0.0
    %2448 = vmatprep.subr.mxu0 0.0
    %2449 = vmatpush2.msra.mxu0 0.0
    %2450 = vmatprep.subr.mxu0 0.0
    %2451 = vmatpush2.msra.mxu0 0.0
    %2452 = vmatprep.subr.mxu0 0.0
    %2453 = vmatpush2.msra.mxu0 0.0
    %2454 = vmatprep.subr.mxu0 0.0
    %2455 = vmatpush2.msra.mxu0 0.0
    %2456 = vmatprep.subr.mxu0 0.0
    %2457 = vmatpush2.msra.mxu0 0.0
    %2458 = vmatprep.subr.mxu0 0.0
    %2459 = vmatpush2.msra.mxu0 0.0
    %2460 = vmatprep.subr.mxu0 0.0
    %2461 = vmatpush2.msra.mxu0 0.0
    %2462 = vmatprep.subr.mxu0 0.0
    %2463 = vmatpush2.msra.mxu0 0.0
    %2464 = vmatprep.subr.mxu0 0.0
    %2465 = vmatpush2.msra.mxu0 0.0
    %2466 = vmatprep.subr.mxu0 0.0
    %2467 = vmatpush2.msra.mxu0 0.0
    %2468 = vmatprep.subr.mxu0 0.0
    %2469 = vmatpush2.msra.mxu0 0.0
    %2470 = vmatprep.subr.mxu0 0.0
    %2471 = vmatpush2.msra.mxu0 0.0
    %2472 = vmatprep.mubr.f32.mxu0 0.0
    %2473 = vmatmul.mubr.f32.gmra.mxu0 %v2336
    %v2474 = vpop.f32.mrf.mxu0
    %v2475 = vadd.f32 0.0, %v2474
    %v2476 = vpop.f32.mrf.mxu0
    %2477 = vdwg.mxu0
    %2478 = vmatprep.subr.mxu0 0.0
    %2479 = vmatpush1.msra.mxu0 0.0
    %2480 = vmatprep.subr.mxu0 0.0
    %2481 = vmatpush1.msra.mxu0 0.0
    %2482 = vmatprep.subr.mxu0 0.0
    %2483 = vmatpush1.msra.mxu0 0.0
    %2484 = vmatprep.subr.mxu0 0.0
    %2485 = vmatpush1.msra.mxu0 0.0
    %2486 = vmatprep.subr.mxu0 0.0
    %2487 = vmatpush1.msra.mxu0 0.0
    %2488 = vmatprep.subr.mxu0 0.0
    %2489 = vmatpush1.msra.mxu0 0.0
    %2490 = vmatprep.subr.mxu0 0.0
    %2491 = vmatpush1.msra.mxu0 0.0
    %2492 = vmatprep.subr.mxu0 0.0
    %2493 = vmatpush1.msra.mxu0 0.0
    %2494 = vmatprep.subr.mxu0 0.0
    %2495 = vmatpush1.msra.mxu0 0.0
    %2496 = vmatprep.subr.mxu0 0.0
    %2497 = vmatpush1.msra.mxu0 0.0
    %2498 = vmatprep.subr.mxu0 0.0
    %2499 = vmatpush1.msra.mxu0 0.0
    %2500 = vmatprep.subr.mxu0 0.0
    %2501 = vmatpush1.msra.mxu0 0.0
    %2502 = vmatprep.subr.mxu0 0.0
    %2503 = vmatpush1.msra.mxu0 %v614
    %2504 = vmatprep.subr.mxu0 0.0
    %2505 = vmatpush1.msra.mxu0 %v613
    %2506 = vmatprep.subr.mxu0 0.0
    %2507 = vmatpush1.msra.mxu0 %v612
    %2508 = vmatprep.subr.mxu0 0.0
    %2509 = vmatpush1.msra.mxu0 %v611
    %2510 = vmatprep.subr.mxu0 0.0
    %2511 = vmatpush2.msra.mxu0 0.0
    %2512 = vmatprep.subr.mxu0 0.0
    %2513 = vmatpush2.msra.mxu0 0.0
    %2514 = vmatprep.subr.mxu0 0.0
    %2515 = vmatpush2.msra.mxu0 0.0
    %2516 = vmatprep.subr.mxu0 0.0
    %2517 = vmatpush2.msra.mxu0 0.0
    %2518 = vmatprep.subr.mxu0 0.0
    %2519 = vmatpush2.msra.mxu0 0.0
    %2520 = vmatprep.subr.mxu0 0.0
    %2521 = vmatpush2.msra.mxu0 0.0
    %2522 = vmatprep.subr.mxu0 0.0
    %2523 = vmatpush2.msra.mxu0 0.0
    %2524 = vmatprep.subr.mxu0 0.0
    %2525 = vmatpush2.msra.mxu0 0.0
    %2526 = vmatprep.subr.mxu0 0.0
    %2527 = vmatpush2.msra.mxu0 0.0
    %2528 = vmatprep.subr.mxu0 0.0
    %2529 = vmatpush2.msra.mxu0 0.0
    %2530 = vmatprep.subr.mxu0 0.0
    %2531 = vmatpush2.msra.mxu0 0.0
    %2532 = vmatprep.subr.mxu0 0.0
    %2533 = vmatpush2.msra.mxu0 0.0
    %2534 = vmatprep.subr.mxu0 0.0
    %2535 = vmatpush2.msra.mxu0 0.0
    %2536 = vmatprep.subr.mxu0 0.0
    %2537 = vmatpush2.msra.mxu0 0.0
    %2538 = vmatprep.subr.mxu0 0.0
    %2539 = vmatpush2.msra.mxu0 0.0
    %2540 = vmatprep.subr.mxu0 0.0
    %2541 = vmatpush2.msra.mxu0 0.0
    %2542 = vmatprep.mubr.f32.mxu0 0.0
    %2543 = vmatmul.mubr.f32.gmra.mxu0 %v2336
    %v2544 = vpop.f32.mrf.mxu0
    %v2545 = vadd.f32 %v777, %v2544
    %v2546 = vpop.f32.mrf.mxu0
    %2547 = vdwg.mxu0
    %v2549 = vrot.slane %v2405, 2
    %v2551 = vadd.f32 %v170, %v2549
    %v2552 = vxor.u32 %v2551, 2147483648
    %v2553 = vmul.f32 %v2552, 1.442695
    %v2554 = vpow.pop %v2553
    %v2555 = vadd.f32 %v2554, 1.0
    %v2556 = vrcp.pop %v2555
    %v2557 = vmul.f32 1.0, %v2556
    %v2559 = vrot.slane %v2475, 2
    %v2561 = vadd.f32 %v256, %v2559
    %v2562 = vxor.u32 %v2561, 2147483648
    %v2563 = vmul.f32 %v2562, 1.442695
    %v2564 = vpow.pop %v2563
    %v2565 = vadd.f32 %v2564, 1.0
    %v2566 = vrcp.pop %v2565
    %v2567 = vmul.f32 1.0, %v2566
    %v2569 = vrot.slane %v2545, 2
    %v2571 = vmul.f32 %v2557, %v2569
    %v2572 = vadd.f32 %v342, %v2571
    %v2573 = vtanh.pop %v2572
    %v2574 = vsub.f32 1.0, %v2567
    %v2575 = vmul.f32 %v2574, %v2573
    %v2576 = vrot.slane %v2333, 6
    %v2578 = vmul.f32 %v2567, %v2576
    %v2579 = vadd.f32 %v2575, %v2578
    %vm2580 = vcmask 261126
    %2581 = vst.msk [vmem:[#allocation2 - $0x6] sm:$0xc0] %vm2580, %v2579
    %v2583 = vrot.slane %v2579, 6
    %v2584 = vsel %vm629, %v2583, 0
    %2586 = vmatprep.subr.mxu0 0.0
    %2587 = vmatpush1.msra.mxu0 0.0
    %2588 = vmatprep.subr.mxu0 0.0
    %2589 = vmatpush1.msra.mxu0 0.0
    %2590 = vmatprep.subr.mxu0 0.0
    %2591 = vmatpush1.msra.mxu0 0.0
    %2592 = vmatprep.subr.mxu0 0.0
    %2593 = vmatpush1.msra.mxu0 0.0
    %2594 = vmatprep.subr.mxu0 0.0
    %2595 = vmatpush1.msra.mxu0 0.0
    %2596 = vmatprep.subr.mxu0 0.0
    %2597 = vmatpush1.msra.mxu0 0.0
    %2598 = vmatprep.subr.mxu0 0.0
    %2599 = vmatpush1.msra.mxu0 0.0
    %2600 = vmatprep.subr.mxu0 0.0
    %2601 = vmatpush1.msra.mxu0 0.0
    %2602 = vmatprep.subr.mxu0 0.0
    %2603 = vmatpush1.msra.mxu0 0.0
    %2604 = vmatprep.subr.mxu0 0.0
    %2605 = vmatpush1.msra.mxu0 0.0
    %2606 = vmatprep.subr.mxu0 0.0
    %2607 = vmatpush1.msra.mxu0 0.0
    %2608 = vmatprep.subr.mxu0 0.0
    %2609 = vmatpush1.msra.mxu0 0.0
    %2610 = vmatprep.subr.mxu0 0.0
    %2611 = vmatpush1.msra.mxu0 %v618
    %2612 = vmatprep.subr.mxu0 0.0
    %2613 = vmatpush1.msra.mxu0 %v617
    %2614 = vmatprep.subr.mxu0 0.0
    %2615 = vmatpush1.msra.mxu0 %v616
    %2616 = vmatprep.subr.mxu0 0.0
    %2617 = vmatpush1.msra.mxu0 %v615
    %2618 = vmatprep.subr.mxu0 0.0
    %2619 = vmatpush2.msra.mxu0 0.0
    %2620 = vmatprep.subr.mxu0 0.0
    %2621 = vmatpush2.msra.mxu0 0.0
    %2622 = vmatprep.subr.mxu0 0.0
    %2623 = vmatpush2.msra.mxu0 0.0
    %2624 = vmatprep.subr.mxu0 0.0
    %2625 = vmatpush2.msra.mxu0 0.0
    %2626 = vmatprep.subr.mxu0 0.0
    %2627 = vmatpush2.msra.mxu0 0.0
    %2628 = vmatprep.subr.mxu0 0.0
    %2629 = vmatpush2.msra.mxu0 0.0
    %2630 = vmatprep.subr.mxu0 0.0
    %2631 = vmatpush2.msra.mxu0 0.0
    %2632 = vmatprep.subr.mxu0 0.0
    %2633 = vmatpush2.msra.mxu0 0.0
    %2634 = vmatprep.subr.mxu0 0.0
    %2635 = vmatpush2.msra.mxu0 0.0
    %2636 = vmatprep.subr.mxu0 0.0
    %2637 = vmatpush2.msra.mxu0 0.0
    %2638 = vmatprep.subr.mxu0 0.0
    %2639 = vmatpush2.msra.mxu0 0.0
    %2640 = vmatprep.subr.mxu0 0.0
    %2641 = vmatpush2.msra.mxu0 0.0
    %2642 = vmatprep.subr.mxu0 0.0
    %2643 = vmatpush2.msra.mxu0 0.0
    %2644 = vmatprep.subr.mxu0 0.0
    %2645 = vmatpush2.msra.mxu0 0.0
    %2646 = vmatprep.subr.mxu0 0.0
    %2647 = vmatpush2.msra.mxu0 0.0
    %2648 = vmatprep.subr.mxu0 0.0
    %2649 = vmatpush2.msra.mxu0 0.0
    %2650 = vmatprep.mubr.f32.mxu0 0.0
    %2651 = vmatmul.mubr.f32.gmra.mxu0 %v2584
    %v2652 = vpop.f32.mrf.mxu0
    %v2653 = vadd.f32 0.0, %v2652
    %v2654 = vpop.f32.mrf.mxu0
    %2655 = vdwg.mxu0
    %2656 = vmatprep.subr.mxu0 0.0
    %2657 = vmatpush1.msra.mxu0 0.0
    %2658 = vmatprep.subr.mxu0 0.0
    %2659 = vmatpush1.msra.mxu0 0.0
    %2660 = vmatprep.subr.mxu0 0.0
    %2661 = vmatpush1.msra.mxu0 0.0
    %2662 = vmatprep.subr.mxu0 0.0
    %2663 = vmatpush1.msra.mxu0 0.0
    %2664 = vmatprep.subr.mxu0 0.0
    %2665 = vmatpush1.msra.mxu0 0.0
    %2666 = vmatprep.subr.mxu0 0.0
    %2667 = vmatpush1.msra.mxu0 0.0
    %2668 = vmatprep.subr.mxu0 0.0
    %2669 = vmatpush1.msra.mxu0 0.0
    %2670 = vmatprep.subr.mxu0 0.0
    %2671 = vmatpush1.msra.mxu0 0.0
    %2672 = vmatprep.subr.mxu0 0.0
    %2673 = vmatpush1.msra.mxu0 0.0
    %2674 = vmatprep.subr.mxu0 0.0
    %2675 = vmatpush1.msra.mxu0 0.0
    %2676 = vmatprep.subr.mxu0 0.0
    %2677 = vmatpush1.msra.mxu0 0.0
    %2678 = vmatprep.subr.mxu0 0.0
    %2679 = vmatpush1.msra.mxu0 0.0
    %2680 = vmatprep.subr.mxu0 0.0
    %2681 = vmatpush1.msra.mxu0 %v622
    %2682 = vmatprep.subr.mxu0 0.0
    %2683 = vmatpush1.msra.mxu0 %v621
    %2684 = vmatprep.subr.mxu0 0.0
    %2685 = vmatpush1.msra.mxu0 %v620
    %2686 = vmatprep.subr.mxu0 0.0
    %2687 = vmatpush1.msra.mxu0 %v619
    %2688 = vmatprep.subr.mxu0 0.0
    %2689 = vmatpush2.msra.mxu0 0.0
    %2690 = vmatprep.subr.mxu0 0.0
    %2691 = vmatpush2.msra.mxu0 0.0
    %2692 = vmatprep.subr.mxu0 0.0
    %2693 = vmatpush2.msra.mxu0 0.0
    %2694 = vmatprep.subr.mxu0 0.0
    %2695 = vmatpush2.msra.mxu0 0.0
    %2696 = vmatprep.subr.mxu0 0.0
    %2697 = vmatpush2.msra.mxu0 0.0
    %2698 = vmatprep.subr.mxu0 0.0
    %2699 = vmatpush2.msra.mxu0 0.0
    %2700 = vmatprep.subr.mxu0 0.0
    %2701 = vmatpush2.msra.mxu0 0.0
    %2702 = vmatprep.subr.mxu0 0.0
    %2703 = vmatpush2.msra.mxu0 0.0
    %2704 = vmatprep.subr.mxu0 0.0
    %2705 = vmatpush2.msra.mxu0 0.0
    %2706 = vmatprep.subr.mxu0 0.0
    %2707 = vmatpush2.msra.mxu0 0.0
    %2708 = vmatprep.subr.mxu0 0.0
    %2709 = vmatpush2.msra.mxu0 0.0
    %2710 = vmatprep.subr.mxu0 0.0
    %2711 = vmatpush2.msra.mxu0 0.0
    %2712 = vmatprep.subr.mxu0 0.0
    %2713 = vmatpush2.msra.mxu0 0.0
    %2714 = vmatprep.subr.mxu0 0.0
    %2715 = vmatpush2.msra.mxu0 0.0
    %2716 = vmatprep.subr.mxu0 0.0
    %2717 = vmatpush2.msra.mxu0 0.0
    %2718 = vmatprep.subr.mxu0 0.0
    %2719 = vmatpush2.msra.mxu0 0.0
    %2720 = vmatprep.mubr.f32.mxu0 0.0
    %2721 = vmatmul.mubr.f32.gmra.mxu0 %v2584
    %v2722 = vpop.f32.mrf.mxu0
    %v2723 = vadd.f32 0.0, %v2722
    %v2724 = vpop.f32.mrf.mxu0
    %2725 = vdwg.mxu0
    %v2727 = vlaneseq
    %v2728 = vshrl.u32 %v2727, 7
    %v2729 = vsub.s32 0, %v2728
    %v2730 = vrot.slane %v628, %v2729
    %2732 = vmatprep.subr.mxu0 0.0
    %2733 = vmatpush1.msra.mxu0 0.0
    %2734 = vmatprep.subr.mxu0 0.0
    %2735 = vmatpush1.msra.mxu0 0.0
    %2736 = vmatprep.subr.mxu0 0.0
    %2737 = vmatpush1.msra.mxu0 0.0
    %2738 = vmatprep.subr.mxu0 0.0
    %2739 = vmatpush1.msra.mxu0 0.0
    %2740 = vmatprep.subr.mxu0 0.0
    %2741 = vmatpush1.msra.mxu0 0.0
    %2742 = vmatprep.subr.mxu0 0.0
    %2743 = vmatpush1.msra.mxu0 0.0
    %2744 = vmatprep.subr.mxu0 0.0
    %2745 = vmatpush1.msra.mxu0 0.0
    %2746 = vmatprep.subr.mxu0 0.0
    %2747 = vmatpush1.msra.mxu0 0.0
    %2748 = vmatprep.subr.mxu0 0.0
    %2749 = vmatpush1.msra.mxu0 0.0
    %2750 = vmatprep.subr.mxu0 0.0
    %2751 = vmatpush1.msra.mxu0 0.0
    %2752 = vmatprep.subr.mxu0 0.0
    %2753 = vmatpush1.msra.mxu0 0.0
    %2754 = vmatprep.subr.mxu0 0.0
    %2755 = vmatpush1.msra.mxu0 0.0
    %2756 = vmatprep.subr.mxu0 0.0
    %2757 = vmatpush1.msra.mxu0 %v626
    %2758 = vmatprep.subr.mxu0 0.0
    %2759 = vmatpush1.msra.mxu0 %v625
    %2760 = vmatprep.subr.mxu0 0.0
    %2761 = vmatpush1.msra.mxu0 %v624
    %2762 = vmatprep.subr.mxu0 0.0
    %2763 = vmatpush1.msra.mxu0 %v623
    %2764 = vmatprep.subr.mxu0 0.0
    %2765 = vmatpush2.msra.mxu0 0.0
    %2766 = vmatprep.subr.mxu0 0.0
    %2767 = vmatpush2.msra.mxu0 0.0
    %2768 = vmatprep.subr.mxu0 0.0
    %2769 = vmatpush2.msra.mxu0 0.0
    %2770 = vmatprep.subr.mxu0 0.0
    %2771 = vmatpush2.msra.mxu0 0.0
    %2772 = vmatprep.subr.mxu0 0.0
    %2773 = vmatpush2.msra.mxu0 0.0
    %2774 = vmatprep.subr.mxu0 0.0
    %2775 = vmatpush2.msra.mxu0 0.0
    %2776 = vmatprep.subr.mxu0 0.0
    %2777 = vmatpush2.msra.mxu0 0.0
    %2778 = vmatprep.subr.mxu0 0.0
    %2779 = vmatpush2.msra.mxu0 0.0
    %2780 = vmatprep.subr.mxu0 0.0
    %2781 = vmatpush2.msra.mxu0 0.0
    %2782 = vmatprep.subr.mxu0 0.0
    %2783 = vmatpush2.msra.mxu0 0.0
    %2784 = vmatprep.subr.mxu0 0.0
    %2785 = vmatpush2.msra.mxu0 0.0
    %2786 = vmatprep.subr.mxu0 0.0
    %2787 = vmatpush2.msra.mxu0 0.0
    %2788 = vmatprep.subr.mxu0 0.0
    %2789 = vmatpush2.msra.mxu0 0.0
    %2790 = vmatprep.subr.mxu0 0.0
    %2791 = vmatpush2.msra.mxu0 0.0
    %2792 = vmatprep.subr.mxu0 0.0
    %2793 = vmatpush2.msra.mxu0 0.0
    %2794 = vmatprep.subr.mxu0 0.0
    %2795 = vmatpush2.msra.mxu0 0.0
    %2796 = vmatprep.mubr.f32.mxu0 0.0
    %2797 = vmatmul.mubr.f32.gmra.mxu0 %v2584
    %v2798 = vpop.f32.mrf.mxu0
    %v2799 = vadd.f32 %v2730, %v2798
    %v2800 = vpop.f32.mrf.mxu0
    %2801 = vdwg.mxu0
    %v2802 = vadd.f32 %v423, %v2653
    %v2803 = vxor.u32 %v2802, 2147483648
    %v2804 = vmul.f32 %v2803, 1.442695
    %v2805 = vpow.pop %v2804
    %v2806 = vadd.f32 %v2805, 1.0
    %v2807 = vrcp.pop %v2806
    %v2808 = vmul.f32 1.0, %v2807
    %v2809 = vadd.f32 %v509, %v2723
    %v2810 = vxor.u32 %v2809, 2147483648
    %v2811 = vmul.f32 %v2810, 1.442695
    %v2812 = vpow.pop %v2811
    %v2813 = vadd.f32 %v2812, 1.0
    %v2814 = vrcp.pop %v2813
    %v2815 = vmul.f32 1.0, %v2814
    %v2816 = vmul.f32 %v2808, %v2799
    %v2817 = vadd.f32 %v595, %v2816
    %v2818 = vtanh.pop %v2817
    %v2819 = vsub.f32 1.0, %v2815
    %v2820 = vmul.f32 %v2819, %v2818
    %v2822 = vmul.f32 %v2815, %v2583
    %v2823 = vadd.f32 %v2820, %v2822
    %v2825 = vsel %vm629, %v2823, 0
    %2827 = vmatprep.subr.mxu0 0.0
    %2828 = vmatpush1.msra.mxu0 0.0
    %2829 = vmatprep.subr.mxu0 0.0
    %2830 = vmatpush1.msra.mxu0 0.0
    %2831 = vmatprep.subr.mxu0 0.0
    %2832 = vmatpush1.msra.mxu0 0.0
    %2833 = vmatprep.subr.mxu0 0.0
    %2834 = vmatpush1.msra.mxu0 0.0
    %2835 = vmatprep.subr.mxu0 0.0
    %2836 = vmatpush1.msra.mxu0 0.0
    %2837 = vmatprep.subr.mxu0 0.0
    %2838 = vmatpush1.msra.mxu0 0.0
    %2839 = vmatprep.subr.mxu0 0.0
    %2840 = vmatpush1.msra.mxu0 0.0
    %2841 = vmatprep.subr.mxu0 0.0
    %2842 = vmatpush1.msra.mxu0 0.0
    %2843 = vmatprep.subr.mxu0 0.0
    %2844 = vmatpush1.msra.mxu0 0.0
    %2845 = vmatprep.subr.mxu0 0.0
    %2846 = vmatpush1.msra.mxu0 0.0
    %2847 = vmatprep.subr.mxu0 0.0
    %2848 = vmatpush1.msra.mxu0 0.0
    %2849 = vmatprep.subr.mxu0 0.0
    %2850 = vmatpush1.msra.mxu0 0.0
    %2851 = vmatprep.subr.mxu0 0.0
    %2852 = vmatpush1.msra.mxu0 %v618
    %2853 = vmatprep.subr.mxu0 0.0
    %2854 = vmatpush1.msra.mxu0 %v617
    %2855 = vmatprep.subr.mxu0 0.0
    %2856 = vmatpush1.msra.mxu0 %v616
    %2857 = vmatprep.subr.mxu0 0.0
    %2858 = vmatpush1.msra.mxu0 %v615
    %2859 = vmatprep.subr.mxu0 0.0
    %2860 = vmatpush2.msra.mxu0 0.0
    %2861 = vmatprep.subr.mxu0 0.0
    %2862 = vmatpush2.msra.mxu0 0.0
    %2863 = vmatprep.subr.mxu0 0.0
    %2864 = vmatpush2.msra.mxu0 0.0
    %2865 = vmatprep.subr.mxu0 0.0
    %2866 = vmatpush2.msra.mxu0 0.0
    %2867 = vmatprep.subr.mxu0 0.0
    %2868 = vmatpush2.msra.mxu0 0.0
    %2869 = vmatprep.subr.mxu0 0.0
    %2870 = vmatpush2.msra.mxu0 0.0
    %2871 = vmatprep.subr.mxu0 0.0
    %2872 = vmatpush2.msra.mxu0 0.0
    %2873 = vmatprep.subr.mxu0 0.0
    %2874 = vmatpush2.msra.mxu0 0.0
    %2875 = vmatprep.subr.mxu0 0.0
    %2876 = vmatpush2.msra.mxu0 0.0
    %2877 = vmatprep.subr.mxu0 0.0
    %2878 = vmatpush2.msra.mxu0 0.0
    %2879 = vmatprep.subr.mxu0 0.0
    %2880 = vmatpush2.msra.mxu0 0.0
    %2881 = vmatprep.subr.mxu0 0.0
    %2882 = vmatpush2.msra.mxu0 0.0
    %2883 = vmatprep.subr.mxu0 0.0
    %2884 = vmatpush2.msra.mxu0 0.0
    %2885 = vmatprep.subr.mxu0 0.0
    %2886 = vmatpush2.msra.mxu0 0.0
    %2887 = vmatprep.subr.mxu0 0.0
    %2888 = vmatpush2.msra.mxu0 0.0
    %2889 = vmatprep.subr.mxu0 0.0
    %2890 = vmatpush2.msra.mxu0 0.0
    %2891 = vmatprep.mubr.f32.mxu0 0.0
    %2892 = vmatmul.mubr.f32.gmra.mxu0 %v2825
    %v2893 = vpop.f32.mrf.mxu0
    %v2894 = vadd.f32 0.0, %v2893
    %v2895 = vpop.f32.mrf.mxu0
    %2896 = vdwg.mxu0
    %2897 = vmatprep.subr.mxu0 0.0
    %2898 = vmatpush1.msra.mxu0 0.0
    %2899 = vmatprep.subr.mxu0 0.0
    %2900 = vmatpush1.msra.mxu0 0.0
    %2901 = vmatprep.subr.mxu0 0.0
    %2902 = vmatpush1.msra.mxu0 0.0
    %2903 = vmatprep.subr.mxu0 0.0
    %2904 = vmatpush1.msra.mxu0 0.0
    %2905 = vmatprep.subr.mxu0 0.0
    %2906 = vmatpush1.msra.mxu0 0.0
    %2907 = vmatprep.subr.mxu0 0.0
    %2908 = vmatpush1.msra.mxu0 0.0
    %2909 = vmatprep.subr.mxu0 0.0
    %2910 = vmatpush1.msra.mxu0 0.0
    %2911 = vmatprep.subr.mxu0 0.0
    %2912 = vmatpush1.msra.mxu0 0.0
    %2913 = vmatprep.subr.mxu0 0.0
    %2914 = vmatpush1.msra.mxu0 0.0
    %2915 = vmatprep.subr.mxu0 0.0
    %2916 = vmatpush1.msra.mxu0 0.0
    %2917 = vmatprep.subr.mxu0 0.0
    %2918 = vmatpush1.msra.mxu0 0.0
    %2919 = vmatprep.subr.mxu0 0.0
    %2920 = vmatpush1.msra.mxu0 0.0
    %2921 = vmatprep.subr.mxu0 0.0
    %2922 = vmatpush1.msra.mxu0 %v622
    %2923 = vmatprep.subr.mxu0 0.0
    %2924 = vmatpush1.msra.mxu0 %v621
    %2925 = vmatprep.subr.mxu0 0.0
    %2926 = vmatpush1.msra.mxu0 %v620
    %2927 = vmatprep.subr.mxu0 0.0
    %2928 = vmatpush1.msra.mxu0 %v619
    %2929 = vmatprep.subr.mxu0 0.0
    %2930 = vmatpush2.msra.mxu0 0.0
    %2931 = vmatprep.subr.mxu0 0.0
    %2932 = vmatpush2.msra.mxu0 0.0
    %2933 = vmatprep.subr.mxu0 0.0
    %2934 = vmatpush2.msra.mxu0 0.0
    %2935 = vmatprep.subr.mxu0 0.0
    %2936 = vmatpush2.msra.mxu0 0.0
    %2937 = vmatprep.subr.mxu0 0.0
    %2938 = vmatpush2.msra.mxu0 0.0
    %2939 = vmatprep.subr.mxu0 0.0
    %2940 = vmatpush2.msra.mxu0 0.0
    %2941 = vmatprep.subr.mxu0 0.0
    %2942 = vmatpush2.msra.mxu0 0.0
    %2943 = vmatprep.subr.mxu0 0.0
    %2944 = vmatpush2.msra.mxu0 0.0
    %2945 = vmatprep.subr.mxu0 0.0
    %2946 = vmatpush2.msra.mxu0 0.0
    %2947 = vmatprep.subr.mxu0 0.0
    %2948 = vmatpush2.msra.mxu0 0.0
    %2949 = vmatprep.subr.mxu0 0.0
    %2950 = vmatpush2.msra.mxu0 0.0
    %2951 = vmatprep.subr.mxu0 0.0
    %2952 = vmatpush2.msra.mxu0 0.0
    %2953 = vmatprep.subr.mxu0 0.0
    %2954 = vmatpush2.msra.mxu0 0.0
    %2955 = vmatprep.subr.mxu0 0.0
    %2956 = vmatpush2.msra.mxu0 0.0
    %2957 = vmatprep.subr.mxu0 0.0
    %2958 = vmatpush2.msra.mxu0 0.0
    %2959 = vmatprep.subr.mxu0 0.0
    %2960 = vmatpush2.msra.mxu0 0.0
    %2961 = vmatprep.mubr.f32.mxu0 0.0
    %2962 = vmatmul.mubr.f32.gmra.mxu0 %v2825
    %v2963 = vpop.f32.mrf.mxu0
    %v2964 = vadd.f32 0.0, %v2963
    %v2965 = vpop.f32.mrf.mxu0
    %2966 = vdwg.mxu0
    %2967 = vmatprep.subr.mxu0 0.0
    %2968 = vmatpush1.msra.mxu0 0.0
    %2969 = vmatprep.subr.mxu0 0.0
    %2970 = vmatpush1.msra.mxu0 0.0
    %2971 = vmatprep.subr.mxu0 0.0
    %2972 = vmatpush1.msra.mxu0 0.0
    %2973 = vmatprep.subr.mxu0 0.0
    %2974 = vmatpush1.msra.mxu0 0.0
    %2975 = vmatprep.subr.mxu0 0.0
    %2976 = vmatpush1.msra.mxu0 0.0
    %2977 = vmatprep.subr.mxu0 0.0
    %2978 = vmatpush1.msra.mxu0 0.0
    %2979 = vmatprep.subr.mxu0 0.0
    %2980 = vmatpush1.msra.mxu0 0.0
    %2981 = vmatprep.subr.mxu0 0.0
    %2982 = vmatpush1.msra.mxu0 0.0
    %2983 = vmatprep.subr.mxu0 0.0
    %2984 = vmatpush1.msra.mxu0 0.0
    %2985 = vmatprep.subr.mxu0 0.0
    %2986 = vmatpush1.msra.mxu0 0.0
    %2987 = vmatprep.subr.mxu0 0.0
    %2988 = vmatpush1.msra.mxu0 0.0
    %2989 = vmatprep.subr.mxu0 0.0
    %2990 = vmatpush1.msra.mxu0 0.0
    %2991 = vmatprep.subr.mxu0 0.0
    %2992 = vmatpush1.msra.mxu0 %v626
    %2993 = vmatprep.subr.mxu0 0.0
    %2994 = vmatpush1.msra.mxu0 %v625
    %2995 = vmatprep.subr.mxu0 0.0
    %2996 = vmatpush1.msra.mxu0 %v624
    %2997 = vmatprep.subr.mxu0 0.0
    %2998 = vmatpush1.msra.mxu0 %v623
    %2999 = vmatprep.subr.mxu0 0.0
    %3000 = vmatpush2.msra.mxu0 0.0
    %3001 = vmatprep.subr.mxu0 0.0
    %3002 = vmatpush2.msra.mxu0 0.0
    %3003 = vmatprep.subr.mxu0 0.0
    %3004 = vmatpush2.msra.mxu0 0.0
    %3005 = vmatprep.subr.mxu0 0.0
    %3006 = vmatpush2.msra.mxu0 0.0
    %3007 = vmatprep.subr.mxu0 0.0
    %3008 = vmatpush2.msra.mxu0 0.0
    %3009 = vmatprep.subr.mxu0 0.0
    %3010 = vmatpush2.msra.mxu0 0.0
    %3011 = vmatprep.subr.mxu0 0.0
    %3012 = vmatpush2.msra.mxu0 0.0
    %3013 = vmatprep.subr.mxu0 0.0
    %3014 = vmatpush2.msra.mxu0 0.0
    %3015 = vmatprep.subr.mxu0 0.0
    %3016 = vmatpush2.msra.mxu0 0.0
    %3017 = vmatprep.subr.mxu0 0.0
    %3018 = vmatpush2.msra.mxu0 0.0
    %3019 = vmatprep.subr.mxu0 0.0
    %3020 = vmatpush2.msra.mxu0 0.0
    %3021 = vmatprep.subr.mxu0 0.0
    %3022 = vmatpush2.msra.mxu0 0.0
    %3023 = vmatprep.subr.mxu0 0.0
    %3024 = vmatpush2.msra.mxu0 0.0
    %3025 = vmatprep.subr.mxu0 0.0
    %3026 = vmatpush2.msra.mxu0 0.0
    %3027 = vmatprep.subr.mxu0 0.0
    %3028 = vmatpush2.msra.mxu0 0.0
    %3029 = vmatprep.subr.mxu0 0.0
    %3030 = vmatpush2.msra.mxu0 0.0
    %3031 = vmatprep.mubr.f32.mxu0 0.0
    %3032 = vmatmul.mubr.f32.gmra.mxu0 %v2825
    %v3033 = vpop.f32.mrf.mxu0
    %v3034 = vadd.f32 %v2730, %v3033
    %v3035 = vpop.f32.mrf.mxu0
    %3036 = vdwg.mxu0
    %v3038 = vrot.slane %v2894, 6
    %v3040 = vadd.f32 %v423, %v3038
    %v3041 = vxor.u32 %v3040, 2147483648
    %v3042 = vmul.f32 %v3041, 1.442695
    %v3043 = vpow.pop %v3042
    %v3044 = vadd.f32 %v3043, 1.0
    %v3045 = vrcp.pop %v3044
    %v3046 = vmul.f32 1.0, %v3045
    %v3048 = vrot.slane %v2964, 6
    %v3050 = vadd.f32 %v509, %v3048
    %v3051 = vxor.u32 %v3050, 2147483648
    %v3052 = vmul.f32 %v3051, 1.442695
    %v3053 = vpow.pop %v3052
    %v3054 = vadd.f32 %v3053, 1.0
    %v3055 = vrcp.pop %v3054
    %v3056 = vmul.f32 1.0, %v3055
    %v3058 = vrot.slane %v3034, 6
    %v3060 = vmul.f32 %v3046, %v3058
    %v3061 = vadd.f32 %v595, %v3060
    %v3062 = vtanh.pop %v3061
    %v3063 = vsub.f32 1.0, %v3056
    %v3064 = vmul.f32 %v3063, %v3062
    %v3065 = vrot.slane %v2823, 6
    %v3067 = vmul.f32 %v3056, %v3065
    %v3068 = vadd.f32 %v3064, %v3067
    %v3070 = vrot.slane %v3068, 2
    %v3071 = vsel %vm629, %v3070, 0
    %3073 = vmatprep.subr.mxu0 0.0
    %3074 = vmatpush1.msra.mxu0 0.0
    %3075 = vmatprep.subr.mxu0 0.0
    %3076 = vmatpush1.msra.mxu0 0.0
    %3077 = vmatprep.subr.mxu0 0.0
    %3078 = vmatpush1.msra.mxu0 0.0
    %3079 = vmatprep.subr.mxu0 0.0
    %3080 = vmatpush1.msra.mxu0 0.0
    %3081 = vmatprep.subr.mxu0 0.0
    %3082 = vmatpush1.msra.mxu0 0.0
    %3083 = vmatprep.subr.mxu0 0.0
    %3084 = vmatpush1.msra.mxu0 0.0
    %3085 = vmatprep.subr.mxu0 0.0
    %3086 = vmatpush1.msra.mxu0 0.0
    %3087 = vmatprep.subr.mxu0 0.0
    %3088 = vmatpush1.msra.mxu0 0.0
    %3089 = vmatprep.subr.mxu0 0.0
    %3090 = vmatpush1.msra.mxu0 0.0
    %3091 = vmatprep.subr.mxu0 0.0
    %3092 = vmatpush1.msra.mxu0 0.0
    %3093 = vmatprep.subr.mxu0 0.0
    %3094 = vmatpush1.msra.mxu0 0.0
    %3095 = vmatprep.subr.mxu0 0.0
    %3096 = vmatpush1.msra.mxu0 0.0
    %3097 = vmatprep.subr.mxu0 0.0
    %3098 = vmatpush1.msra.mxu0 %v618
    %3099 = vmatprep.subr.mxu0 0.0
    %3100 = vmatpush1.msra.mxu0 %v617
    %3101 = vmatprep.subr.mxu0 0.0
    %3102 = vmatpush1.msra.mxu0 %v616
    %3103 = vmatprep.subr.mxu0 0.0
    %3104 = vmatpush1.msra.mxu0 %v615
    %3105 = vmatprep.subr.mxu0 0.0
    %3106 = vmatpush2.msra.mxu0 0.0
    %3107 = vmatprep.subr.mxu0 0.0
    %3108 = vmatpush2.msra.mxu0 0.0
    %3109 = vmatprep.subr.mxu0 0.0
    %3110 = vmatpush2.msra.mxu0 0.0
    %3111 = vmatprep.subr.mxu0 0.0
    %3112 = vmatpush2.msra.mxu0 0.0
    %3113 = vmatprep.subr.mxu0 0.0
    %3114 = vmatpush2.msra.mxu0 0.0
    %3115 = vmatprep.subr.mxu0 0.0
    %3116 = vmatpush2.msra.mxu0 0.0
    %3117 = vmatprep.subr.mxu0 0.0
    %3118 = vmatpush2.msra.mxu0 0.0
    %3119 = vmatprep.subr.mxu0 0.0
    %3120 = vmatpush2.msra.mxu0 0.0
    %3121 = vmatprep.subr.mxu0 0.0
    %3122 = vmatpush2.msra.mxu0 0.0
    %3123 = vmatprep.subr.mxu0 0.0
    %3124 = vmatpush2.msra.mxu0 0.0
    %3125 = vmatprep.subr.mxu0 0.0
    %3126 = vmatpush2.msra.mxu0 0.0
    %3127 = vmatprep.subr.mxu0 0.0
    %3128 = vmatpush2.msra.mxu0 0.0
    %3129 = vmatprep.subr.mxu0 0.0
    %3130 = vmatpush2.msra.mxu0 0.0
    %3131 = vmatprep.subr.mxu0 0.0
    %3132 = vmatpush2.msra.mxu0 0.0
    %3133 = vmatprep.subr.mxu0 0.0
    %3134 = vmatpush2.msra.mxu0 0.0
    %3135 = vmatprep.subr.mxu0 0.0
    %3136 = vmatpush2.msra.mxu0 0.0
    %3137 = vmatprep.mubr.f32.mxu0 0.0
    %3138 = vmatmul.mubr.f32.gmra.mxu0 %v3071
    %v3139 = vpop.f32.mrf.mxu0
    %v3140 = vadd.f32 0.0, %v3139
    %v3141 = vpop.f32.mrf.mxu0
    %3142 = vdwg.mxu0
    %3143 = vmatprep.subr.mxu0 0.0
    %3144 = vmatpush1.msra.mxu0 0.0
    %3145 = vmatprep.subr.mxu0 0.0
    %3146 = vmatpush1.msra.mxu0 0.0
    %3147 = vmatprep.subr.mxu0 0.0
    %3148 = vmatpush1.msra.mxu0 0.0
    %3149 = vmatprep.subr.mxu0 0.0
    %3150 = vmatpush1.msra.mxu0 0.0
    %3151 = vmatprep.subr.mxu0 0.0
    %3152 = vmatpush1.msra.mxu0 0.0
    %3153 = vmatprep.subr.mxu0 0.0
    %3154 = vmatpush1.msra.mxu0 0.0
    %3155 = vmatprep.subr.mxu0 0.0
    %3156 = vmatpush1.msra.mxu0 0.0
    %3157 = vmatprep.subr.mxu0 0.0
    %3158 = vmatpush1.msra.mxu0 0.0
    %3159 = vmatprep.subr.mxu0 0.0
    %3160 = vmatpush1.msra.mxu0 0.0
    %3161 = vmatprep.subr.mxu0 0.0
    %3162 = vmatpush1.msra.mxu0 0.0
    %3163 = vmatprep.subr.mxu0 0.0
    %3164 = vmatpush1.msra.mxu0 0.0
    %3165 = vmatprep.subr.mxu0 0.0
    %3166 = vmatpush1.msra.mxu0 0.0
    %3167 = vmatprep.subr.mxu0 0.0
    %3168 = vmatpush1.msra.mxu0 %v622
    %3169 = vmatprep.subr.mxu0 0.0
    %3170 = vmatpush1.msra.mxu0 %v621
    %3171 = vmatprep.subr.mxu0 0.0
    %3172 = vmatpush1.msra.mxu0 %v620
    %3173 = vmatprep.subr.mxu0 0.0
    %3174 = vmatpush1.msra.mxu0 %v619
    %3175 = vmatprep.subr.mxu0 0.0
    %3176 = vmatpush2.msra.mxu0 0.0
    %3177 = vmatprep.subr.mxu0 0.0
    %3178 = vmatpush2.msra.mxu0 0.0
    %3179 = vmatprep.subr.mxu0 0.0
    %3180 = vmatpush2.msra.mxu0 0.0
    %3181 = vmatprep.subr.mxu0 0.0
    %3182 = vmatpush2.msra.mxu0 0.0
    %3183 = vmatprep.subr.mxu0 0.0
    %3184 = vmatpush2.msra.mxu0 0.0
    %3185 = vmatprep.subr.mxu0 0.0
    %3186 = vmatpush2.msra.mxu0 0.0
    %3187 = vmatprep.subr.mxu0 0.0
    %3188 = vmatpush2.msra.mxu0 0.0
    %3189 = vmatprep.subr.mxu0 0.0
    %3190 = vmatpush2.msra.mxu0 0.0
    %3191 = vmatprep.subr.mxu0 0.0
    %3192 = vmatpush2.msra.mxu0 0.0
    %3193 = vmatprep.subr.mxu0 0.0
    %3194 = vmatpush2.msra.mxu0 0.0
    %3195 = vmatprep.subr.mxu0 0.0
    %3196 = vmatpush2.msra.mxu0 0.0
    %3197 = vmatprep.subr.mxu0 0.0
    %3198 = vmatpush2.msra.mxu0 0.0
    %3199 = vmatprep.subr.mxu0 0.0
    %3200 = vmatpush2.msra.mxu0 0.0
    %3201 = vmatprep.subr.mxu0 0.0
    %3202 = vmatpush2.msra.mxu0 0.0
    %3203 = vmatprep.subr.mxu0 0.0
    %3204 = vmatpush2.msra.mxu0 0.0
    %3205 = vmatprep.subr.mxu0 0.0
    %3206 = vmatpush2.msra.mxu0 0.0
    %3207 = vmatprep.mubr.f32.mxu0 0.0
    %3208 = vmatmul.mubr.f32.gmra.mxu0 %v3071
    %v3209 = vpop.f32.mrf.mxu0
    %v3210 = vadd.f32 0.0, %v3209
    %v3211 = vpop.f32.mrf.mxu0
    %3212 = vdwg.mxu0
    %3213 = vmatprep.subr.mxu0 0.0
    %3214 = vmatpush1.msra.mxu0 0.0
    %3215 = vmatprep.subr.mxu0 0.0
    %3216 = vmatpush1.msra.mxu0 0.0
    %3217 = vmatprep.subr.mxu0 0.0
    %3218 = vmatpush1.msra.mxu0 0.0
    %3219 = vmatprep.subr.mxu0 0.0
    %3220 = vmatpush1.msra.mxu0 0.0
    %3221 = vmatprep.subr.mxu0 0.0
    %3222 = vmatpush1.msra.mxu0 0.0
    %3223 = vmatprep.subr.mxu0 0.0
    %3224 = vmatpush1.msra.mxu0 0.0
    %3225 = vmatprep.subr.mxu0 0.0
    %3226 = vmatpush1.msra.mxu0 0.0
    %3227 = vmatprep.subr.mxu0 0.0
    %3228 = vmatpush1.msra.mxu0 0.0
    %3229 = vmatprep.subr.mxu0 0.0
    %3230 = vmatpush1.msra.mxu0 0.0
    %3231 = vmatprep.subr.mxu0 0.0
    %3232 = vmatpush1.msra.mxu0 0.0
    %3233 = vmatprep.subr.mxu0 0.0
    %3234 = vmatpush1.msra.mxu0 0.0
    %3235 = vmatprep.subr.mxu0 0.0
    %3236 = vmatpush1.msra.mxu0 0.0
    %3237 = vmatprep.subr.mxu0 0.0
    %3238 = vmatpush1.msra.mxu0 %v626
    %3239 = vmatprep.subr.mxu0 0.0
    %3240 = vmatpush1.msra.mxu0 %v625
    %3241 = vmatprep.subr.mxu0 0.0
    %3242 = vmatpush1.msra.mxu0 %v624
    %3243 = vmatprep.subr.mxu0 0.0
    %3244 = vmatpush1.msra.mxu0 %v623
    %3245 = vmatprep.subr.mxu0 0.0
    %3246 = vmatpush2.msra.mxu0 0.0
    %3247 = vmatprep.subr.mxu0 0.0
    %3248 = vmatpush2.msra.mxu0 0.0
    %3249 = vmatprep.subr.mxu0 0.0
    %3250 = vmatpush2.msra.mxu0 0.0
    %3251 = vmatprep.subr.mxu0 0.0
    %3252 = vmatpush2.msra.mxu0 0.0
    %3253 = vmatprep.subr.mxu0 0.0
    %3254 = vmatpush2.msra.mxu0 0.0
    %3255 = vmatprep.subr.mxu0 0.0
    %3256 = vmatpush2.msra.mxu0 0.0
    %3257 = vmatprep.subr.mxu0 0.0
    %3258 = vmatpush2.msra.mxu0 0.0
    %3259 = vmatprep.subr.mxu0 0.0
    %3260 = vmatpush2.msra.mxu0 0.0
    %3261 = vmatprep.subr.mxu0 0.0
    %3262 = vmatpush2.msra.mxu0 0.0
    %3263 = vmatprep.subr.mxu0 0.0
    %3264 = vmatpush2.msra.mxu0 0.0
    %3265 = vmatprep.subr.mxu0 0.0
    %3266 = vmatpush2.msra.mxu0 0.0
    %3267 = vmatprep.subr.mxu0 0.0
    %3268 = vmatpush2.msra.mxu0 0.0
    %3269 = vmatprep.subr.mxu0 0.0
    %3270 = vmatpush2.msra.mxu0 0.0
    %3271 = vmatprep.subr.mxu0 0.0
    %3272 = vmatpush2.msra.mxu0 0.0
    %3273 = vmatprep.subr.mxu0 0.0
    %3274 = vmatpush2.msra.mxu0 0.0
    %3275 = vmatprep.subr.mxu0 0.0
    %3276 = vmatpush2.msra.mxu0 0.0
    %3277 = vmatprep.mubr.f32.mxu0 0.0
    %3278 = vmatmul.mubr.f32.gmra.mxu0 %v3071
    %v3279 = vpop.f32.mrf.mxu0
    %v3280 = vadd.f32 %v2730, %v3279
    %v3281 = vpop.f32.mrf.mxu0
    %3282 = vdwg.mxu0
    %v3284 = vrot.slane %v3140, 4
    %v3286 = vadd.f32 %v423, %v3284
    %v3287 = vxor.u32 %v3286, 2147483648
    %v3288 = vmul.f32 %v3287, 1.442695
    %v3289 = vpow.pop %v3288
    %v3290 = vadd.f32 %v3289, 1.0
    %v3291 = vrcp.pop %v3290
    %v3292 = vmul.f32 1.0, %v3291
    %v3294 = vrot.slane %v3210, 4
    %v3296 = vadd.f32 %v509, %v3294
    %v3297 = vxor.u32 %v3296, 2147483648
    %v3298 = vmul.f32 %v3297, 1.442695
    %v3299 = vpow.pop %v3298
    %v3300 = vadd.f32 %v3299, 1.0
    %v3301 = vrcp.pop %v3300
    %v3302 = vmul.f32 1.0, %v3301
    %v3304 = vrot.slane %v3280, 4
    %v3306 = vmul.f32 %v3292, %v3304
    %v3307 = vadd.f32 %v595, %v3306
    %v3308 = vtanh.pop %v3307
    %v3309 = vsub.f32 1.0, %v3302
    %v3310 = vmul.f32 %v3309, %v3308
    %v3311 = vrot.slane %v3068, 6
    %v3313 = vmul.f32 %v3302, %v3311
    %v3314 = vadd.f32 %v3310, %v3313
    %v3316 = vrot.slane %v3314, 4
    %v3317 = vsel %vm629, %v3316, 0
    %3319 = vmatprep.subr.mxu0 0.0
    %3320 = vmatpush1.msra.mxu0 0.0
    %3321 = vmatprep.subr.mxu0 0.0
    %3322 = vmatpush1.msra.mxu0 0.0
    %3323 = vmatprep.subr.mxu0 0.0
    %3324 = vmatpush1.msra.mxu0 0.0
    %3325 = vmatprep.subr.mxu0 0.0
    %3326 = vmatpush1.msra.mxu0 0.0
    %3327 = vmatprep.subr.mxu0 0.0
    %3328 = vmatpush1.msra.mxu0 0.0
    %3329 = vmatprep.subr.mxu0 0.0
    %3330 = vmatpush1.msra.mxu0 0.0
    %3331 = vmatprep.subr.mxu0 0.0
    %3332 = vmatpush1.msra.mxu0 0.0
    %3333 = vmatprep.subr.mxu0 0.0
    %3334 = vmatpush1.msra.mxu0 0.0
    %3335 = vmatprep.subr.mxu0 0.0
    %3336 = vmatpush1.msra.mxu0 0.0
    %3337 = vmatprep.subr.mxu0 0.0
    %3338 = vmatpush1.msra.mxu0 0.0
    %3339 = vmatprep.subr.mxu0 0.0
    %3340 = vmatpush1.msra.mxu0 0.0
    %3341 = vmatprep.subr.mxu0 0.0
    %3342 = vmatpush1.msra.mxu0 0.0
    %3343 = vmatprep.subr.mxu0 0.0
    %3344 = vmatpush1.msra.mxu0 %v618
    %3345 = vmatprep.subr.mxu0 0.0
    %3346 = vmatpush1.msra.mxu0 %v617
    %3347 = vmatprep.subr.mxu0 0.0
    %3348 = vmatpush1.msra.mxu0 %v616
    %3349 = vmatprep.subr.mxu0 0.0
    %3350 = vmatpush1.msra.mxu0 %v615
    %3351 = vmatprep.subr.mxu0 0.0
    %3352 = vmatpush2.msra.mxu0 0.0
    %3353 = vmatprep.subr.mxu0 0.0
    %3354 = vmatpush2.msra.mxu0 0.0
    %3355 = vmatprep.subr.mxu0 0.0
    %3356 = vmatpush2.msra.mxu0 0.0
    %3357 = vmatprep.subr.mxu0 0.0
    %3358 = vmatpush2.msra.mxu0 0.0
    %3359 = vmatprep.subr.mxu0 0.0
    %3360 = vmatpush2.msra.mxu0 0.0
    %3361 = vmatprep.subr.mxu0 0.0
    %3362 = vmatpush2.msra.mxu0 0.0
    %3363 = vmatprep.subr.mxu0 0.0
    %3364 = vmatpush2.msra.mxu0 0.0
    %3365 = vmatprep.subr.mxu0 0.0
    %3366 = vmatpush2.msra.mxu0 0.0
    %3367 = vmatprep.subr.mxu0 0.0
    %3368 = vmatpush2.msra.mxu0 0.0
    %3369 = vmatprep.subr.mxu0 0.0
    %3370 = vmatpush2.msra.mxu0 0.0
    %3371 = vmatprep.subr.mxu0 0.0
    %3372 = vmatpush2.msra.mxu0 0.0
    %3373 = vmatprep.subr.mxu0 0.0
    %3374 = vmatpush2.msra.mxu0 0.0
    %3375 = vmatprep.subr.mxu0 0.0
    %3376 = vmatpush2.msra.mxu0 0.0
    %3377 = vmatprep.subr.mxu0 0.0
    %3378 = vmatpush2.msra.mxu0 0.0
    %3379 = vmatprep.subr.mxu0 0.0
    %3380 = vmatpush2.msra.mxu0 0.0
    %3381 = vmatprep.subr.mxu0 0.0
    %3382 = vmatpush2.msra.mxu0 0.0
    %3383 = vmatprep.mubr.f32.mxu0 0.0
    %3384 = vmatmul.mubr.f32.gmra.mxu0 %v3317
    %v3385 = vpop.f32.mrf.mxu0
    %v3386 = vadd.f32 0.0, %v3385
    %v3387 = vpop.f32.mrf.mxu0
    %3388 = vdwg.mxu0
    %3389 = vmatprep.subr.mxu0 0.0
    %3390 = vmatpush1.msra.mxu0 0.0
    %3391 = vmatprep.subr.mxu0 0.0
    %3392 = vmatpush1.msra.mxu0 0.0
    %3393 = vmatprep.subr.mxu0 0.0
    %3394 = vmatpush1.msra.mxu0 0.0
    %3395 = vmatprep.subr.mxu0 0.0
    %3396 = vmatpush1.msra.mxu0 0.0
    %3397 = vmatprep.subr.mxu0 0.0
    %3398 = vmatpush1.msra.mxu0 0.0
    %3399 = vmatprep.subr.mxu0 0.0
    %3400 = vmatpush1.msra.mxu0 0.0
    %3401 = vmatprep.subr.mxu0 0.0
    %3402 = vmatpush1.msra.mxu0 0.0
    %3403 = vmatprep.subr.mxu0 0.0
    %3404 = vmatpush1.msra.mxu0 0.0
    %3405 = vmatprep.subr.mxu0 0.0
    %3406 = vmatpush1.msra.mxu0 0.0
    %3407 = vmatprep.subr.mxu0 0.0
    %3408 = vmatpush1.msra.mxu0 0.0
    %3409 = vmatprep.subr.mxu0 0.0
    %3410 = vmatpush1.msra.mxu0 0.0
    %3411 = vmatprep.subr.mxu0 0.0
    %3412 = vmatpush1.msra.mxu0 0.0
    %3413 = vmatprep.subr.mxu0 0.0
    %3414 = vmatpush1.msra.mxu0 %v622
    %3415 = vmatprep.subr.mxu0 0.0
    %3416 = vmatpush1.msra.mxu0 %v621
    %3417 = vmatprep.subr.mxu0 0.0
    %3418 = vmatpush1.msra.mxu0 %v620
    %3419 = vmatprep.subr.mxu0 0.0
    %3420 = vmatpush1.msra.mxu0 %v619
    %3421 = vmatprep.subr.mxu0 0.0
    %3422 = vmatpush2.msra.mxu0 0.0
    %3423 = vmatprep.subr.mxu0 0.0
    %3424 = vmatpush2.msra.mxu0 0.0
    %3425 = vmatprep.subr.mxu0 0.0
    %3426 = vmatpush2.msra.mxu0 0.0
    %3427 = vmatprep.subr.mxu0 0.0
    %3428 = vmatpush2.msra.mxu0 0.0
    %3429 = vmatprep.subr.mxu0 0.0
    %3430 = vmatpush2.msra.mxu0 0.0
    %3431 = vmatprep.subr.mxu0 0.0
    %3432 = vmatpush2.msra.mxu0 0.0
    %3433 = vmatprep.subr.mxu0 0.0
    %3434 = vmatpush2.msra.mxu0 0.0
    %3435 = vmatprep.subr.mxu0 0.0
    %3436 = vmatpush2.msra.mxu0 0.0
    %3437 = vmatprep.subr.mxu0 0.0
    %3438 = vmatpush2.msra.mxu0 0.0
    %3439 = vmatprep.subr.mxu0 0.0
    %3440 = vmatpush2.msra.mxu0 0.0
    %3441 = vmatprep.subr.mxu0 0.0
    %3442 = vmatpush2.msra.mxu0 0.0
    %3443 = vmatprep.subr.mxu0 0.0
    %3444 = vmatpush2.msra.mxu0 0.0
    %3445 = vmatprep.subr.mxu0 0.0
    %3446 = vmatpush2.msra.mxu0 0.0
    %3447 = vmatprep.subr.mxu0 0.0
    %3448 = vmatpush2.msra.mxu0 0.0
    %3449 = vmatprep.subr.mxu0 0.0
    %3450 = vmatpush2.msra.mxu0 0.0
    %3451 = vmatprep.subr.mxu0 0.0
    %3452 = vmatpush2.msra.mxu0 0.0
    %3453 = vmatprep.mubr.f32.mxu0 0.0
    %3454 = vmatmul.mubr.f32.gmra.mxu0 %v3317
    %v3455 = vpop.f32.mrf.mxu0
    %v3456 = vadd.f32 0.0, %v3455
    %v3457 = vpop.f32.mrf.mxu0
    %3458 = vdwg.mxu0
    %3459 = vmatprep.subr.mxu0 0.0
    %3460 = vmatpush1.msra.mxu0 0.0
    %3461 = vmatprep.subr.mxu0 0.0
    %3462 = vmatpush1.msra.mxu0 0.0
    %3463 = vmatprep.subr.mxu0 0.0
    %3464 = vmatpush1.msra.mxu0 0.0
    %3465 = vmatprep.subr.mxu0 0.0
    %3466 = vmatpush1.msra.mxu0 0.0
    %3467 = vmatprep.subr.mxu0 0.0
    %3468 = vmatpush1.msra.mxu0 0.0
    %3469 = vmatprep.subr.mxu0 0.0
    %3470 = vmatpush1.msra.mxu0 0.0
    %3471 = vmatprep.subr.mxu0 0.0
    %3472 = vmatpush1.msra.mxu0 0.0
    %3473 = vmatprep.subr.mxu0 0.0
    %3474 = vmatpush1.msra.mxu0 0.0
    %3475 = vmatprep.subr.mxu0 0.0
    %3476 = vmatpush1.msra.mxu0 0.0
    %3477 = vmatprep.subr.mxu0 0.0
    %3478 = vmatpush1.msra.mxu0 0.0
    %3479 = vmatprep.subr.mxu0 0.0
    %3480 = vmatpush1.msra.mxu0 0.0
    %3481 = vmatprep.subr.mxu0 0.0
    %3482 = vmatpush1.msra.mxu0 0.0
    %3483 = vmatprep.subr.mxu0 0.0
    %3484 = vmatpush1.msra.mxu0 %v626
    %3485 = vmatprep.subr.mxu0 0.0
    %3486 = vmatpush1.msra.mxu0 %v625
    %3487 = vmatprep.subr.mxu0 0.0
    %3488 = vmatpush1.msra.mxu0 %v624
    %3489 = vmatprep.subr.mxu0 0.0
    %3490 = vmatpush1.msra.mxu0 %v623
    %3491 = vmatprep.subr.mxu0 0.0
    %3492 = vmatpush2.msra.mxu0 0.0
    %3493 = vmatprep.subr.mxu0 0.0
    %3494 = vmatpush2.msra.mxu0 0.0
    %3495 = vmatprep.subr.mxu0 0.0
    %3496 = vmatpush2.msra.mxu0 0.0
    %3497 = vmatprep.subr.mxu0 0.0
    %3498 = vmatpush2.msra.mxu0 0.0
    %3499 = vmatprep.subr.mxu0 0.0
    %3500 = vmatpush2.msra.mxu0 0.0
    %3501 = vmatprep.subr.mxu0 0.0
    %3502 = vmatpush2.msra.mxu0 0.0
    %3503 = vmatprep.subr.mxu0 0.0
    %3504 = vmatpush2.msra.mxu0 0.0
    %3505 = vmatprep.subr.mxu0 0.0
    %3506 = vmatpush2.msra.mxu0 0.0
    %3507 = vmatprep.subr.mxu0 0.0
    %3508 = vmatpush2.msra.mxu0 0.0
    %3509 = vmatprep.subr.mxu0 0.0
    %3510 = vmatpush2.msra.mxu0 0.0
    %3511 = vmatprep.subr.mxu0 0.0
    %3512 = vmatpush2.msra.mxu0 0.0
    %3513 = vmatprep.subr.mxu0 0.0
    %3514 = vmatpush2.msra.mxu0 0.0
    %3515 = vmatprep.subr.mxu0 0.0
    %3516 = vmatpush2.msra.mxu0 0.0
    %3517 = vmatprep.subr.mxu0 0.0
    %3518 = vmatpush2.msra.mxu0 0.0
    %3519 = vmatprep.subr.mxu0 0.0
    %3520 = vmatpush2.msra.mxu0 0.0
    %3521 = vmatprep.subr.mxu0 0.0
    %3522 = vmatpush2.msra.mxu0 0.0
    %3523 = vmatprep.mubr.f32.mxu0 0.0
    %3524 = vmatmul.mubr.f32.gmra.mxu0 %v3317
    %v3525 = vpop.f32.mrf.mxu0
    %v3526 = vadd.f32 %v2730, %v3525
    %v3527 = vpop.f32.mrf.mxu0
    %3528 = vdwg.mxu0
    %v3530 = vrot.slane %v3386, 2
    %v3532 = vadd.f32 %v423, %v3530
    %v3533 = vxor.u32 %v3532, 2147483648
    %v3534 = vmul.f32 %v3533, 1.442695
    %v3535 = vpow.pop %v3534
    %v3536 = vadd.f32 %v3535, 1.0
    %v3537 = vrcp.pop %v3536
    %v3538 = vmul.f32 1.0, %v3537
    %v3540 = vrot.slane %v3456, 2
    %v3542 = vadd.f32 %v509, %v3540
    %v3543 = vxor.u32 %v3542, 2147483648
    %v3544 = vmul.f32 %v3543, 1.442695
    %v3545 = vpow.pop %v3544
    %v3546 = vadd.f32 %v3545, 1.0
    %v3547 = vrcp.pop %v3546
    %v3548 = vmul.f32 1.0, %v3547
    %v3550 = vrot.slane %v3526, 2
    %v3552 = vmul.f32 %v3538, %v3550
    %v3553 = vadd.f32 %v595, %v3552
    %v3554 = vtanh.pop %v3553
    %v3555 = vsub.f32 1.0, %v3548
    %v3556 = vmul.f32 %v3555, %v3554
    %v3557 = vrot.slane %v3314, 6
    %v3559 = vmul.f32 %v3548, %v3557
    %v3560 = vadd.f32 %v3556, %v3559
    %v3562 = vrot.slane %v3560, 6
    %v3563 = vsel %vm629, %v3562, 0
    %3565 = vmatprep.subr.mxu0 0.0
    %3566 = vmatpush1.msra.mxu0 0.0
    %3567 = vmatprep.subr.mxu0 0.0
    %3568 = vmatpush1.msra.mxu0 0.0
    %3569 = vmatprep.subr.mxu0 0.0
    %3570 = vmatpush1.msra.mxu0 0.0
    %3571 = vmatprep.subr.mxu0 0.0
    %3572 = vmatpush1.msra.mxu0 0.0
    %3573 = vmatprep.subr.mxu0 0.0
    %3574 = vmatpush1.msra.mxu0 0.0
    %3575 = vmatprep.subr.mxu0 0.0
    %3576 = vmatpush1.msra.mxu0 0.0
    %3577 = vmatprep.subr.mxu0 0.0
    %3578 = vmatpush1.msra.mxu0 0.0
    %3579 = vmatprep.subr.mxu0 0.0
    %3580 = vmatpush1.msra.mxu0 0.0
    %3581 = vmatprep.subr.mxu0 0.0
    %3582 = vmatpush1.msra.mxu0 0.0
    %3583 = vmatprep.subr.mxu0 0.0
    %3584 = vmatpush1.msra.mxu0 0.0
    %3585 = vmatprep.subr.mxu0 0.0
    %3586 = vmatpush1.msra.mxu0 0.0
    %3587 = vmatprep.subr.mxu0 0.0
    %3588 = vmatpush1.msra.mxu0 0.0
    %3589 = vmatprep.subr.mxu0 0.0
    %3590 = vmatpush1.msra.mxu0 %v618
    %3591 = vmatprep.subr.mxu0 0.0
    %3592 = vmatpush1.msra.mxu0 %v617
    %3593 = vmatprep.subr.mxu0 0.0
    %3594 = vmatpush1.msra.mxu0 %v616
    %3595 = vmatprep.subr.mxu0 0.0
    %3596 = vmatpush1.msra.mxu0 %v615
    %3597 = vmatprep.subr.mxu0 0.0
    %3598 = vmatpush2.msra.mxu0 0.0
    %3599 = vmatprep.subr.mxu0 0.0
    %3600 = vmatpush2.msra.mxu0 0.0
    %3601 = vmatprep.subr.mxu0 0.0
    %3602 = vmatpush2.msra.mxu0 0.0
    %3603 = vmatprep.subr.mxu0 0.0
    %3604 = vmatpush2.msra.mxu0 0.0
    %3605 = vmatprep.subr.mxu0 0.0
    %3606 = vmatpush2.msra.mxu0 0.0
    %3607 = vmatprep.subr.mxu0 0.0
    %3608 = vmatpush2.msra.mxu0 0.0
    %3609 = vmatprep.subr.mxu0 0.0
    %3610 = vmatpush2.msra.mxu0 0.0
    %3611 = vmatprep.subr.mxu0 0.0
    %3612 = vmatpush2.msra.mxu0 0.0
    %3613 = vmatprep.subr.mxu0 0.0
    %3614 = vmatpush2.msra.mxu0 0.0
    %3615 = vmatprep.subr.mxu0 0.0
    %3616 = vmatpush2.msra.mxu0 0.0
    %3617 = vmatprep.subr.mxu0 0.0
    %3618 = vmatpush2.msra.mxu0 0.0
    %3619 = vmatprep.subr.mxu0 0.0
    %3620 = vmatpush2.msra.mxu0 0.0
    %3621 = vmatprep.subr.mxu0 0.0
    %3622 = vmatpush2.msra.mxu0 0.0
    %3623 = vmatprep.subr.mxu0 0.0
    %3624 = vmatpush2.msra.mxu0 0.0
    %3625 = vmatprep.subr.mxu0 0.0
    %3626 = vmatpush2.msra.mxu0 0.0
    %3627 = vmatprep.subr.mxu0 0.0
    %3628 = vmatpush2.msra.mxu0 0.0
    %3629 = vmatprep.mubr.f32.mxu0 0.0
    %3630 = vmatmul.mubr.f32.gmra.mxu0 %v3563
    %v3631 = vpop.f32.mrf.mxu0
    %v3632 = vadd.f32 0.0, %v3631
    %v3633 = vpop.f32.mrf.mxu0
    %3634 = vdwg.mxu0
    %3635 = vmatprep.subr.mxu0 0.0
    %3636 = vmatpush1.msra.mxu0 0.0
    %3637 = vmatprep.subr.mxu0 0.0
    %3638 = vmatpush1.msra.mxu0 0.0
    %3639 = vmatprep.subr.mxu0 0.0
    %3640 = vmatpush1.msra.mxu0 0.0
    %3641 = vmatprep.subr.mxu0 0.0
    %3642 = vmatpush1.msra.mxu0 0.0
    %3643 = vmatprep.subr.mxu0 0.0
    %3644 = vmatpush1.msra.mxu0 0.0
    %3645 = vmatprep.subr.mxu0 0.0
    %3646 = vmatpush1.msra.mxu0 0.0
    %3647 = vmatprep.subr.mxu0 0.0
    %3648 = vmatpush1.msra.mxu0 0.0
    %3649 = vmatprep.subr.mxu0 0.0
    %3650 = vmatpush1.msra.mxu0 0.0
    %3651 = vmatprep.subr.mxu0 0.0
    %3652 = vmatpush1.msra.mxu0 0.0
    %3653 = vmatprep.subr.mxu0 0.0
    %3654 = vmatpush1.msra.mxu0 0.0
    %3655 = vmatprep.subr.mxu0 0.0
    %3656 = vmatpush1.msra.mxu0 0.0
    %3657 = vmatprep.subr.mxu0 0.0
    %3658 = vmatpush1.msra.mxu0 0.0
    %3659 = vmatprep.subr.mxu0 0.0
    %3660 = vmatpush1.msra.mxu0 %v622
    %3661 = vmatprep.subr.mxu0 0.0
    %3662 = vmatpush1.msra.mxu0 %v621
    %3663 = vmatprep.subr.mxu0 0.0
    %3664 = vmatpush1.msra.mxu0 %v620
    %3665 = vmatprep.subr.mxu0 0.0
    %3666 = vmatpush1.msra.mxu0 %v619
    %3667 = vmatprep.subr.mxu0 0.0
    %3668 = vmatpush2.msra.mxu0 0.0
    %3669 = vmatprep.subr.mxu0 0.0
    %3670 = vmatpush2.msra.mxu0 0.0
    %3671 = vmatprep.subr.mxu0 0.0
    %3672 = vmatpush2.msra.mxu0 0.0
    %3673 = vmatprep.subr.mxu0 0.0
    %3674 = vmatpush2.msra.mxu0 0.0
    %3675 = vmatprep.subr.mxu0 0.0
    %3676 = vmatpush2.msra.mxu0 0.0
    %3677 = vmatprep.subr.mxu0 0.0
    %3678 = vmatpush2.msra.mxu0 0.0
    %3679 = vmatprep.subr.mxu0 0.0
    %3680 = vmatpush2.msra.mxu0 0.0
    %3681 = vmatprep.subr.mxu0 0.0
    %3682 = vmatpush2.msra.mxu0 0.0
    %3683 = vmatprep.subr.mxu0 0.0
    %3684 = vmatpush2.msra.mxu0 0.0
    %3685 = vmatprep.subr.mxu0 0.0
    %3686 = vmatpush2.msra.mxu0 0.0
    %3687 = vmatprep.subr.mxu0 0.0
    %3688 = vmatpush2.msra.mxu0 0.0
    %3689 = vmatprep.subr.mxu0 0.0
    %3690 = vmatpush2.msra.mxu0 0.0
    %3691 = vmatprep.subr.mxu0 0.0
    %3692 = vmatpush2.msra.mxu0 0.0
    %3693 = vmatprep.subr.mxu0 0.0
    %3694 = vmatpush2.msra.mxu0 0.0
    %3695 = vmatprep.subr.mxu0 0.0
    %3696 = vmatpush2.msra.mxu0 0.0
    %3697 = vmatprep.subr.mxu0 0.0
    %3698 = vmatpush2.msra.mxu0 0.0
    %3699 = vmatprep.mubr.f32.mxu0 0.0
    %3700 = vmatmul.mubr.f32.gmra.mxu0 %v3563
    %v3701 = vpop.f32.mrf.mxu0
    %v3702 = vadd.f32 0.0, %v3701
    %v3703 = vpop.f32.mrf.mxu0
    %3704 = vdwg.mxu0
    %3705 = vmatprep.subr.mxu0 0.0
    %3706 = vmatpush1.msra.mxu0 0.0
    %3707 = vmatprep.subr.mxu0 0.0
    %3708 = vmatpush1.msra.mxu0 0.0
    %3709 = vmatprep.subr.mxu0 0.0
    %3710 = vmatpush1.msra.mxu0 0.0
    %3711 = vmatprep.subr.mxu0 0.0
    %3712 = vmatpush1.msra.mxu0 0.0
    %3713 = vmatprep.subr.mxu0 0.0
    %3714 = vmatpush1.msra.mxu0 0.0
    %3715 = vmatprep.subr.mxu0 0.0
    %3716 = vmatpush1.msra.mxu0 0.0
    %3717 = vmatprep.subr.mxu0 0.0
    %3718 = vmatpush1.msra.mxu0 0.0
    %3719 = vmatprep.subr.mxu0 0.0
    %3720 = vmatpush1.msra.mxu0 0.0
    %3721 = vmatprep.subr.mxu0 0.0
    %3722 = vmatpush1.msra.mxu0 0.0
    %3723 = vmatprep.subr.mxu0 0.0
    %3724 = vmatpush1.msra.mxu0 0.0
    %3725 = vmatprep.subr.mxu0 0.0
    %3726 = vmatpush1.msra.mxu0 0.0
    %3727 = vmatprep.subr.mxu0 0.0
    %3728 = vmatpush1.msra.mxu0 0.0
    %3729 = vmatprep.subr.mxu0 0.0
    %3730 = vmatpush1.msra.mxu0 %v626
    %3731 = vmatprep.subr.mxu0 0.0
    %3732 = vmatpush1.msra.mxu0 %v625
    %3733 = vmatprep.subr.mxu0 0.0
    %3734 = vmatpush1.msra.mxu0 %v624
    %3735 = vmatprep.subr.mxu0 0.0
    %3736 = vmatpush1.msra.mxu0 %v623
    %3737 = vmatprep.subr.mxu0 0.0
    %3738 = vmatpush2.msra.mxu0 0.0
    %3739 = vmatprep.subr.mxu0 0.0
    %3740 = vmatpush2.msra.mxu0 0.0
    %3741 = vmatprep.subr.mxu0 0.0
    %3742 = vmatpush2.msra.mxu0 0.0
    %3743 = vmatprep.subr.mxu0 0.0
    %3744 = vmatpush2.msra.mxu0 0.0
    %3745 = vmatprep.subr.mxu0 0.0
    %3746 = vmatpush2.msra.mxu0 0.0
    %3747 = vmatprep.subr.mxu0 0.0
    %3748 = vmatpush2.msra.mxu0 0.0
    %3749 = vmatprep.subr.mxu0 0.0
    %3750 = vmatpush2.msra.mxu0 0.0
    %3751 = vmatprep.subr.mxu0 0.0
    %3752 = vmatpush2.msra.mxu0 0.0
    %3753 = vmatprep.subr.mxu0 0.0
    %3754 = vmatpush2.msra.mxu0 0.0
    %3755 = vmatprep.subr.mxu0 0.0
    %3756 = vmatpush2.msra.mxu0 0.0
    %3757 = vmatprep.subr.mxu0 0.0
    %3758 = vmatpush2.msra.mxu0 0.0
    %3759 = vmatprep.subr.mxu0 0.0
    %3760 = vmatpush2.msra.mxu0 0.0
    %3761 = vmatprep.subr.mxu0 0.0
    %3762 = vmatpush2.msra.mxu0 0.0
    %3763 = vmatprep.subr.mxu0 0.0
    %3764 = vmatpush2.msra.mxu0 0.0
    %3765 = vmatprep.subr.mxu0 0.0
    %3766 = vmatpush2.msra.mxu0 0.0
    %3767 = vmatprep.subr.mxu0 0.0
    %3768 = vmatpush2.msra.mxu0 0.0
    %3769 = vmatprep.mubr.f32.mxu0 0.0
    %3770 = vmatmul.mubr.f32.gmra.mxu0 %v3563
    %v3771 = vpop.f32.mrf.mxu0
    %v3772 = vadd.f32 %v2730, %v3771
    %v3773 = vpop.f32.mrf.mxu0
    %3774 = vdwg.mxu0
    %v3775 = vadd.f32 %v428, %v3632
    %v3776 = vxor.u32 %v3775, 2147483648
    %v3777 = vmul.f32 %v3776, 1.442695
    %v3778 = vpow.pop %v3777
    %v3779 = vadd.f32 %v3778, 1.0
    %v3780 = vrcp.pop %v3779
    %v3781 = vmul.f32 1.0, %v3780
    %v3782 = vadd.f32 %v514, %v3702
    %v3783 = vxor.u32 %v3782, 2147483648
    %v3784 = vmul.f32 %v3783, 1.442695
    %v3785 = vpow.pop %v3784
    %v3786 = vadd.f32 %v3785, 1.0
    %v3787 = vrcp.pop %v3786
    %v3788 = vmul.f32 1.0, %v3787
    %v3789 = vmul.f32 %v3781, %v3772
    %v3790 = vadd.f32 %v600, %v3789
    %v3791 = vtanh.pop %v3790
    %v3792 = vsub.f32 1.0, %v3788
    %v3793 = vmul.f32 %v3792, %v3791
    %v3795 = vmul.f32 %v3788, %v3562
    %v3796 = vadd.f32 %v3793, %v3795
    %v3798 = vsel %vm629, %v3796, 0
    %3800 = vmatprep.subr.mxu0 0.0
    %3801 = vmatpush1.msra.mxu0 0.0
    %3802 = vmatprep.subr.mxu0 0.0
    %3803 = vmatpush1.msra.mxu0 0.0
    %3804 = vmatprep.subr.mxu0 0.0
    %3805 = vmatpush1.msra.mxu0 0.0
    %3806 = vmatprep.subr.mxu0 0.0
    %3807 = vmatpush1.msra.mxu0 0.0
    %3808 = vmatprep.subr.mxu0 0.0
    %3809 = vmatpush1.msra.mxu0 0.0
    %3810 = vmatprep.subr.mxu0 0.0
    %3811 = vmatpush1.msra.mxu0 0.0
    %3812 = vmatprep.subr.mxu0 0.0
    %3813 = vmatpush1.msra.mxu0 0.0
    %3814 = vmatprep.subr.mxu0 0.0
    %3815 = vmatpush1.msra.mxu0 0.0
    %3816 = vmatprep.subr.mxu0 0.0
    %3817 = vmatpush1.msra.mxu0 0.0
    %3818 = vmatprep.subr.mxu0 0.0
    %3819 = vmatpush1.msra.mxu0 0.0
    %3820 = vmatprep.subr.mxu0 0.0
    %3821 = vmatpush1.msra.mxu0 0.0
    %3822 = vmatprep.subr.mxu0 0.0
    %3823 = vmatpush1.msra.mxu0 0.0
    %3824 = vmatprep.subr.mxu0 0.0
    %3825 = vmatpush1.msra.mxu0 %v618
    %3826 = vmatprep.subr.mxu0 0.0
    %3827 = vmatpush1.msra.mxu0 %v617
    %3828 = vmatprep.subr.mxu0 0.0
    %3829 = vmatpush1.msra.mxu0 %v616
    %3830 = vmatprep.subr.mxu0 0.0
    %3831 = vmatpush1.msra.mxu0 %v615
    %3832 = vmatprep.subr.mxu0 0.0
    %3833 = vmatpush2.msra.mxu0 0.0
    %3834 = vmatprep.subr.mxu0 0.0
    %3835 = vmatpush2.msra.mxu0 0.0
    %3836 = vmatprep.subr.mxu0 0.0
    %3837 = vmatpush2.msra.mxu0 0.0
    %3838 = vmatprep.subr.mxu0 0.0
    %3839 = vmatpush2.msra.mxu0 0.0
    %3840 = vmatprep.subr.mxu0 0.0
    %3841 = vmatpush2.msra.mxu0 0.0
    %3842 = vmatprep.subr.mxu0 0.0
    %3843 = vmatpush2.msra.mxu0 0.0
    %3844 = vmatprep.subr.mxu0 0.0
    %3845 = vmatpush2.msra.mxu0 0.0
    %3846 = vmatprep.subr.mxu0 0.0
    %3847 = vmatpush2.msra.mxu0 0.0
    %3848 = vmatprep.subr.mxu0 0.0
    %3849 = vmatpush2.msra.mxu0 0.0
    %3850 = vmatprep.subr.mxu0 0.0
    %3851 = vmatpush2.msra.mxu0 0.0
    %3852 = vmatprep.subr.mxu0 0.0
    %3853 = vmatpush2.msra.mxu0 0.0
    %3854 = vmatprep.subr.mxu0 0.0
    %3855 = vmatpush2.msra.mxu0 0.0
    %3856 = vmatprep.subr.mxu0 0.0
    %3857 = vmatpush2.msra.mxu0 0.0
    %3858 = vmatprep.subr.mxu0 0.0
    %3859 = vmatpush2.msra.mxu0 0.0
    %3860 = vmatprep.subr.mxu0 0.0
    %3861 = vmatpush2.msra.mxu0 0.0
    %3862 = vmatprep.subr.mxu0 0.0
    %3863 = vmatpush2.msra.mxu0 0.0
    %3864 = vmatprep.mubr.f32.mxu0 0.0
    %3865 = vmatmul.mubr.f32.gmra.mxu0 %v3798
    %v3866 = vpop.f32.mrf.mxu0
    %v3867 = vadd.f32 0.0, %v3866
    %v3868 = vpop.f32.mrf.mxu0
    %3869 = vdwg.mxu0
    %3870 = vmatprep.subr.mxu0 0.0
    %3871 = vmatpush1.msra.mxu0 0.0
    %3872 = vmatprep.subr.mxu0 0.0
    %3873 = vmatpush1.msra.mxu0 0.0
    %3874 = vmatprep.subr.mxu0 0.0
    %3875 = vmatpush1.msra.mxu0 0.0
    %3876 = vmatprep.subr.mxu0 0.0
    %3877 = vmatpush1.msra.mxu0 0.0
    %3878 = vmatprep.subr.mxu0 0.0
    %3879 = vmatpush1.msra.mxu0 0.0
    %3880 = vmatprep.subr.mxu0 0.0
    %3881 = vmatpush1.msra.mxu0 0.0
    %3882 = vmatprep.subr.mxu0 0.0
    %3883 = vmatpush1.msra.mxu0 0.0
    %3884 = vmatprep.subr.mxu0 0.0
    %3885 = vmatpush1.msra.mxu0 0.0
    %3886 = vmatprep.subr.mxu0 0.0
    %3887 = vmatpush1.msra.mxu0 0.0
    %3888 = vmatprep.subr.mxu0 0.0
    %3889 = vmatpush1.msra.mxu0 0.0
    %3890 = vmatprep.subr.mxu0 0.0
    %3891 = vmatpush1.msra.mxu0 0.0
    %3892 = vmatprep.subr.mxu0 0.0
    %3893 = vmatpush1.msra.mxu0 0.0
    %3894 = vmatprep.subr.mxu0 0.0
    %3895 = vmatpush1.msra.mxu0 %v622
    %3896 = vmatprep.subr.mxu0 0.0
    %3897 = vmatpush1.msra.mxu0 %v621
    %3898 = vmatprep.subr.mxu0 0.0
    %3899 = vmatpush1.msra.mxu0 %v620
    %3900 = vmatprep.subr.mxu0 0.0
    %3901 = vmatpush1.msra.mxu0 %v619
    %3902 = vmatprep.subr.mxu0 0.0
    %3903 = vmatpush2.msra.mxu0 0.0
    %3904 = vmatprep.subr.mxu0 0.0
    %3905 = vmatpush2.msra.mxu0 0.0
    %3906 = vmatprep.subr.mxu0 0.0
    %3907 = vmatpush2.msra.mxu0 0.0
    %3908 = vmatprep.subr.mxu0 0.0
    %3909 = vmatpush2.msra.mxu0 0.0
    %3910 = vmatprep.subr.mxu0 0.0
    %3911 = vmatpush2.msra.mxu0 0.0
    %3912 = vmatprep.subr.mxu0 0.0
    %3913 = vmatpush2.msra.mxu0 0.0
    %3914 = vmatprep.subr.mxu0 0.0
    %3915 = vmatpush2.msra.mxu0 0.0
    %3916 = vmatprep.subr.mxu0 0.0
    %3917 = vmatpush2.msra.mxu0 0.0
    %3918 = vmatprep.subr.mxu0 0.0
    %3919 = vmatpush2.msra.mxu0 0.0
    %3920 = vmatprep.subr.mxu0 0.0
    %3921 = vmatpush2.msra.mxu0 0.0
    %3922 = vmatprep.subr.mxu0 0.0
    %3923 = vmatpush2.msra.mxu0 0.0
    %3924 = vmatprep.subr.mxu0 0.0
    %3925 = vmatpush2.msra.mxu0 0.0
    %3926 = vmatprep.subr.mxu0 0.0
    %3927 = vmatpush2.msra.mxu0 0.0
    %3928 = vmatprep.subr.mxu0 0.0
    %3929 = vmatpush2.msra.mxu0 0.0
    %3930 = vmatprep.subr.mxu0 0.0
    %3931 = vmatpush2.msra.mxu0 0.0
    %3932 = vmatprep.subr.mxu0 0.0
    %3933 = vmatpush2.msra.mxu0 0.0
    %3934 = vmatprep.mubr.f32.mxu0 0.0
    %3935 = vmatmul.mubr.f32.gmra.mxu0 %v3798
    %v3936 = vpop.f32.mrf.mxu0
    %v3937 = vadd.f32 0.0, %v3936
    %v3938 = vpop.f32.mrf.mxu0
    %3939 = vdwg.mxu0
    %3940 = vmatprep.subr.mxu0 0.0
    %3941 = vmatpush1.msra.mxu0 0.0
    %3942 = vmatprep.subr.mxu0 0.0
    %3943 = vmatpush1.msra.mxu0 0.0
    %3944 = vmatprep.subr.mxu0 0.0
    %3945 = vmatpush1.msra.mxu0 0.0
    %3946 = vmatprep.subr.mxu0 0.0
    %3947 = vmatpush1.msra.mxu0 0.0
    %3948 = vmatprep.subr.mxu0 0.0
    %3949 = vmatpush1.msra.mxu0 0.0
    %3950 = vmatprep.subr.mxu0 0.0
    %3951 = vmatpush1.msra.mxu0 0.0
    %3952 = vmatprep.subr.mxu0 0.0
    %3953 = vmatpush1.msra.mxu0 0.0
    %3954 = vmatprep.subr.mxu0 0.0
    %3955 = vmatpush1.msra.mxu0 0.0
    %3956 = vmatprep.subr.mxu0 0.0
    %3957 = vmatpush1.msra.mxu0 0.0
    %3958 = vmatprep.subr.mxu0 0.0
    %3959 = vmatpush1.msra.mxu0 0.0
    %3960 = vmatprep.subr.mxu0 0.0
    %3961 = vmatpush1.msra.mxu0 0.0
    %3962 = vmatprep.subr.mxu0 0.0
    %3963 = vmatpush1.msra.mxu0 0.0
    %3964 = vmatprep.subr.mxu0 0.0
    %3965 = vmatpush1.msra.mxu0 %v626
    %3966 = vmatprep.subr.mxu0 0.0
    %3967 = vmatpush1.msra.mxu0 %v625
    %3968 = vmatprep.subr.mxu0 0.0
    %3969 = vmatpush1.msra.mxu0 %v624
    %3970 = vmatprep.subr.mxu0 0.0
    %3971 = vmatpush1.msra.mxu0 %v623
    %3972 = vmatprep.subr.mxu0 0.0
    %3973 = vmatpush2.msra.mxu0 0.0
    %3974 = vmatprep.subr.mxu0 0.0
    %3975 = vmatpush2.msra.mxu0 0.0
    %3976 = vmatprep.subr.mxu0 0.0
    %3977 = vmatpush2.msra.mxu0 0.0
    %3978 = vmatprep.subr.mxu0 0.0
    %3979 = vmatpush2.msra.mxu0 0.0
    %3980 = vmatprep.subr.mxu0 0.0
    %3981 = vmatpush2.msra.mxu0 0.0
    %3982 = vmatprep.subr.mxu0 0.0
    %3983 = vmatpush2.msra.mxu0 0.0
    %3984 = vmatprep.subr.mxu0 0.0
    %3985 = vmatpush2.msra.mxu0 0.0
    %3986 = vmatprep.subr.mxu0 0.0
    %3987 = vmatpush2.msra.mxu0 0.0
    %3988 = vmatprep.subr.mxu0 0.0
    %3989 = vmatpush2.msra.mxu0 0.0
    %3990 = vmatprep.subr.mxu0 0.0
    %3991 = vmatpush2.msra.mxu0 0.0
    %3992 = vmatprep.subr.mxu0 0.0
    %3993 = vmatpush2.msra.mxu0 0.0
    %3994 = vmatprep.subr.mxu0 0.0
    %3995 = vmatpush2.msra.mxu0 0.0
    %3996 = vmatprep.subr.mxu0 0.0
    %3997 = vmatpush2.msra.mxu0 0.0
    %3998 = vmatprep.subr.mxu0 0.0
    %3999 = vmatpush2.msra.mxu0 0.0
    %4000 = vmatprep.subr.mxu0 0.0
    %4001 = vmatpush2.msra.mxu0 0.0
    %4002 = vmatprep.subr.mxu0 0.0
    %4003 = vmatpush2.msra.mxu0 0.0
    %4004 = vmatprep.mubr.f32.mxu0 0.0
    %4005 = vmatmul.mubr.f32.gmra.mxu0 %v3798
    %v4006 = vpop.f32.mrf.mxu0
    %v4007 = vadd.f32 %v2730, %v4006
    %v4008 = vpop.f32.mrf.mxu0
    %4009 = vdwg.mxu0
    %v4011 = vrot.slane %v3867, 6
    %v4013 = vadd.f32 %v428, %v4011
    %v4014 = vxor.u32 %v4013, 2147483648
    %v4015 = vmul.f32 %v4014, 1.442695
    %v4016 = vpow.pop %v4015
    %v4017 = vadd.f32 %v4016, 1.0
    %v4018 = vrcp.pop %v4017
    %v4019 = vmul.f32 1.0, %v4018
    %v4021 = vrot.slane %v3937, 6
    %v4023 = vadd.f32 %v514, %v4021
    %v4024 = vxor.u32 %v4023, 2147483648
    %v4025 = vmul.f32 %v4024, 1.442695
    %v4026 = vpow.pop %v4025
    %v4027 = vadd.f32 %v4026, 1.0
    %v4028 = vrcp.pop %v4027
    %v4029 = vmul.f32 1.0, %v4028
    %v4031 = vrot.slane %v4007, 6
    %v4033 = vmul.f32 %v4019, %v4031
    %v4034 = vadd.f32 %v600, %v4033
    %v4035 = vtanh.pop %v4034
    %v4036 = vsub.f32 1.0, %v4029
    %v4037 = vmul.f32 %v4036, %v4035
    %v4038 = vrot.slane %v3796, 6
    %v4040 = vmul.f32 %v4029, %v4038
    %v4041 = vadd.f32 %v4037, %v4040
    %v4043 = vrot.slane %v4041, 2
    %v4044 = vsel %vm629, %v4043, 0
    %4046 = vmatprep.subr.mxu0 0.0
    %4047 = vmatpush1.msra.mxu0 0.0
    %4048 = vmatprep.subr.mxu0 0.0
    %4049 = vmatpush1.msra.mxu0 0.0
    %4050 = vmatprep.subr.mxu0 0.0
    %4051 = vmatpush1.msra.mxu0 0.0
    %4052 = vmatprep.subr.mxu0 0.0
    %4053 = vmatpush1.msra.mxu0 0.0
    %4054 = vmatprep.subr.mxu0 0.0
    %4055 = vmatpush1.msra.mxu0 0.0
    %4056 = vmatprep.subr.mxu0 0.0
    %4057 = vmatpush1.msra.mxu0 0.0
    %4058 = vmatprep.subr.mxu0 0.0
    %4059 = vmatpush1.msra.mxu0 0.0
    %4060 = vmatprep.subr.mxu0 0.0
    %4061 = vmatpush1.msra.mxu0 0.0
    %4062 = vmatprep.subr.mxu0 0.0
    %4063 = vmatpush1.msra.mxu0 0.0
    %4064 = vmatprep.subr.mxu0 0.0
    %4065 = vmatpush1.msra.mxu0 0.0
    %4066 = vmatprep.subr.mxu0 0.0
    %4067 = vmatpush1.msra.mxu0 0.0
    %4068 = vmatprep.subr.mxu0 0.0
    %4069 = vmatpush1.msra.mxu0 0.0
    %4070 = vmatprep.subr.mxu0 0.0
    %4071 = vmatpush1.msra.mxu0 %v618
    %4072 = vmatprep.subr.mxu0 0.0
    %4073 = vmatpush1.msra.mxu0 %v617
    %4074 = vmatprep.subr.mxu0 0.0
    %4075 = vmatpush1.msra.mxu0 %v616
    %4076 = vmatprep.subr.mxu0 0.0
    %4077 = vmatpush1.msra.mxu0 %v615
    %4078 = vmatprep.subr.mxu0 0.0
    %4079 = vmatpush2.msra.mxu0 0.0
    %4080 = vmatprep.subr.mxu0 0.0
    %4081 = vmatpush2.msra.mxu0 0.0
    %4082 = vmatprep.subr.mxu0 0.0
    %4083 = vmatpush2.msra.mxu0 0.0
    %4084 = vmatprep.subr.mxu0 0.0
    %4085 = vmatpush2.msra.mxu0 0.0
    %4086 = vmatprep.subr.mxu0 0.0
    %4087 = vmatpush2.msra.mxu0 0.0
    %4088 = vmatprep.subr.mxu0 0.0
    %4089 = vmatpush2.msra.mxu0 0.0
    %4090 = vmatprep.subr.mxu0 0.0
    %4091 = vmatpush2.msra.mxu0 0.0
    %4092 = vmatprep.subr.mxu0 0.0
    %4093 = vmatpush2.msra.mxu0 0.0
    %4094 = vmatprep.subr.mxu0 0.0
    %4095 = vmatpush2.msra.mxu0 0.0
    %4096 = vmatprep.subr.mxu0 0.0
    %4097 = vmatpush2.msra.mxu0 0.0
    %4098 = vmatprep.subr.mxu0 0.0
    %4099 = vmatpush2.msra.mxu0 0.0
    %4100 = vmatprep.subr.mxu0 0.0
    %4101 = vmatpush2.msra.mxu0 0.0
    %4102 = vmatprep.subr.mxu0 0.0
    %4103 = vmatpush2.msra.mxu0 0.0
    %4104 = vmatprep.subr.mxu0 0.0
    %4105 = vmatpush2.msra.mxu0 0.0
    %4106 = vmatprep.subr.mxu0 0.0
    %4107 = vmatpush2.msra.mxu0 0.0
    %4108 = vmatprep.subr.mxu0 0.0
    %4109 = vmatpush2.msra.mxu0 0.0
    %4110 = vmatprep.mubr.f32.mxu0 0.0
    %4111 = vmatmul.mubr.f32.gmra.mxu0 %v4044
    %v4112 = vpop.f32.mrf.mxu0
    %v4113 = vadd.f32 0.0, %v4112
    %v4114 = vpop.f32.mrf.mxu0
    %4115 = vdwg.mxu0
    %4116 = vmatprep.subr.mxu0 0.0
    %4117 = vmatpush1.msra.mxu0 0.0
    %4118 = vmatprep.subr.mxu0 0.0
    %4119 = vmatpush1.msra.mxu0 0.0
    %4120 = vmatprep.subr.mxu0 0.0
    %4121 = vmatpush1.msra.mxu0 0.0
    %4122 = vmatprep.subr.mxu0 0.0
    %4123 = vmatpush1.msra.mxu0 0.0
    %4124 = vmatprep.subr.mxu0 0.0
    %4125 = vmatpush1.msra.mxu0 0.0
    %4126 = vmatprep.subr.mxu0 0.0
    %4127 = vmatpush1.msra.mxu0 0.0
    %4128 = vmatprep.subr.mxu0 0.0
    %4129 = vmatpush1.msra.mxu0 0.0
    %4130 = vmatprep.subr.mxu0 0.0
    %4131 = vmatpush1.msra.mxu0 0.0
    %4132 = vmatprep.subr.mxu0 0.0
    %4133 = vmatpush1.msra.mxu0 0.0
    %4134 = vmatprep.subr.mxu0 0.0
    %4135 = vmatpush1.msra.mxu0 0.0
    %4136 = vmatprep.subr.mxu0 0.0
    %4137 = vmatpush1.msra.mxu0 0.0
    %4138 = vmatprep.subr.mxu0 0.0
    %4139 = vmatpush1.msra.mxu0 0.0
    %4140 = vmatprep.subr.mxu0 0.0
    %4141 = vmatpush1.msra.mxu0 %v622
    %4142 = vmatprep.subr.mxu0 0.0
    %4143 = vmatpush1.msra.mxu0 %v621
    %4144 = vmatprep.subr.mxu0 0.0
    %4145 = vmatpush1.msra.mxu0 %v620
    %4146 = vmatprep.subr.mxu0 0.0
    %4147 = vmatpush1.msra.mxu0 %v619
    %4148 = vmatprep.subr.mxu0 0.0
    %4149 = vmatpush2.msra.mxu0 0.0
    %4150 = vmatprep.subr.mxu0 0.0
    %4151 = vmatpush2.msra.mxu0 0.0
    %4152 = vmatprep.subr.mxu0 0.0
    %4153 = vmatpush2.msra.mxu0 0.0
    %4154 = vmatprep.subr.mxu0 0.0
    %4155 = vmatpush2.msra.mxu0 0.0
    %4156 = vmatprep.subr.mxu0 0.0
    %4157 = vmatpush2.msra.mxu0 0.0
    %4158 = vmatprep.subr.mxu0 0.0
    %4159 = vmatpush2.msra.mxu0 0.0
    %4160 = vmatprep.subr.mxu0 0.0
    %4161 = vmatpush2.msra.mxu0 0.0
    %4162 = vmatprep.subr.mxu0 0.0
    %4163 = vmatpush2.msra.mxu0 0.0
    %4164 = vmatprep.subr.mxu0 0.0
    %4165 = vmatpush2.msra.mxu0 0.0
    %4166 = vmatprep.subr.mxu0 0.0
    %4167 = vmatpush2.msra.mxu0 0.0
    %4168 = vmatprep.subr.mxu0 0.0
    %4169 = vmatpush2.msra.mxu0 0.0
    %4170 = vmatprep.subr.mxu0 0.0
    %4171 = vmatpush2.msra.mxu0 0.0
    %4172 = vmatprep.subr.mxu0 0.0
    %4173 = vmatpush2.msra.mxu0 0.0
    %4174 = vmatprep.subr.mxu0 0.0
    %4175 = vmatpush2.msra.mxu0 0.0
    %4176 = vmatprep.subr.mxu0 0.0
    %4177 = vmatpush2.msra.mxu0 0.0
    %4178 = vmatprep.subr.mxu0 0.0
    %4179 = vmatpush2.msra.mxu0 0.0
    %4180 = vmatprep.mubr.f32.mxu0 0.0
    %4181 = vmatmul.mubr.f32.gmra.mxu0 %v4044
    %v4182 = vpop.f32.mrf.mxu0
    %v4183 = vadd.f32 0.0, %v4182
    %v4184 = vpop.f32.mrf.mxu0
    %4185 = vdwg.mxu0
    %4186 = vmatprep.subr.mxu0 0.0
    %4187 = vmatpush1.msra.mxu0 0.0
    %4188 = vmatprep.subr.mxu0 0.0
    %4189 = vmatpush1.msra.mxu0 0.0
    %4190 = vmatprep.subr.mxu0 0.0
    %4191 = vmatpush1.msra.mxu0 0.0
    %4192 = vmatprep.subr.mxu0 0.0
    %4193 = vmatpush1.msra.mxu0 0.0
    %4194 = vmatprep.subr.mxu0 0.0
    %4195 = vmatpush1.msra.mxu0 0.0
    %4196 = vmatprep.subr.mxu0 0.0
    %4197 = vmatpush1.msra.mxu0 0.0
    %4198 = vmatprep.subr.mxu0 0.0
    %4199 = vmatpush1.msra.mxu0 0.0
    %4200 = vmatprep.subr.mxu0 0.0
    %4201 = vmatpush1.msra.mxu0 0.0
    %4202 = vmatprep.subr.mxu0 0.0
    %4203 = vmatpush1.msra.mxu0 0.0
    %4204 = vmatprep.subr.mxu0 0.0
    %4205 = vmatpush1.msra.mxu0 0.0
    %4206 = vmatprep.subr.mxu0 0.0
    %4207 = vmatpush1.msra.mxu0 0.0
    %4208 = vmatprep.subr.mxu0 0.0
    %4209 = vmatpush1.msra.mxu0 0.0
    %4210 = vmatprep.subr.mxu0 0.0
    %4211 = vmatpush1.msra.mxu0 %v626
    %4212 = vmatprep.subr.mxu0 0.0
    %4213 = vmatpush1.msra.mxu0 %v625
    %4214 = vmatprep.subr.mxu0 0.0
    %4215 = vmatpush1.msra.mxu0 %v624
    %4216 = vmatprep.subr.mxu0 0.0
    %4217 = vmatpush1.msra.mxu0 %v623
    %4218 = vmatprep.subr.mxu0 0.0
    %4219 = vmatpush2.msra.mxu0 0.0
    %4220 = vmatprep.subr.mxu0 0.0
    %4221 = vmatpush2.msra.mxu0 0.0
    %4222 = vmatprep.subr.mxu0 0.0
    %4223 = vmatpush2.msra.mxu0 0.0
    %4224 = vmatprep.subr.mxu0 0.0
    %4225 = vmatpush2.msra.mxu0 0.0
    %4226 = vmatprep.subr.mxu0 0.0
    %4227 = vmatpush2.msra.mxu0 0.0
    %4228 = vmatprep.subr.mxu0 0.0
    %4229 = vmatpush2.msra.mxu0 0.0
    %4230 = vmatprep.subr.mxu0 0.0
    %4231 = vmatpush2.msra.mxu0 0.0
    %4232 = vmatprep.subr.mxu0 0.0
    %4233 = vmatpush2.msra.mxu0 0.0
    %4234 = vmatprep.subr.mxu0 0.0
    %4235 = vmatpush2.msra.mxu0 0.0
    %4236 = vmatprep.subr.mxu0 0.0
    %4237 = vmatpush2.msra.mxu0 0.0
    %4238 = vmatprep.subr.mxu0 0.0
    %4239 = vmatpush2.msra.mxu0 0.0
    %4240 = vmatprep.subr.mxu0 0.0
    %4241 = vmatpush2.msra.mxu0 0.0
    %4242 = vmatprep.subr.mxu0 0.0
    %4243 = vmatpush2.msra.mxu0 0.0
    %4244 = vmatprep.subr.mxu0 0.0
    %4245 = vmatpush2.msra.mxu0 0.0
    %4246 = vmatprep.subr.mxu0 0.0
    %4247 = vmatpush2.msra.mxu0 0.0
    %4248 = vmatprep.subr.mxu0 0.0
    %4249 = vmatpush2.msra.mxu0 0.0
    %4250 = vmatprep.mubr.f32.mxu0 0.0
    %4251 = vmatmul.mubr.f32.gmra.mxu0 %v4044
    %v4252 = vpop.f32.mrf.mxu0
    %v4253 = vadd.f32 %v2730, %v4252
    %v4254 = vpop.f32.mrf.mxu0
    %4255 = vdwg.mxu0
    %v4257 = vrot.slane %v4113, 4
    %v4259 = vadd.f32 %v428, %v4257
    %v4260 = vxor.u32 %v4259, 2147483648
    %v4261 = vmul.f32 %v4260, 1.442695
    %v4262 = vpow.pop %v4261
    %v4263 = vadd.f32 %v4262, 1.0
    %v4264 = vrcp.pop %v4263
    %v4265 = vmul.f32 1.0, %v4264
    %v4267 = vrot.slane %v4183, 4
    %v4269 = vadd.f32 %v514, %v4267
    %v4270 = vxor.u32 %v4269, 2147483648
    %v4271 = vmul.f32 %v4270, 1.442695
    %v4272 = vpow.pop %v4271
    %v4273 = vadd.f32 %v4272, 1.0
    %v4274 = vrcp.pop %v4273
    %v4275 = vmul.f32 1.0, %v4274
    %v4277 = vrot.slane %v4253, 4
    %v4279 = vmul.f32 %v4265, %v4277
    %v4280 = vadd.f32 %v600, %v4279
    %v4281 = vtanh.pop %v4280
    %v4282 = vsub.f32 1.0, %v4275
    %v4283 = vmul.f32 %v4282, %v4281
    %v4284 = vrot.slane %v4041, 6
    %v4286 = vmul.f32 %v4275, %v4284
    %v4287 = vadd.f32 %v4283, %v4286
    %v4289 = vrot.slane %v4287, 4
    %v4290 = vsel %vm629, %v4289, 0
    %4292 = vmatprep.subr.mxu0 0.0
    %4293 = vmatpush1.msra.mxu0 0.0
    %4294 = vmatprep.subr.mxu0 0.0
    %4295 = vmatpush1.msra.mxu0 0.0
    %4296 = vmatprep.subr.mxu0 0.0
    %4297 = vmatpush1.msra.mxu0 0.0
    %4298 = vmatprep.subr.mxu0 0.0
    %4299 = vmatpush1.msra.mxu0 0.0
    %4300 = vmatprep.subr.mxu0 0.0
    %4301 = vmatpush1.msra.mxu0 0.0
    %4302 = vmatprep.subr.mxu0 0.0
    %4303 = vmatpush1.msra.mxu0 0.0
    %4304 = vmatprep.subr.mxu0 0.0
    %4305 = vmatpush1.msra.mxu0 0.0
    %4306 = vmatprep.subr.mxu0 0.0
    %4307 = vmatpush1.msra.mxu0 0.0
    %4308 = vmatprep.subr.mxu0 0.0
    %4309 = vmatpush1.msra.mxu0 0.0
    %4310 = vmatprep.subr.mxu0 0.0
    %4311 = vmatpush1.msra.mxu0 0.0
    %4312 = vmatprep.subr.mxu0 0.0
    %4313 = vmatpush1.msra.mxu0 0.0
    %4314 = vmatprep.subr.mxu0 0.0
    %4315 = vmatpush1.msra.mxu0 0.0
    %4316 = vmatprep.subr.mxu0 0.0
    %4317 = vmatpush1.msra.mxu0 %v618
    %4318 = vmatprep.subr.mxu0 0.0
    %4319 = vmatpush1.msra.mxu0 %v617
    %4320 = vmatprep.subr.mxu0 0.0
    %4321 = vmatpush1.msra.mxu0 %v616
    %4322 = vmatprep.subr.mxu0 0.0
    %4323 = vmatpush1.msra.mxu0 %v615
    %4324 = vmatprep.subr.mxu0 0.0
    %4325 = vmatpush2.msra.mxu0 0.0
    %4326 = vmatprep.subr.mxu0 0.0
    %4327 = vmatpush2.msra.mxu0 0.0
    %4328 = vmatprep.subr.mxu0 0.0
    %4329 = vmatpush2.msra.mxu0 0.0
    %4330 = vmatprep.subr.mxu0 0.0
    %4331 = vmatpush2.msra.mxu0 0.0
    %4332 = vmatprep.subr.mxu0 0.0
    %4333 = vmatpush2.msra.mxu0 0.0
    %4334 = vmatprep.subr.mxu0 0.0
    %4335 = vmatpush2.msra.mxu0 0.0
    %4336 = vmatprep.subr.mxu0 0.0
    %4337 = vmatpush2.msra.mxu0 0.0
    %4338 = vmatprep.subr.mxu0 0.0
    %4339 = vmatpush2.msra.mxu0 0.0
    %4340 = vmatprep.subr.mxu0 0.0
    %4341 = vmatpush2.msra.mxu0 0.0
    %4342 = vmatprep.subr.mxu0 0.0
    %4343 = vmatpush2.msra.mxu0 0.0
    %4344 = vmatprep.subr.mxu0 0.0
    %4345 = vmatpush2.msra.mxu0 0.0
    %4346 = vmatprep.subr.mxu0 0.0
    %4347 = vmatpush2.msra.mxu0 0.0
    %4348 = vmatprep.subr.mxu0 0.0
    %4349 = vmatpush2.msra.mxu0 0.0
    %4350 = vmatprep.subr.mxu0 0.0
    %4351 = vmatpush2.msra.mxu0 0.0
    %4352 = vmatprep.subr.mxu0 0.0
    %4353 = vmatpush2.msra.mxu0 0.0
    %4354 = vmatprep.subr.mxu0 0.0
    %4355 = vmatpush2.msra.mxu0 0.0
    %4356 = vmatprep.mubr.f32.mxu0 0.0
    %4357 = vmatmul.mubr.f32.gmra.mxu0 %v4290
    %v4358 = vpop.f32.mrf.mxu0
    %v4359 = vadd.f32 0.0, %v4358
    %v4360 = vpop.f32.mrf.mxu0
    %4361 = vdwg.mxu0
    %4362 = vmatprep.subr.mxu0 0.0
    %4363 = vmatpush1.msra.mxu0 0.0
    %4364 = vmatprep.subr.mxu0 0.0
    %4365 = vmatpush1.msra.mxu0 0.0
    %4366 = vmatprep.subr.mxu0 0.0
    %4367 = vmatpush1.msra.mxu0 0.0
    %4368 = vmatprep.subr.mxu0 0.0
    %4369 = vmatpush1.msra.mxu0 0.0
    %4370 = vmatprep.subr.mxu0 0.0
    %4371 = vmatpush1.msra.mxu0 0.0
    %4372 = vmatprep.subr.mxu0 0.0
    %4373 = vmatpush1.msra.mxu0 0.0
    %4374 = vmatprep.subr.mxu0 0.0
    %4375 = vmatpush1.msra.mxu0 0.0
    %4376 = vmatprep.subr.mxu0 0.0
    %4377 = vmatpush1.msra.mxu0 0.0
    %4378 = vmatprep.subr.mxu0 0.0
    %4379 = vmatpush1.msra.mxu0 0.0
    %4380 = vmatprep.subr.mxu0 0.0
    %4381 = vmatpush1.msra.mxu0 0.0
    %4382 = vmatprep.subr.mxu0 0.0
    %4383 = vmatpush1.msra.mxu0 0.0
    %4384 = vmatprep.subr.mxu0 0.0
    %4385 = vmatpush1.msra.mxu0 0.0
    %4386 = vmatprep.subr.mxu0 0.0
    %4387 = vmatpush1.msra.mxu0 %v622
    %4388 = vmatprep.subr.mxu0 0.0
    %4389 = vmatpush1.msra.mxu0 %v621
    %4390 = vmatprep.subr.mxu0 0.0
    %4391 = vmatpush1.msra.mxu0 %v620
    %4392 = vmatprep.subr.mxu0 0.0
    %4393 = vmatpush1.msra.mxu0 %v619
    %4394 = vmatprep.subr.mxu0 0.0
    %4395 = vmatpush2.msra.mxu0 0.0
    %4396 = vmatprep.subr.mxu0 0.0
    %4397 = vmatpush2.msra.mxu0 0.0
    %4398 = vmatprep.subr.mxu0 0.0
    %4399 = vmatpush2.msra.mxu0 0.0
    %4400 = vmatprep.subr.mxu0 0.0
    %4401 = vmatpush2.msra.mxu0 0.0
    %4402 = vmatprep.subr.mxu0 0.0
    %4403 = vmatpush2.msra.mxu0 0.0
    %4404 = vmatprep.subr.mxu0 0.0
    %4405 = vmatpush2.msra.mxu0 0.0
    %4406 = vmatprep.subr.mxu0 0.0
    %4407 = vmatpush2.msra.mxu0 0.0
    %4408 = vmatprep.subr.mxu0 0.0
    %4409 = vmatpush2.msra.mxu0 0.0
    %4410 = vmatprep.subr.mxu0 0.0
    %4411 = vmatpush2.msra.mxu0 0.0
    %4412 = vmatprep.subr.mxu0 0.0
    %4413 = vmatpush2.msra.mxu0 0.0
    %4414 = vmatprep.subr.mxu0 0.0
    %4415 = vmatpush2.msra.mxu0 0.0
    %4416 = vmatprep.subr.mxu0 0.0
    %4417 = vmatpush2.msra.mxu0 0.0
    %4418 = vmatprep.subr.mxu0 0.0
    %4419 = vmatpush2.msra.mxu0 0.0
    %4420 = vmatprep.subr.mxu0 0.0
    %4421 = vmatpush2.msra.mxu0 0.0
    %4422 = vmatprep.subr.mxu0 0.0
    %4423 = vmatpush2.msra.mxu0 0.0
    %4424 = vmatprep.subr.mxu0 0.0
    %4425 = vmatpush2.msra.mxu0 0.0
    %4426 = vmatprep.mubr.f32.mxu0 0.0
    %4427 = vmatmul.mubr.f32.gmra.mxu0 %v4290
    %v4428 = vpop.f32.mrf.mxu0
    %v4429 = vadd.f32 0.0, %v4428
    %v4430 = vpop.f32.mrf.mxu0
    %4431 = vdwg.mxu0
    %4432 = vmatprep.subr.mxu0 0.0
    %4433 = vmatpush1.msra.mxu0 0.0
    %4434 = vmatprep.subr.mxu0 0.0
    %4435 = vmatpush1.msra.mxu0 0.0
    %4436 = vmatprep.subr.mxu0 0.0
    %4437 = vmatpush1.msra.mxu0 0.0
    %4438 = vmatprep.subr.mxu0 0.0
    %4439 = vmatpush1.msra.mxu0 0.0
    %4440 = vmatprep.subr.mxu0 0.0
    %4441 = vmatpush1.msra.mxu0 0.0
    %4442 = vmatprep.subr.mxu0 0.0
    %4443 = vmatpush1.msra.mxu0 0.0
    %4444 = vmatprep.subr.mxu0 0.0
    %4445 = vmatpush1.msra.mxu0 0.0
    %4446 = vmatprep.subr.mxu0 0.0
    %4447 = vmatpush1.msra.mxu0 0.0
    %4448 = vmatprep.subr.mxu0 0.0
    %4449 = vmatpush1.msra.mxu0 0.0
    %4450 = vmatprep.subr.mxu0 0.0
    %4451 = vmatpush1.msra.mxu0 0.0
    %4452 = vmatprep.subr.mxu0 0.0
    %4453 = vmatpush1.msra.mxu0 0.0
    %4454 = vmatprep.subr.mxu0 0.0
    %4455 = vmatpush1.msra.mxu0 0.0
    %4456 = vmatprep.subr.mxu0 0.0
    %4457 = vmatpush1.msra.mxu0 %v626
    %4458 = vmatprep.subr.mxu0 0.0
    %4459 = vmatpush1.msra.mxu0 %v625
    %4460 = vmatprep.subr.mxu0 0.0
    %4461 = vmatpush1.msra.mxu0 %v624
    %4462 = vmatprep.subr.mxu0 0.0
    %4463 = vmatpush1.msra.mxu0 %v623
    %4464 = vmatprep.subr.mxu0 0.0
    %4465 = vmatpush2.msra.mxu0 0.0
    %4466 = vmatprep.subr.mxu0 0.0
    %4467 = vmatpush2.msra.mxu0 0.0
    %4468 = vmatprep.subr.mxu0 0.0
    %4469 = vmatpush2.msra.mxu0 0.0
    %4470 = vmatprep.subr.mxu0 0.0
    %4471 = vmatpush2.msra.mxu0 0.0
    %4472 = vmatprep.subr.mxu0 0.0
    %4473 = vmatpush2.msra.mxu0 0.0
    %4474 = vmatprep.subr.mxu0 0.0
    %4475 = vmatpush2.msra.mxu0 0.0
    %4476 = vmatprep.subr.mxu0 0.0
    %4477 = vmatpush2.msra.mxu0 0.0
    %4478 = vmatprep.subr.mxu0 0.0
    %4479 = vmatpush2.msra.mxu0 0.0
    %4480 = vmatprep.subr.mxu0 0.0
    %4481 = vmatpush2.msra.mxu0 0.0
    %4482 = vmatprep.subr.mxu0 0.0
    %4483 = vmatpush2.msra.mxu0 0.0
    %4484 = vmatprep.subr.mxu0 0.0
    %4485 = vmatpush2.msra.mxu0 0.0
    %4486 = vmatprep.subr.mxu0 0.0
    %4487 = vmatpush2.msra.mxu0 0.0
    %4488 = vmatprep.subr.mxu0 0.0
    %4489 = vmatpush2.msra.mxu0 0.0
    %4490 = vmatprep.subr.mxu0 0.0
    %4491 = vmatpush2.msra.mxu0 0.0
    %4492 = vmatprep.subr.mxu0 0.0
    %4493 = vmatpush2.msra.mxu0 0.0
    %4494 = vmatprep.subr.mxu0 0.0
    %4495 = vmatpush2.msra.mxu0 0.0
    %4496 = vmatprep.mubr.f32.mxu0 0.0
    %4497 = vmatmul.mubr.f32.gmra.mxu0 %v4290
    %v4498 = vpop.f32.mrf.mxu0
    %v4499 = vadd.f32 %v2730, %v4498
    %v4500 = vpop.f32.mrf.mxu0
    %4501 = vdwg.mxu0
    %v4503 = vrot.slane %v4359, 2
    %v4505 = vadd.f32 %v428, %v4503
    %v4506 = vxor.u32 %v4505, 2147483648
    %v4507 = vmul.f32 %v4506, 1.442695
    %v4508 = vpow.pop %v4507
    %v4509 = vadd.f32 %v4508, 1.0
    %v4510 = vrcp.pop %v4509
    %v4511 = vmul.f32 1.0, %v4510
    %v4513 = vrot.slane %v4429, 2
    %v4515 = vadd.f32 %v514, %v4513
    %v4516 = vxor.u32 %v4515, 2147483648
    %v4517 = vmul.f32 %v4516, 1.442695
    %v4518 = vpow.pop %v4517
    %v4519 = vadd.f32 %v4518, 1.0
    %v4520 = vrcp.pop %v4519
    %v4521 = vmul.f32 1.0, %v4520
    %v4523 = vrot.slane %v4499, 2
    %v4525 = vmul.f32 %v4511, %v4523
    %v4526 = vadd.f32 %v600, %v4525
    %v4527 = vtanh.pop %v4526
    %v4528 = vsub.f32 1.0, %v4521
    %v4529 = vmul.f32 %v4528, %v4527
    %v4530 = vrot.slane %v4287, 6
    %v4532 = vmul.f32 %v4521, %v4530
    %v4533 = vadd.f32 %v4529, %v4532
    %vm4534 = vcmask 1041408
    %v4535 = vsel %vm4534, %v2823, %v3068
    %v4536 = vsel %vm94, %v4535, %v3314
    %vm4537 = vcmask 1045504
    %v4538 = vsel %vm4537, %v4536, %v3560
    %v4539 = vsel %vm4534, %v3796, %v4041
    %v4540 = vsel %vm94, %v4539, %v4287
    %v4541 = vsel %vm4537, %v4540, %v4533
    %v4542 = vld [vmem:[%s21] sm:$0xff]
    %v4543 = vld [vmem:[%s21 + $0x8] sm:$0xff]
    %v4544 = vld [vmem:[%s21 + $0x10] sm:$0xff]
    %v4545 = vld [vmem:[%s21 + $0x18] sm:$0xff]
    %v4546 = vld [vmem:[%s22] sm:$0x1]
    %v4548 = vlaneseq
    %v4549 = vshrl.u32 %v4548, 7
    %v4550 = vsub.s32 0, %v4549
    %v4551 = vrot.slane %v4546, %v4550
    %v4554 = vsel %vm629, %v4538, 0
    %v4557 = vsel %vm629, %v4541, 0
    %4559 = vmatprep.subr.mxu0 0.0
    %4560 = vmatpush1.msra.mxu0 0.0
    %4561 = vmatprep.subr.mxu0 0.0
    %4562 = vmatpush1.msra.mxu0 0.0
    %4563 = vmatprep.subr.mxu0 0.0
    %4564 = vmatpush1.msra.mxu0 0.0
    %4565 = vmatprep.subr.mxu0 0.0
    %4566 = vmatpush1.msra.mxu0 0.0
    %4567 = vmatprep.subr.mxu0 0.0
    %4568 = vmatpush1.msra.mxu0 0.0
    %4569 = vmatprep.subr.mxu0 0.0
    %4570 = vmatpush1.msra.mxu0 0.0
    %4571 = vmatprep.subr.mxu0 0.0
    %4572 = vmatpush1.msra.mxu0 0.0
    %4573 = vmatprep.subr.mxu0 0.0
    %4574 = vmatpush1.msra.mxu0 0.0
    %4575 = vmatprep.subr.mxu0 0.0
    %4576 = vmatpush1.msra.mxu0 0.0
    %4577 = vmatprep.subr.mxu0 0.0
    %4578 = vmatpush1.msra.mxu0 0.0
    %4579 = vmatprep.subr.mxu0 0.0
    %4580 = vmatpush1.msra.mxu0 0.0
    %4581 = vmatprep.subr.mxu0 0.0
    %4582 = vmatpush1.msra.mxu0 0.0
    %4583 = vmatprep.subr.mxu0 0.0
    %4584 = vmatpush1.msra.mxu0 %v4545
    %4585 = vmatprep.subr.mxu0 0.0
    %4586 = vmatpush1.msra.mxu0 %v4544
    %4587 = vmatprep.subr.mxu0 0.0
    %4588 = vmatpush1.msra.mxu0 %v4543
    %4589 = vmatprep.subr.mxu0 0.0
    %4590 = vmatpush1.msra.mxu0 %v4542
    %4591 = vmatprep.subr.mxu0 0.0
    %4592 = vmatpush2.msra.mxu0 0.0
    %4593 = vmatprep.subr.mxu0 0.0
    %4594 = vmatpush2.msra.mxu0 0.0
    %4595 = vmatprep.subr.mxu0 0.0
    %4596 = vmatpush2.msra.mxu0 0.0
    %4597 = vmatprep.subr.mxu0 0.0
    %4598 = vmatpush2.msra.mxu0 0.0
    %4599 = vmatprep.subr.mxu0 0.0
    %4600 = vmatpush2.msra.mxu0 0.0
    %4601 = vmatprep.subr.mxu0 0.0
    %4602 = vmatpush2.msra.mxu0 0.0
    %4603 = vmatprep.subr.mxu0 0.0
    %4604 = vmatpush2.msra.mxu0 0.0
    %4605 = vmatprep.subr.mxu0 0.0
    %4606 = vmatpush2.msra.mxu0 0.0
    %4607 = vmatprep.subr.mxu0 0.0
    %4608 = vmatpush2.msra.mxu0 0.0
    %4609 = vmatprep.subr.mxu0 0.0
    %4610 = vmatpush2.msra.mxu0 0.0
    %4611 = vmatprep.subr.mxu0 0.0
    %4612 = vmatpush2.msra.mxu0 0.0
    %4613 = vmatprep.subr.mxu0 0.0
    %4614 = vmatpush2.msra.mxu0 0.0
    %4615 = vmatprep.subr.mxu0 0.0
    %4616 = vmatpush2.msra.mxu0 0.0
    %4617 = vmatprep.subr.mxu0 0.0
    %4618 = vmatpush2.msra.mxu0 0.0
    %4619 = vmatprep.subr.mxu0 0.0
    %4620 = vmatpush2.msra.mxu0 0.0
    %4621 = vmatprep.subr.mxu0 0.0
    %4622 = vmatpush2.msra.mxu0 0.0
    %4623 = vmatprep.mubr.f32.mxu0 0.0
    %4624 = vmatmul.mubr.f32.gmra.mxu0 %v4554
    %v4625 = vpop.f32.mrf.mxu0
    %v4626 = vadd.f32 %v4551, %v4625
    %v4627 = vpop.f32.mrf.mxu0
    %4628 = vmatprep.mubr.f32.mxu0 0.0
    %4629 = vmatmul.mubr.f32.gmra.mxu0 %v4557
    %v4630 = vpop.f32.mrf.mxu0
    %v4631 = vadd.f32 %v4551, %v4630
    %v4632 = vpop.f32.mrf.mxu0
    %4633 = vdwg.mxu0
    %4634 = vst.msk [vmem:[%s23] sm:$0xff] %vm87, %v4626
    %4635 = vst.msk [vmem:[%s23 + $0x8] sm:$0xff] %vm87, %v4631
    // Predicated region
    $region94: #{seq2seq_forward.1} parent=1 // pred_check
      _
    $region95: #{seq2seq_forward.1} parent=1 // pred_check_branch
      %4637 = sbr.rel (0) target = $region97
    $region96: #{seq2seq_forward.1} parent=1 // pred_region
      _
    $region97: #{seq2seq_forward.1} parent=1 // pred_fallthru
      _
    // Predicated region
    $region98: #{seq2seq_forward.1} parent=1 // pred_check
      _
    $region99: #{seq2seq_forward.1} parent=1 // pred_check_branch
      %4639 = sbr.rel (0) target = $region101
    $region100: #{seq2seq_forward.1} parent=1 // pred_region
      %s4641 = ssub.s32 32, 32
      %4642 = vsyncadd [#allocation3], %s4641
      %s4644 = sshll.u32 [#allocation2], 4
      %s4645 = int_to_ptr.vmem [resolvable:$true] %s4644
      %4647 = dma.vmem_to_hbm [thread:$0]  %s4645, 32, %s24, [#allocation3]
    $region101: #{seq2seq_forward.1} parent=1 // pred_fallthru
      _
    // Predicated region
    $region102: #{seq2seq_forward.1} parent=1 // pred_check
      _
    $region103: #{seq2seq_forward.1} parent=1 // pred_check_branch
      %4649 = sbr.rel (0) target = $region105
    $region104: #{seq2seq_forward.1} parent=1 // pred_region
      _
    $region105: #{seq2seq_forward.1} parent=1 // pred_fallthru
      _
    // Predicated region
    $region106: #{seq2seq_forward.1} parent=1 // pred_check
      _
    $region107: #{seq2seq_forward.1} parent=1 // pred_check_branch
      %4651 = sbr.rel (0) target = $region109
    $region108: #{seq2seq_forward.1} parent=1 // pred_region
      %4652 = dma.done [#allocation3], 32
    $region109: #{seq2seq_forward.1} parent=1 // pred_fallthru
      _
    %4653 = vsyncpa [#allocation3], 1

</llo_original>
